<compile_context>
chip_gen: v7x
topology: tpu7x:2x2x1
jax: 0.10.0
libtpu: 0.0.40
codegen_flags: <defaults>
</compile_context>

<pallas_src>
import functools

import jax
import jax.numpy as jnp
from jax.experimental import pallas as pl
from jax.experimental.pallas import tpu as pltpu

VMEM = pltpu.MemorySpace.VMEM


# ----------------------------------------------------------------------------
# In-kernel helpers (operate on values / refs already resident in VMEM)
# ----------------------------------------------------------------------------
def _conv3_relu(x, w_ref, b_ref, t_len):
    """Conv1d(kernel=3, padding=1) + ReLU on a (n_batch*t_len, Cin) row slab.

    Rows are ordered (n, t), t inner.  Implemented as three shifted matmuls
    (no im2col).  Cross-batch contamination of the shifted rows is masked out
    using the per-row time index (t == 0 / t == t_len-1 rows are the padding).
    """
    rows, cin = x.shape
    zero = jnp.zeros((1, cin), jnp.float32)
    x_prev = jnp.concatenate([zero, x[: rows - 1, :]], axis=0)   # x[t-1]
    x_next = jnp.concatenate([x[1:, :], zero], axis=0)           # x[t+1]
    t_idx = jax.lax.broadcasted_iota(jnp.int32, (rows, 1), 0) % t_len
    x_prev = jnp.where(t_idx == 0, 0.0, x_prev)
    x_next = jnp.where(t_idx == t_len - 1, 0.0, x_next)

    acc = jnp.dot(x_prev, w_ref[0], preferred_element_type=jnp.float32)
    acc = acc + jnp.dot(x, w_ref[1], preferred_element_type=jnp.float32)
    acc = acc + jnp.dot(x_next, w_ref[2], preferred_element_type=jnp.float32)
    acc = acc + b_ref[...]
    return jnp.maximum(acc, 0.0)


def _maxpool2_rows(y):
    """MaxPool1d(kernel_size=2) over time for a (n*t, C) row slab (t even)."""
    rows = y.shape[0]
    pairs = [
        jnp.maximum(y[2 * p: 2 * p + 1, :], y[2 * p + 1: 2 * p + 2, :])
        for p in range(rows // 2)
    ]
    return jnp.concatenate(pairs, axis=0)


def _layernorm(x, g, b, eps):
    mean = jnp.mean(x, axis=-1, keepdims=True)
    var = jnp.mean((x - mean) ** 2, axis=-1, keepdims=True)
    return (x - mean) * jax.lax.rsqrt(var + eps) * g + b


# ----------------------------------------------------------------------------
# The single fused forward kernel
# ----------------------------------------------------------------------------
def _fused_forward_kernel(
    x_ref, w1_ref, b1_ref, w2_ref, b2_ref,
    inw_ref, inb_ref, ow_ref, ob_ref,
    ln1g_ref, ln1b_ref, l1w_ref, l1b_ref, l2w_ref, l2b_ref,
    ln2g_ref, ln2b_ref, fcw_ref, fcb_ref,
    out_ref, *, n_batch, t_in, nhead, eps,
):
    # ---------------- CNN: conv1 + relu + pool, conv2 + relu + pool ----------
    x = x_ref[...]                                   # (N*T, 257)
    y = _conv3_relu(x, w1_ref, b1_ref, t_in)         # (N*T, 128)
    y = _maxpool2_rows(y)                            # (N*T/2, 128)
    t2 = t_in // 2
    y = _conv3_relu(y, w2_ref, b2_ref, t2)           # (N*T/2, 32)
    y = _maxpool2_rows(y)                            # (N*S, 32), rows = (n, s)
    s_len = t2 // 2
    e = y.shape[1]
    dh = e // nhead
    scale = float(dh) ** -0.5

    # ---------------- Transformer encoder layer (post-norm) ------------------
    # QKV projection for all (n, s) rows at once.
    qkv = jnp.dot(y, inw_ref[...], preferred_element_type=jnp.float32) + inb_ref[...]
    q = qkv[:, :e]
    k = qkv[:, e:2 * e]
    v = qkv[:, 2 * e:]
    ow = ow_ref[...]                                 # (E, E), already (K, N)

    attn_rows = []
    for n in range(n_batch):                         # static unroll (tiny N)
        r0, r1 = n * s_len, (n + 1) * s_len
        o_n = None
        for h in range(nhead):                       # static unroll (nhead=2)
            c0, c1 = h * dh, (h + 1) * dh
            qh = q[r0:r1, c0:c1]
            kh = k[r0:r1, c0:c1]
            vh = v[r0:r1, c0:c1]
            # scores = qh @ kh^T  (contraction on the last dim of both)
            sc = jax.lax.dot_general(
                qh, kh, (((1,), (1,)), ((), ())),
                preferred_element_type=jnp.float32) * scale         # (S, S)
            sc = sc - jnp.max(sc, axis=-1, keepdims=True)
            p = jnp.exp(sc)
            p = p / jnp.sum(p, axis=-1, keepdims=True)
            ctx = jnp.dot(p, vh, preferred_element_type=jnp.float32)  # (S, dh)
            # Fold the output projection per head: avoids a lane-dim concat and
            # never materializes a dh=16-wide tensor outside vregs.
            proj = jnp.dot(ctx, ow[c0:c1, :],
                           preferred_element_type=jnp.float32)        # (S, E)
            o_n = proj if o_n is None else o_n + proj
        attn_rows.append(o_n)
    attn = jnp.concatenate(attn_rows, axis=0) + ob_ref[...]           # (N*S, E)

    h1 = _layernorm(y + attn, ln1g_ref[...], ln1b_ref[...], eps)

    # Feed-forward block fully fused; (M, 2048) intermediate stays on-chip.
    ff = jnp.dot(h1, l1w_ref[...], preferred_element_type=jnp.float32) + l1b_ref[...]
    ff = jnp.maximum(ff, 0.0)
    ff = jnp.dot(ff, l2w_ref[...], preferred_element_type=jnp.float32) + l2b_ref[...]

    h2 = _layernorm(h1 + ff, ln2g_ref[...], ln2b_ref[...], eps)

    # ---------------- mean over sequence + final Linear ----------------------
    means = [
        jnp.mean(h2[n * s_len:(n + 1) * s_len, :], axis=0, keepdims=True)
        for n in range(n_batch)
    ]
    m = jnp.concatenate(means, axis=0)                                # (N, E)
    out_ref[...] = (jnp.dot(m, fcw_ref[...], preferred_element_type=jnp.float32)
                    + fcb_ref[...])


# ----------------------------------------------------------------------------
# Wrapper
# ----------------------------------------------------------------------------
PARAM_ORDER = (
    "conv1_w", "conv1_b", "conv2_w", "conv2_b",
    "in_proj_w", "in_proj_b", "out_proj_w", "out_proj_b",
    "ln1_g", "ln1_b", "lin1_w", "lin1_b", "lin2_w", "lin2_b",
    "ln2_g", "ln2_b", "fc_w", "fc_b",
)


def prepare_params(p):
    """One-time layout prep (done OUTSIDE the jitted forward):
    conv weights -> (3, Cin, Cout); linear weights -> (K, N); biases -> (1, N)."""
    return {
        "conv1_w": jnp.transpose(p["conv1_w"], (2, 1, 0)),   # (3, 257, 128)
        "conv1_b": p["conv1_b"].reshape(1, -1),
        "conv2_w": jnp.transpose(p["conv2_w"], (2, 1, 0)),   # (3, 128, 32)
        "conv2_b": p["conv2_b"].reshape(1, -1),
        "in_proj_w": p["in_proj_w"].T,                       # (32, 96)
        "in_proj_b": p["in_proj_b"].reshape(1, -1),
        "out_proj_w": p["out_proj_w"].T,                     # (32, 32)
        "out_proj_b": p["out_proj_b"].reshape(1, -1),
        "ln1_g": p["ln1_g"].reshape(1, -1),
        "ln1_b": p["ln1_b"].reshape(1, -1),
        "lin1_w": p["lin1_w"].T,                             # (32, 2048)
        "lin1_b": p["lin1_b"].reshape(1, -1),
        "lin2_w": p["lin2_w"].T,                             # (2048, 32)
        "lin2_b": p["lin2_b"].reshape(1, -1),
        "ln2_g": p["ln2_g"].reshape(1, -1),
        "ln2_b": p["ln2_b"].reshape(1, -1),
        "fc_w": p["fc_w"].T,                                 # (32, 1)
        "fc_b": p["fc_b"].reshape(1, -1),
    }


def cnn_transformer_forward(x_ncw, kparams, nhead=2):
    """x_ncw: (N, 257, T) in PyTorch NCW layout. Returns (N,) logits."""
    n, cin, t = x_ncw.shape
    assert t % 4 == 0, "length must be divisible by 4 (two MaxPool1d(2) stages)"
    # Layout prep of the (small) input only: NCW -> (N*T, Cin) row slab.
    x2d = jnp.transpose(x_ncw, (0, 2, 1)).reshape(n * t, cin)
    num_classes = kparams["fc_w"].shape[1]

    out = pl.pallas_call(
        functools.partial(_fused_forward_kernel,
                          n_batch=n, t_in=t, nhead=nhead, eps=1e-5),
        out_shape=jax.ShapeDtypeStruct((n, num_classes), jnp.float32),
        in_specs=[pl.BlockSpec(memory_space=VMEM)] * (1 + len(PARAM_ORDER)),
        out_specs=pl.BlockSpec(memory_space=VMEM),
    )(x2d, *(kparams[name] for name in PARAM_ORDER))
    return out[:, 0]                                        # .squeeze(1)


# ----------------------------------------------------------------------------
# Deterministic parameter initialization (shapes match the PyTorch module)
# ----------------------------------------------------------------------------
def init_params(key, input_size=257, num_classes=1, d_model=32, dff=2048):
    shapes = [
        ("conv1_w", (128, input_size, 3)), ("conv1_b", (128,)),
        ("conv2_w", (32, 128, 3)), ("conv2_b", (32,)),
        ("in_proj_w", (3 * d_model, d_model)), ("in_proj_b", (3 * d_model,)),
        ("out_proj_w", (d_model, d_model)), ("out_proj_b", (d_model,)),
        ("lin1_w", (dff, d_model)), ("lin1_b", (dff,)),
        ("lin2_w", (d_model, dff)), ("lin2_b", (d_model,)),
        ("fc_w", (num_classes, d_model)), ("fc_b", (num_classes,)),
    ]
    keys = jax.random.split(key, len(shapes))
    params = {}
    for (name, shape), k in zip(shapes, keys):
        if name.endswith("_b"):
            params[name] = jnp.zeros(shape, jnp.float32)
        else:
            fan_in = 1
            for d in shape[1:]:
                fan_in *= d
            params[name] = (jax.random.normal(k, shape, jnp.float32)
                            * (1.0 / float(fan_in) ** 0.5))
    params["ln1_g"] = jnp.ones((d_model,), jnp.float32)
    params["ln1_b"] = jnp.zeros((d_model,), jnp.float32)
    params["ln2_g"] = jnp.ones((d_model,), jnp.float32)
    params["ln2_b"] = jnp.zeros((d_model,), jnp.float32)
    return params


if __name__ == "__main__":
    key = jax.random.PRNGKey(0)
    kx, kp = jax.random.split(key)

    # Shapes consistent with the module: batch=2, channels=257, length=16.
    x = jax.random.normal(kx, (2, 257, 16), jnp.float32)
    kernel_params = prepare_params(init_params(kp))   # one-time layout prep

    fwd = jax.jit(cnn_transformer_forward)
    out = fwd(x, kernel_params)
    jax.block_until_ready(out)
    assert out.shape == (2,), out.shape
    assert out.dtype == jnp.float32
    print("KERNEL_OK")
</pallas_src>

<mosaic_0001>
module attributes {stable_mosaic.version = 11 : i64} {
  func.func @_fused_forward_kernel(%arg0: memref<32x257xf32, #tpu.memory_space<vmem>>, %arg1: memref<3x257x128xf32, #tpu.memory_space<vmem>>, %arg2: memref<1x128xf32, #tpu.memory_space<vmem>>, %arg3: memref<3x128x32xf32, #tpu.memory_space<vmem>>, %arg4: memref<1x32xf32, #tpu.memory_space<vmem>>, %arg5: memref<32x96xf32, #tpu.memory_space<vmem>>, %arg6: memref<1x96xf32, #tpu.memory_space<vmem>>, %arg7: memref<32x32xf32, #tpu.memory_space<vmem>>, %arg8: memref<1x32xf32, #tpu.memory_space<vmem>>, %arg9: memref<1x32xf32, #tpu.memory_space<vmem>>, %arg10: memref<1x32xf32, #tpu.memory_space<vmem>>, %arg11: memref<32x2048xf32, #tpu.memory_space<vmem>>, %arg12: memref<1x2048xf32, #tpu.memory_space<vmem>>, %arg13: memref<2048x32xf32, #tpu.memory_space<vmem>>, %arg14: memref<1x32xf32, #tpu.memory_space<vmem>>, %arg15: memref<1x32xf32, #tpu.memory_space<vmem>>, %arg16: memref<1x32xf32, #tpu.memory_space<vmem>>, %arg17: memref<32x1xf32, #tpu.memory_space<vmem>>, %arg18: memref<1x1xf32, #tpu.memory_space<vmem>>, %arg19: memref<2x1xf32, #tpu.memory_space<vmem>>) attributes {dimension_semantics = [], scalar_prefetch = 0 : i64, scratch_operands = 0 : i64, tpu.core_type = #tpu.core_type<tc>} {
    %c0 = arith.constant 0 : index
    %c0_0 = arith.constant 0 : index
    %0 = vector.load %arg0[%c0, %c0_0] : memref<32x257xf32, #tpu.memory_space<vmem>>, vector<32x257xf32>
    %cst = arith.constant 0.000000e+00 : f32
    %1 = vector.broadcast %cst : f32 to vector<1x257xf32>
    %2 = vector.extract_strided_slice %0 {offsets = [0, 0], sizes = [31, 257], strides = [1, 1]} : vector<32x257xf32> to vector<31x257xf32>
    %3 = tpu.concatenate %1, %2 in 0 : vector<1x257xf32>, vector<31x257xf32> -> vector<32x257xf32>
    %4 = vector.extract_strided_slice %0 {offsets = [1, 0], sizes = [31, 257], strides = [1, 1]} : vector<32x257xf32> to vector<31x257xf32>
    %5 = tpu.concatenate %4, %1 in 0 : vector<31x257xf32>, vector<1x257xf32> -> vector<32x257xf32>
    %6 = tpu.iota {dimensions = array<i32: 0>} : vector<32x1xi32>
    %c16_i32 = arith.constant 16 : i32
    %c0_i32 = arith.constant 0 : i32
    %7 = arith.cmpi eq, %c16_i32, %c0_i32 : i32
    %c1_i32 = arith.constant 1 : i32
    %8 = arith.select %7, %c1_i32, %c16_i32 : i32
    %9 = vector.broadcast %8 : i32 to vector<32x1xi32>
    %10 = arith.remsi %6, %9 : vector<32x1xi32>
    %c0_i32_1 = arith.constant 0 : i32
    %11 = vector.broadcast %c0_i32_1 : i32 to vector<32x1xi32>
    %12 = arith.cmpi ne, %10, %11 : vector<32x1xi32>
    %c0_i32_2 = arith.constant 0 : i32
    %13 = vector.broadcast %c0_i32_2 : i32 to vector<32x1xi32>
    %14 = arith.cmpi slt, %10, %13 : vector<32x1xi32>
    %c0_i32_3 = arith.constant 0 : i32
    %15 = arith.cmpi slt, %8, %c0_i32_3 : i32
    %16 = vector.broadcast %15 : i1 to vector<32x1xi1>
    %17 = vector.broadcast %16 : vector<32x1xi1> to vector<32x1xi1>
    %18 = arith.xori %14, %17 : vector<32x1xi1>
    %19 = arith.andi %18, %12 : vector<32x1xi1>
    %20 = vector.broadcast %8 : i32 to vector<32x1xi32>
    %21 = arith.addi %10, %20 : vector<32x1xi32>
    %22 = arith.select %19, %21, %10 : vector<32x1xi1>, vector<32x1xi32>
    %c0_i32_4 = arith.constant 0 : i32
    %23 = vector.broadcast %c0_i32_4 : i32 to vector<32x1xi32>
    %24 = arith.cmpi eq, %22, %23 : vector<32x1xi32>
    %cst_5 = arith.constant 0.000000e+00 : f32
    %25 = vector.shape_cast %24 : vector<32x1xi1> to vector<32x1xi1>
    %26 = vector.broadcast %25 : vector<32x1xi1> to vector<32x257xi1>
    %27 = vector.broadcast %cst_5 : f32 to vector<32x257xf32>
    %28 = arith.select %26, %27, %3 : vector<32x257xi1>, vector<32x257xf32>
    %c15_i32 = arith.constant 15 : i32
    %29 = vector.broadcast %c15_i32 : i32 to vector<32x1xi32>
    %30 = arith.cmpi eq, %22, %29 : vector<32x1xi32>
    %cst_6 = arith.constant 0.000000e+00 : f32
    %31 = vector.shape_cast %30 : vector<32x1xi1> to vector<32x1xi1>
    %32 = vector.broadcast %31 : vector<32x1xi1> to vector<32x257xi1>
    %33 = vector.broadcast %cst_6 : f32 to vector<32x257xf32>
    %34 = arith.select %32, %33, %5 : vector<32x257xi1>, vector<32x257xf32>
    %c0_7 = arith.constant 0 : index
    %c0_8 = arith.constant 0 : index
    %c0_9 = arith.constant 0 : index
    %35 = vector.load %arg1[%c0_7, %c0_8, %c0_9] : memref<3x257x128xf32, #tpu.memory_space<vmem>>, vector<1x257x128xf32>
    %36 = vector.shape_cast %35 : vector<1x257x128xf32> to vector<257x128xf32>
    %cst_10 = arith.constant dense<0.000000e+00> : vector<32x128xf32>
    %37 = tpu.matmul %28, %36, %cst_10 {dimension_numbers = #tpu.dot_dimension_numbers<[1], [0], [0], [1], [0, 0, 1, 1], [], []>} : vector<32x257xf32>, vector<257x128xf32>, vector<32x128xf32> -> vector<32x128xf32>
    %c1 = arith.constant 1 : index
    %c0_11 = arith.constant 0 : index
    %c0_12 = arith.constant 0 : index
    %38 = vector.load %arg1[%c1, %c0_11, %c0_12] : memref<3x257x128xf32, #tpu.memory_space<vmem>>, vector<1x257x128xf32>
    %39 = vector.shape_cast %38 : vector<1x257x128xf32> to vector<257x128xf32>
    %cst_13 = arith.constant dense<0.000000e+00> : vector<32x128xf32>
    %40 = tpu.matmul %0, %39, %cst_13 {dimension_numbers = #tpu.dot_dimension_numbers<[1], [0], [0], [1], [0, 0, 1, 1], [], []>} : vector<32x257xf32>, vector<257x128xf32>, vector<32x128xf32> -> vector<32x128xf32>
    %41 = arith.addf %37, %40 : vector<32x128xf32>
    %c2 = arith.constant 2 : index
    %c0_14 = arith.constant 0 : index
    %c0_15 = arith.constant 0 : index
    %42 = vector.load %arg1[%c2, %c0_14, %c0_15] : memref<3x257x128xf32, #tpu.memory_space<vmem>>, vector<1x257x128xf32>
    %43 = vector.shape_cast %42 : vector<1x257x128xf32> to vector<257x128xf32>
    %cst_16 = arith.constant dense<0.000000e+00> : vector<32x128xf32>
    %44 = tpu.matmul %34, %43, %cst_16 {dimension_numbers = #tpu.dot_dimension_numbers<[1], [0], [0], [1], [0, 0, 1, 1], [], []>} : vector<32x257xf32>, vector<257x128xf32>, vector<32x128xf32> -> vector<32x128xf32>
    %45 = arith.addf %41, %44 : vector<32x128xf32>
    %c0_17 = arith.constant 0 : index
    %c0_18 = arith.constant 0 : index
    %46 = vector.load %arg2[%c0_17, %c0_18] : memref<1x128xf32, #tpu.memory_space<vmem>>, vector<1x128xf32>
    %47 = vector.broadcast %46 : vector<1x128xf32> to vector<32x128xf32>
    %48 = arith.addf %45, %47 : vector<32x128xf32>
    %cst_19 = arith.constant 0.000000e+00 : f32
    %49 = vector.broadcast %cst_19 : f32 to vector<32x128xf32>
    %50 = arith.maximumf %48, %49 : vector<32x128xf32>
    %51 = vector.extract_strided_slice %50 {offsets = [0, 0], sizes = [1, 128], strides = [1, 1]} : vector<32x128xf32> to vector<1x128xf32>
    %52 = vector.extract_strided_slice %50 {offsets = [1, 0], sizes = [1, 128], strides = [1, 1]} : vector<32x128xf32> to vector<1x128xf32>
    %53 = arith.maximumf %51, %52 : vector<1x128xf32>
    %54 = vector.extract_strided_slice %50 {offsets = [2, 0], sizes = [1, 128], strides = [1, 1]} : vector<32x128xf32> to vector<1x128xf32>
    %55 = vector.extract_strided_slice %50 {offsets = [3, 0], sizes = [1, 128], strides = [1, 1]} : vector<32x128xf32> to vector<1x128xf32>
    %56 = arith.maximumf %54, %55 : vector<1x128xf32>
    %57 = vector.extract_strided_slice %50 {offsets = [4, 0], sizes = [1, 128], strides = [1, 1]} : vector<32x128xf32> to vector<1x128xf32>
    %58 = vector.extract_strided_slice %50 {offsets = [5, 0], sizes = [1, 128], strides = [1, 1]} : vector<32x128xf32> to vector<1x128xf32>
    %59 = arith.maximumf %57, %58 : vector<1x128xf32>
    %60 = vector.extract_strided_slice %50 {offsets = [6, 0], sizes = [1, 128], strides = [1, 1]} : vector<32x128xf32> to vector<1x128xf32>
    %61 = vector.extract_strided_slice %50 {offsets = [7, 0], sizes = [1, 128], strides = [1, 1]} : vector<32x128xf32> to vector<1x128xf32>
    %62 = arith.maximumf %60, %61 : vector<1x128xf32>
    %63 = vector.extract_strided_slice %50 {offsets = [8, 0], sizes = [1, 128], strides = [1, 1]} : vector<32x128xf32> to vector<1x128xf32>
    %64 = vector.extract_strided_slice %50 {offsets = [9, 0], sizes = [1, 128], strides = [1, 1]} : vector<32x128xf32> to vector<1x128xf32>
    %65 = arith.maximumf %63, %64 : vector<1x128xf32>
    %66 = vector.extract_strided_slice %50 {offsets = [10, 0], sizes = [1, 128], strides = [1, 1]} : vector<32x128xf32> to vector<1x128xf32>
    %67 = vector.extract_strided_slice %50 {offsets = [11, 0], sizes = [1, 128], strides = [1, 1]} : vector<32x128xf32> to vector<1x128xf32>
    %68 = arith.maximumf %66, %67 : vector<1x128xf32>
    %69 = vector.extract_strided_slice %50 {offsets = [12, 0], sizes = [1, 128], strides = [1, 1]} : vector<32x128xf32> to vector<1x128xf32>
    %70 = vector.extract_strided_slice %50 {offsets = [13, 0], sizes = [1, 128], strides = [1, 1]} : vector<32x128xf32> to vector<1x128xf32>
    %71 = arith.maximumf %69, %70 : vector<1x128xf32>
    %72 = vector.extract_strided_slice %50 {offsets = [14, 0], sizes = [1, 128], strides = [1, 1]} : vector<32x128xf32> to vector<1x128xf32>
    %73 = vector.extract_strided_slice %50 {offsets = [15, 0], sizes = [1, 128], strides = [1, 1]} : vector<32x128xf32> to vector<1x128xf32>
    %74 = arith.maximumf %72, %73 : vector<1x128xf32>
    %75 = vector.extract_strided_slice %50 {offsets = [16, 0], sizes = [1, 128], strides = [1, 1]} : vector<32x128xf32> to vector<1x128xf32>
    %76 = vector.extract_strided_slice %50 {offsets = [17, 0], sizes = [1, 128], strides = [1, 1]} : vector<32x128xf32> to vector<1x128xf32>
    %77 = arith.maximumf %75, %76 : vector<1x128xf32>
    %78 = vector.extract_strided_slice %50 {offsets = [18, 0], sizes = [1, 128], strides = [1, 1]} : vector<32x128xf32> to vector<1x128xf32>
    %79 = vector.extract_strided_slice %50 {offsets = [19, 0], sizes = [1, 128], strides = [1, 1]} : vector<32x128xf32> to vector<1x128xf32>
    %80 = arith.maximumf %78, %79 : vector<1x128xf32>
    %81 = vector.extract_strided_slice %50 {offsets = [20, 0], sizes = [1, 128], strides = [1, 1]} : vector<32x128xf32> to vector<1x128xf32>
    %82 = vector.extract_strided_slice %50 {offsets = [21, 0], sizes = [1, 128], strides = [1, 1]} : vector<32x128xf32> to vector<1x128xf32>
    %83 = arith.maximumf %81, %82 : vector<1x128xf32>
    %84 = vector.extract_strided_slice %50 {offsets = [22, 0], sizes = [1, 128], strides = [1, 1]} : vector<32x128xf32> to vector<1x128xf32>
    %85 = vector.extract_strided_slice %50 {offsets = [23, 0], sizes = [1, 128], strides = [1, 1]} : vector<32x128xf32> to vector<1x128xf32>
    %86 = arith.maximumf %84, %85 : vector<1x128xf32>
    %87 = vector.extract_strided_slice %50 {offsets = [24, 0], sizes = [1, 128], strides = [1, 1]} : vector<32x128xf32> to vector<1x128xf32>
    %88 = vector.extract_strided_slice %50 {offsets = [25, 0], sizes = [1, 128], strides = [1, 1]} : vector<32x128xf32> to vector<1x128xf32>
    %89 = arith.maximumf %87, %88 : vector<1x128xf32>
    %90 = vector.extract_strided_slice %50 {offsets = [26, 0], sizes = [1, 128], strides = [1, 1]} : vector<32x128xf32> to vector<1x128xf32>
    %91 = vector.extract_strided_slice %50 {offsets = [27, 0], sizes = [1, 128], strides = [1, 1]} : vector<32x128xf32> to vector<1x128xf32>
    %92 = arith.maximumf %90, %91 : vector<1x128xf32>
    %93 = vector.extract_strided_slice %50 {offsets = [28, 0], sizes = [1, 128], strides = [1, 1]} : vector<32x128xf32> to vector<1x128xf32>
    %94 = vector.extract_strided_slice %50 {offsets = [29, 0], sizes = [1, 128], strides = [1, 1]} : vector<32x128xf32> to vector<1x128xf32>
    %95 = arith.maximumf %93, %94 : vector<1x128xf32>
    %96 = vector.extract_strided_slice %50 {offsets = [30, 0], sizes = [1, 128], strides = [1, 1]} : vector<32x128xf32> to vector<1x128xf32>
    %97 = vector.extract_strided_slice %50 {offsets = [31, 0], sizes = [1, 128], strides = [1, 1]} : vector<32x128xf32> to vector<1x128xf32>
    %98 = arith.maximumf %96, %97 : vector<1x128xf32>
    %99 = tpu.concatenate %53, %56, %59, %62, %65, %68, %71, %74, %77, %80, %83, %86, %89, %92, %95, %98 in 0 : vector<1x128xf32>, vector<1x128xf32>, vector<1x128xf32>, vector<1x128xf32>, vector<1x128xf32>, vector<1x128xf32>, vector<1x128xf32>, vector<1x128xf32>, vector<1x128xf32>, vector<1x128xf32>, vector<1x128xf32>, vector<1x128xf32>, vector<1x128xf32>, vector<1x128xf32>, vector<1x128xf32>, vector<1x128xf32> -> vector<16x128xf32>
    %cst_20 = arith.constant 0.000000e+00 : f32
    %100 = vector.broadcast %cst_20 : f32 to vector<1x128xf32>
    %101 = vector.extract_strided_slice %99 {offsets = [0, 0], sizes = [15, 128], strides = [1, 1]} : vector<16x128xf32> to vector<15x128xf32>
    %102 = tpu.concatenate %100, %101 in 0 : vector<1x128xf32>, vector<15x128xf32> -> vector<16x128xf32>
    %103 = vector.extract_strided_slice %99 {offsets = [1, 0], sizes = [15, 128], strides = [1, 1]} : vector<16x128xf32> to vector<15x128xf32>
    %104 = tpu.concatenate %103, %100 in 0 : vector<15x128xf32>, vector<1x128xf32> -> vector<16x128xf32>
    %105 = tpu.iota {dimensions = array<i32: 0>} : vector<16x1xi32>
    %c8_i32 = arith.constant 8 : i32
    %c0_i32_21 = arith.constant 0 : i32
    %106 = arith.cmpi eq, %c8_i32, %c0_i32_21 : i32
    %c1_i32_22 = arith.constant 1 : i32
    %107 = arith.select %106, %c1_i32_22, %c8_i32 : i32
    %108 = vector.broadcast %107 : i32 to vector<16x1xi32>
    %109 = arith.remsi %105, %108 : vector<16x1xi32>
    %c0_i32_23 = arith.constant 0 : i32
    %110 = vector.broadcast %c0_i32_23 : i32 to vector<16x1xi32>
    %111 = arith.cmpi ne, %109, %110 : vector<16x1xi32>
    %c0_i32_24 = arith.constant 0 : i32
    %112 = vector.broadcast %c0_i32_24 : i32 to vector<16x1xi32>
    %113 = arith.cmpi slt, %109, %112 : vector<16x1xi32>
    %c0_i32_25 = arith.constant 0 : i32
    %114 = arith.cmpi slt, %107, %c0_i32_25 : i32
    %115 = vector.broadcast %114 : i1 to vector<16x1xi1>
    %116 = vector.broadcast %115 : vector<16x1xi1> to vector<16x1xi1>
    %117 = arith.xori %113, %116 : vector<16x1xi1>
    %118 = arith.andi %117, %111 : vector<16x1xi1>
    %119 = vector.broadcast %107 : i32 to vector<16x1xi32>
    %120 = arith.addi %109, %119 : vector<16x1xi32>
    %121 = arith.select %118, %120, %109 : vector<16x1xi1>, vector<16x1xi32>
    %c0_i32_26 = arith.constant 0 : i32
    %122 = vector.broadcast %c0_i32_26 : i32 to vector<16x1xi32>
    %123 = arith.cmpi eq, %121, %122 : vector<16x1xi32>
    %cst_27 = arith.constant 0.000000e+00 : f32
    %124 = vector.shape_cast %123 : vector<16x1xi1> to vector<16x1xi1>
    %125 = vector.broadcast %124 : vector<16x1xi1> to vector<16x128xi1>
    %126 = vector.broadcast %cst_27 : f32 to vector<16x128xf32>
    %127 = arith.select %125, %126, %102 : vector<16x128xi1>, vector<16x128xf32>
    %c7_i32 = arith.constant 7 : i32
    %128 = vector.broadcast %c7_i32 : i32 to vector<16x1xi32>
    %129 = arith.cmpi eq, %121, %128 : vector<16x1xi32>
    %cst_28 = arith.constant 0.000000e+00 : f32
    %130 = vector.shape_cast %129 : vector<16x1xi1> to vector<16x1xi1>
    %131 = vector.broadcast %130 : vector<16x1xi1> to vector<16x128xi1>
    %132 = vector.broadcast %cst_28 : f32 to vector<16x128xf32>
    %133 = arith.select %131, %132, %104 : vector<16x128xi1>, vector<16x128xf32>
    %c0_29 = arith.constant 0 : index
    %c0_30 = arith.constant 0 : index
    %c0_31 = arith.constant 0 : index
    %134 = vector.load %arg3[%c0_29, %c0_30, %c0_31] : memref<3x128x32xf32, #tpu.memory_space<vmem>>, vector<1x128x32xf32>
    %135 = vector.shape_cast %134 : vector<1x128x32xf32> to vector<128x32xf32>
    %cst_32 = arith.constant dense<0.000000e+00> : vector<16x32xf32>
    %136 = tpu.matmul %127, %135, %cst_32 {dimension_numbers = #tpu.dot_dimension_numbers<[1], [0], [0], [1], [0, 0, 1, 1], [], []>} : vector<16x128xf32>, vector<128x32xf32>, vector<16x32xf32> -> vector<16x32xf32>
    %c1_33 = arith.constant 1 : index
    %c0_34 = arith.constant 0 : index
    %c0_35 = arith.constant 0 : index
    %137 = vector.load %arg3[%c1_33, %c0_34, %c0_35] : memref<3x128x32xf32, #tpu.memory_space<vmem>>, vector<1x128x32xf32>
    %138 = vector.shape_cast %137 : vector<1x128x32xf32> to vector<128x32xf32>
    %cst_36 = arith.constant dense<0.000000e+00> : vector<16x32xf32>
    %139 = tpu.matmul %99, %138, %cst_36 {dimension_numbers = #tpu.dot_dimension_numbers<[1], [0], [0], [1], [0, 0, 1, 1], [], []>} : vector<16x128xf32>, vector<128x32xf32>, vector<16x32xf32> -> vector<16x32xf32>
    %140 = arith.addf %136, %139 : vector<16x32xf32>
    %c2_37 = arith.constant 2 : index
    %c0_38 = arith.constant 0 : index
    %c0_39 = arith.constant 0 : index
    %141 = vector.load %arg3[%c2_37, %c0_38, %c0_39] : memref<3x128x32xf32, #tpu.memory_space<vmem>>, vector<1x128x32xf32>
    %142 = vector.shape_cast %141 : vector<1x128x32xf32> to vector<128x32xf32>
    %cst_40 = arith.constant dense<0.000000e+00> : vector<16x32xf32>
    %143 = tpu.matmul %133, %142, %cst_40 {dimension_numbers = #tpu.dot_dimension_numbers<[1], [0], [0], [1], [0, 0, 1, 1], [], []>} : vector<16x128xf32>, vector<128x32xf32>, vector<16x32xf32> -> vector<16x32xf32>
    %144 = arith.addf %140, %143 : vector<16x32xf32>
    %c0_41 = arith.constant 0 : index
    %c0_42 = arith.constant 0 : index
    %145 = vector.load %arg4[%c0_41, %c0_42] : memref<1x32xf32, #tpu.memory_space<vmem>>, vector<1x32xf32>
    %146 = vector.broadcast %145 : vector<1x32xf32> to vector<16x32xf32>
    %147 = arith.addf %144, %146 : vector<16x32xf32>
    %cst_43 = arith.constant 0.000000e+00 : f32
    %148 = vector.broadcast %cst_43 : f32 to vector<16x32xf32>
    %149 = arith.maximumf %147, %148 : vector<16x32xf32>
    %150 = vector.extract_strided_slice %149 {offsets = [0, 0], sizes = [1, 32], strides = [1, 1]} : vector<16x32xf32> to vector<1x32xf32>
    %151 = vector.extract_strided_slice %149 {offsets = [1, 0], sizes = [1, 32], strides = [1, 1]} : vector<16x32xf32> to vector<1x32xf32>
    %152 = arith.maximumf %150, %151 : vector<1x32xf32>
    %153 = vector.extract_strided_slice %149 {offsets = [2, 0], sizes = [1, 32], strides = [1, 1]} : vector<16x32xf32> to vector<1x32xf32>
    %154 = vector.extract_strided_slice %149 {offsets = [3, 0], sizes = [1, 32], strides = [1, 1]} : vector<16x32xf32> to vector<1x32xf32>
    %155 = arith.maximumf %153, %154 : vector<1x32xf32>
    %156 = vector.extract_strided_slice %149 {offsets = [4, 0], sizes = [1, 32], strides = [1, 1]} : vector<16x32xf32> to vector<1x32xf32>
    %157 = vector.extract_strided_slice %149 {offsets = [5, 0], sizes = [1, 32], strides = [1, 1]} : vector<16x32xf32> to vector<1x32xf32>
    %158 = arith.maximumf %156, %157 : vector<1x32xf32>
    %159 = vector.extract_strided_slice %149 {offsets = [6, 0], sizes = [1, 32], strides = [1, 1]} : vector<16x32xf32> to vector<1x32xf32>
    %160 = vector.extract_strided_slice %149 {offsets = [7, 0], sizes = [1, 32], strides = [1, 1]} : vector<16x32xf32> to vector<1x32xf32>
    %161 = arith.maximumf %159, %160 : vector<1x32xf32>
    %162 = vector.extract_strided_slice %149 {offsets = [8, 0], sizes = [1, 32], strides = [1, 1]} : vector<16x32xf32> to vector<1x32xf32>
    %163 = vector.extract_strided_slice %149 {offsets = [9, 0], sizes = [1, 32], strides = [1, 1]} : vector<16x32xf32> to vector<1x32xf32>
    %164 = arith.maximumf %162, %163 : vector<1x32xf32>
    %165 = vector.extract_strided_slice %149 {offsets = [10, 0], sizes = [1, 32], strides = [1, 1]} : vector<16x32xf32> to vector<1x32xf32>
    %166 = vector.extract_strided_slice %149 {offsets = [11, 0], sizes = [1, 32], strides = [1, 1]} : vector<16x32xf32> to vector<1x32xf32>
    %167 = arith.maximumf %165, %166 : vector<1x32xf32>
    %168 = vector.extract_strided_slice %149 {offsets = [12, 0], sizes = [1, 32], strides = [1, 1]} : vector<16x32xf32> to vector<1x32xf32>
    %169 = vector.extract_strided_slice %149 {offsets = [13, 0], sizes = [1, 32], strides = [1, 1]} : vector<16x32xf32> to vector<1x32xf32>
    %170 = arith.maximumf %168, %169 : vector<1x32xf32>
    %171 = vector.extract_strided_slice %149 {offsets = [14, 0], sizes = [1, 32], strides = [1, 1]} : vector<16x32xf32> to vector<1x32xf32>
    %172 = vector.extract_strided_slice %149 {offsets = [15, 0], sizes = [1, 32], strides = [1, 1]} : vector<16x32xf32> to vector<1x32xf32>
    %173 = arith.maximumf %171, %172 : vector<1x32xf32>
    %174 = tpu.concatenate %152, %155, %158, %161, %164, %167, %170, %173 in 0 : vector<1x32xf32>, vector<1x32xf32>, vector<1x32xf32>, vector<1x32xf32>, vector<1x32xf32>, vector<1x32xf32>, vector<1x32xf32>, vector<1x32xf32> -> vector<8x32xf32>
    %c0_44 = arith.constant 0 : index
    %c0_45 = arith.constant 0 : index
    %175 = vector.load %arg5[%c0_44, %c0_45] : memref<32x96xf32, #tpu.memory_space<vmem>>, vector<32x96xf32>
    %cst_46 = arith.constant dense<0.000000e+00> : vector<8x96xf32>
    %176 = tpu.matmul %174, %175, %cst_46 {dimension_numbers = #tpu.dot_dimension_numbers<[1], [0], [0], [1], [0, 0, 1, 1], [], []>} : vector<8x32xf32>, vector<32x96xf32>, vector<8x96xf32> -> vector<8x96xf32>
    %c0_47 = arith.constant 0 : index
    %c0_48 = arith.constant 0 : index
    %177 = vector.load %arg6[%c0_47, %c0_48] : memref<1x96xf32, #tpu.memory_space<vmem>>, vector<1x96xf32>
    %178 = vector.broadcast %177 : vector<1x96xf32> to vector<8x96xf32>
    %179 = arith.addf %176, %178 : vector<8x96xf32>
    %180 = vector.extract_strided_slice %179 {offsets = [0, 0], sizes = [8, 32], strides = [1, 1]} : vector<8x96xf32> to vector<8x32xf32>
    %181 = vector.extract_strided_slice %179 {offsets = [0, 32], sizes = [8, 32], strides = [1, 1]} : vector<8x96xf32> to vector<8x32xf32>
    %182 = vector.extract_strided_slice %179 {offsets = [0, 64], sizes = [8, 32], strides = [1, 1]} : vector<8x96xf32> to vector<8x32xf32>
    %c0_49 = arith.constant 0 : index
    %c0_50 = arith.constant 0 : index
    %183 = vector.load %arg7[%c0_49, %c0_50] : memref<32x32xf32, #tpu.memory_space<vmem>>, vector<32x32xf32>
    %184 = vector.extract_strided_slice %180 {offsets = [0, 0], sizes = [4, 16], strides = [1, 1]} : vector<8x32xf32> to vector<4x16xf32>
    %185 = vector.extract_strided_slice %181 {offsets = [0, 0], sizes = [4, 16], strides = [1, 1]} : vector<8x32xf32> to vector<4x16xf32>
    %186 = vector.extract_strided_slice %182 {offsets = [0, 0], sizes = [4, 16], strides = [1, 1]} : vector<8x32xf32> to vector<4x16xf32>
    %cst_51 = arith.constant dense<0.000000e+00> : vector<4x4xf32>
    %187 = tpu.matmul %184, %185, %cst_51 {dimension_numbers = #tpu.dot_dimension_numbers<[1], [1], [0], [0], [0, 0, 1, 0], [], []>} : vector<4x16xf32>, vector<4x16xf32>, vector<4x4xf32> -> vector<4x4xf32>
    %cst_52 = arith.constant 2.500000e-01 : f32
    %188 = vector.broadcast %cst_52 : f32 to vector<4x4xf32>
    %189 = arith.mulf %187, %188 : vector<4x4xf32>
    %cst_53 = arith.constant dense<0xFF800000> : vector<4xf32>
    %190 = vector.multi_reduction <maximumf>, %189, %cst_53 [1] : vector<4x4xf32> to vector<4xf32>
    %191 = vector.shape_cast %190 : vector<4xf32> to vector<4x1xf32>
    %192 = vector.broadcast %191 : vector<4x1xf32> to vector<4x4xf32>
    %193 = arith.subf %189, %192 : vector<4x4xf32>
    %194 = math.exp %193 : vector<4x4xf32>
    %cst_54 = arith.constant dense<0.000000e+00> : vector<4xf32>
    %195 = vector.multi_reduction <add>, %194, %cst_54 [1] : vector<4x4xf32> to vector<4xf32>
    %196 = vector.shape_cast %195 : vector<4xf32> to vector<4x1xf32>
    %197 = vector.broadcast %196 : vector<4x1xf32> to vector<4x4xf32>
    %198 = arith.divf %194, %197 : vector<4x4xf32>
    %cst_55 = arith.constant dense<0.000000e+00> : vector<4x16xf32>
    %199 = tpu.matmul %198, %186, %cst_55 {dimension_numbers = #tpu.dot_dimension_numbers<[1], [0], [0], [1], [0, 0, 1, 1], [], []>} : vector<4x4xf32>, vector<4x16xf32>, vector<4x16xf32> -> vector<4x16xf32>
    %200 = vector.extract_strided_slice %183 {offsets = [0, 0], sizes = [16, 32], strides = [1, 1]} : vector<32x32xf32> to vector<16x32xf32>
    %cst_56 = arith.constant dense<0.000000e+00> : vector<4x32xf32>
    %201 = tpu.matmul %199, %200, %cst_56 {dimension_numbers = #tpu.dot_dimension_numbers<[1], [0], [0], [1], [0, 0, 1, 1], [], []>} : vector<4x16xf32>, vector<16x32xf32>, vector<4x32xf32> -> vector<4x32xf32>
    %202 = vector.extract_strided_slice %180 {offsets = [0, 16], sizes = [4, 16], strides = [1, 1]} : vector<8x32xf32> to vector<4x16xf32>
    %203 = vector.extract_strided_slice %181 {offsets = [0, 16], sizes = [4, 16], strides = [1, 1]} : vector<8x32xf32> to vector<4x16xf32>
    %204 = vector.extract_strided_slice %182 {offsets = [0, 16], sizes = [4, 16], strides = [1, 1]} : vector<8x32xf32> to vector<4x16xf32>
    %cst_57 = arith.constant dense<0.000000e+00> : vector<4x4xf32>
    %205 = tpu.matmul %202, %203, %cst_57 {dimension_numbers = #tpu.dot_dimension_numbers<[1], [1], [0], [0], [0, 0, 1, 0], [], []>} : vector<4x16xf32>, vector<4x16xf32>, vector<4x4xf32> -> vector<4x4xf32>
    %cst_58 = arith.constant 2.500000e-01 : f32
    %206 = vector.broadcast %cst_58 : f32 to vector<4x4xf32>
    %207 = arith.mulf %205, %206 : vector<4x4xf32>
    %cst_59 = arith.constant dense<0xFF800000> : vector<4xf32>
    %208 = vector.multi_reduction <maximumf>, %207, %cst_59 [1] : vector<4x4xf32> to vector<4xf32>
    %209 = vector.shape_cast %208 : vector<4xf32> to vector<4x1xf32>
    %210 = vector.broadcast %209 : vector<4x1xf32> to vector<4x4xf32>
    %211 = arith.subf %207, %210 : vector<4x4xf32>
    %212 = math.exp %211 : vector<4x4xf32>
    %cst_60 = arith.constant dense<0.000000e+00> : vector<4xf32>
    %213 = vector.multi_reduction <add>, %212, %cst_60 [1] : vector<4x4xf32> to vector<4xf32>
    %214 = vector.shape_cast %213 : vector<4xf32> to vector<4x1xf32>
    %215 = vector.broadcast %214 : vector<4x1xf32> to vector<4x4xf32>
    %216 = arith.divf %212, %215 : vector<4x4xf32>
    %cst_61 = arith.constant dense<0.000000e+00> : vector<4x16xf32>
    %217 = tpu.matmul %216, %204, %cst_61 {dimension_numbers = #tpu.dot_dimension_numbers<[1], [0], [0], [1], [0, 0, 1, 1], [], []>} : vector<4x4xf32>, vector<4x16xf32>, vector<4x16xf32> -> vector<4x16xf32>
    %218 = vector.extract_strided_slice %183 {offsets = [16, 0], sizes = [16, 32], strides = [1, 1]} : vector<32x32xf32> to vector<16x32xf32>
    %cst_62 = arith.constant dense<0.000000e+00> : vector<4x32xf32>
    %219 = tpu.matmul %217, %218, %cst_62 {dimension_numbers = #tpu.dot_dimension_numbers<[1], [0], [0], [1], [0, 0, 1, 1], [], []>} : vector<4x16xf32>, vector<16x32xf32>, vector<4x32xf32> -> vector<4x32xf32>
    %220 = arith.addf %201, %219 : vector<4x32xf32>
    %221 = vector.extract_strided_slice %180 {offsets = [4, 0], sizes = [4, 16], strides = [1, 1]} : vector<8x32xf32> to vector<4x16xf32>
    %222 = vector.extract_strided_slice %181 {offsets = [4, 0], sizes = [4, 16], strides = [1, 1]} : vector<8x32xf32> to vector<4x16xf32>
    %223 = vector.extract_strided_slice %182 {offsets = [4, 0], sizes = [4, 16], strides = [1, 1]} : vector<8x32xf32> to vector<4x16xf32>
    %cst_63 = arith.constant dense<0.000000e+00> : vector<4x4xf32>
    %224 = tpu.matmul %221, %222, %cst_63 {dimension_numbers = #tpu.dot_dimension_numbers<[1], [1], [0], [0], [0, 0, 1, 0], [], []>} : vector<4x16xf32>, vector<4x16xf32>, vector<4x4xf32> -> vector<4x4xf32>
    %cst_64 = arith.constant 2.500000e-01 : f32
    %225 = vector.broadcast %cst_64 : f32 to vector<4x4xf32>
    %226 = arith.mulf %224, %225 : vector<4x4xf32>
    %cst_65 = arith.constant dense<0xFF800000> : vector<4xf32>
    %227 = vector.multi_reduction <maximumf>, %226, %cst_65 [1] : vector<4x4xf32> to vector<4xf32>
    %228 = vector.shape_cast %227 : vector<4xf32> to vector<4x1xf32>
    %229 = vector.broadcast %228 : vector<4x1xf32> to vector<4x4xf32>
    %230 = arith.subf %226, %229 : vector<4x4xf32>
    %231 = math.exp %230 : vector<4x4xf32>
    %cst_66 = arith.constant dense<0.000000e+00> : vector<4xf32>
    %232 = vector.multi_reduction <add>, %231, %cst_66 [1] : vector<4x4xf32> to vector<4xf32>
    %233 = vector.shape_cast %232 : vector<4xf32> to vector<4x1xf32>
    %234 = vector.broadcast %233 : vector<4x1xf32> to vector<4x4xf32>
    %235 = arith.divf %231, %234 : vector<4x4xf32>
    %cst_67 = arith.constant dense<0.000000e+00> : vector<4x16xf32>
    %236 = tpu.matmul %235, %223, %cst_67 {dimension_numbers = #tpu.dot_dimension_numbers<[1], [0], [0], [1], [0, 0, 1, 1], [], []>} : vector<4x4xf32>, vector<4x16xf32>, vector<4x16xf32> -> vector<4x16xf32>
    %237 = vector.extract_strided_slice %183 {offsets = [0, 0], sizes = [16, 32], strides = [1, 1]} : vector<32x32xf32> to vector<16x32xf32>
    %cst_68 = arith.constant dense<0.000000e+00> : vector<4x32xf32>
    %238 = tpu.matmul %236, %237, %cst_68 {dimension_numbers = #tpu.dot_dimension_numbers<[1], [0], [0], [1], [0, 0, 1, 1], [], []>} : vector<4x16xf32>, vector<16x32xf32>, vector<4x32xf32> -> vector<4x32xf32>
    %239 = vector.extract_strided_slice %180 {offsets = [4, 16], sizes = [4, 16], strides = [1, 1]} : vector<8x32xf32> to vector<4x16xf32>
    %240 = vector.extract_strided_slice %181 {offsets = [4, 16], sizes = [4, 16], strides = [1, 1]} : vector<8x32xf32> to vector<4x16xf32>
    %241 = vector.extract_strided_slice %182 {offsets = [4, 16], sizes = [4, 16], strides = [1, 1]} : vector<8x32xf32> to vector<4x16xf32>
    %cst_69 = arith.constant dense<0.000000e+00> : vector<4x4xf32>
    %242 = tpu.matmul %239, %240, %cst_69 {dimension_numbers = #tpu.dot_dimension_numbers<[1], [1], [0], [0], [0, 0, 1, 0], [], []>} : vector<4x16xf32>, vector<4x16xf32>, vector<4x4xf32> -> vector<4x4xf32>
    %cst_70 = arith.constant 2.500000e-01 : f32
    %243 = vector.broadcast %cst_70 : f32 to vector<4x4xf32>
    %244 = arith.mulf %242, %243 : vector<4x4xf32>
    %cst_71 = arith.constant dense<0xFF800000> : vector<4xf32>
    %245 = vector.multi_reduction <maximumf>, %244, %cst_71 [1] : vector<4x4xf32> to vector<4xf32>
    %246 = vector.shape_cast %245 : vector<4xf32> to vector<4x1xf32>
    %247 = vector.broadcast %246 : vector<4x1xf32> to vector<4x4xf32>
    %248 = arith.subf %244, %247 : vector<4x4xf32>
    %249 = math.exp %248 : vector<4x4xf32>
    %cst_72 = arith.constant dense<0.000000e+00> : vector<4xf32>
    %250 = vector.multi_reduction <add>, %249, %cst_72 [1] : vector<4x4xf32> to vector<4xf32>
    %251 = vector.shape_cast %250 : vector<4xf32> to vector<4x1xf32>
    %252 = vector.broadcast %251 : vector<4x1xf32> to vector<4x4xf32>
    %253 = arith.divf %249, %252 : vector<4x4xf32>
    %cst_73 = arith.constant dense<0.000000e+00> : vector<4x16xf32>
    %254 = tpu.matmul %253, %241, %cst_73 {dimension_numbers = #tpu.dot_dimension_numbers<[1], [0], [0], [1], [0, 0, 1, 1], [], []>} : vector<4x4xf32>, vector<4x16xf32>, vector<4x16xf32> -> vector<4x16xf32>
    %255 = vector.extract_strided_slice %183 {offsets = [16, 0], sizes = [16, 32], strides = [1, 1]} : vector<32x32xf32> to vector<16x32xf32>
    %cst_74 = arith.constant dense<0.000000e+00> : vector<4x32xf32>
    %256 = tpu.matmul %254, %255, %cst_74 {dimension_numbers = #tpu.dot_dimension_numbers<[1], [0], [0], [1], [0, 0, 1, 1], [], []>} : vector<4x16xf32>, vector<16x32xf32>, vector<4x32xf32> -> vector<4x32xf32>
    %257 = arith.addf %238, %256 : vector<4x32xf32>
    %258 = tpu.concatenate %220, %257 in 0 : vector<4x32xf32>, vector<4x32xf32> -> vector<8x32xf32>
    %c0_75 = arith.constant 0 : index
    %c0_76 = arith.constant 0 : index
    %259 = vector.load %arg8[%c0_75, %c0_76] : memref<1x32xf32, #tpu.memory_space<vmem>>, vector<1x32xf32>
    %260 = vector.broadcast %259 : vector<1x32xf32> to vector<8x32xf32>
    %261 = arith.addf %258, %260 : vector<8x32xf32>
    %262 = arith.addf %174, %261 : vector<8x32xf32>
    %c0_77 = arith.constant 0 : index
    %c0_78 = arith.constant 0 : index
    %263 = vector.load %arg9[%c0_77, %c0_78] : memref<1x32xf32, #tpu.memory_space<vmem>>, vector<1x32xf32>
    %c0_79 = arith.constant 0 : index
    %c0_80 = arith.constant 0 : index
    %264 = vector.load %arg10[%c0_79, %c0_80] : memref<1x32xf32, #tpu.memory_space<vmem>>, vector<1x32xf32>
    %cst_81 = arith.constant dense<0.000000e+00> : vector<8xf32>
    %265 = vector.multi_reduction <add>, %262, %cst_81 [1] : vector<8x32xf32> to vector<8xf32>
    %266 = vector.shape_cast %265 : vector<8xf32> to vector<8x1xf32>
    %cst_82 = arith.constant 3.200000e+01 : f32
    %267 = vector.broadcast %cst_82 : f32 to vector<8x1xf32>
    %268 = arith.divf %266, %267 : vector<8x1xf32>
    %269 = vector.broadcast %268 : vector<8x1xf32> to vector<8x32xf32>
    %270 = arith.subf %262, %269 : vector<8x32xf32>
    %271 = arith.mulf %270, %270 : vector<8x32xf32>
    %cst_83 = arith.constant dense<0.000000e+00> : vector<8xf32>
    %272 = vector.multi_reduction <add>, %271, %cst_83 [1] : vector<8x32xf32> to vector<8xf32>
    %273 = vector.shape_cast %272 : vector<8xf32> to vector<8x1xf32>
    %cst_84 = arith.constant 3.200000e+01 : f32
    %274 = vector.broadcast %cst_84 : f32 to vector<8x1xf32>
    %275 = arith.divf %273, %274 : vector<8x1xf32>
    %276 = vector.broadcast %268 : vector<8x1xf32> to vector<8x32xf32>
    %277 = arith.subf %262, %276 : vector<8x32xf32>
    %cst_85 = arith.constant 9.99999974E-6 : f32
    %278 = vector.broadcast %cst_85 : f32 to vector<8x1xf32>
    %279 = arith.addf %275, %278 : vector<8x1xf32>
    %280 = math.rsqrt %279 : vector<8x1xf32>
    %281 = vector.broadcast %280 : vector<8x1xf32> to vector<8x32xf32>
    %282 = arith.mulf %277, %281 : vector<8x32xf32>
    %283 = vector.broadcast %263 : vector<1x32xf32> to vector<8x32xf32>
    %284 = arith.mulf %282, %283 : vector<8x32xf32>
    %285 = vector.broadcast %264 : vector<1x32xf32> to vector<8x32xf32>
    %286 = arith.addf %284, %285 : vector<8x32xf32>
    %c0_86 = arith.constant 0 : index
    %c0_87 = arith.constant 0 : index
    %287 = vector.load %arg11[%c0_86, %c0_87] : memref<32x2048xf32, #tpu.memory_space<vmem>>, vector<32x2048xf32>
    %cst_88 = arith.constant dense<0.000000e+00> : vector<8x2048xf32>
    %288 = tpu.matmul %286, %287, %cst_88 {dimension_numbers = #tpu.dot_dimension_numbers<[1], [0], [0], [1], [0, 0, 1, 1], [], []>} : vector<8x32xf32>, vector<32x2048xf32>, vector<8x2048xf32> -> vector<8x2048xf32>
    %c0_89 = arith.constant 0 : index
    %c0_90 = arith.constant 0 : index
    %289 = vector.load %arg12[%c0_89, %c0_90] : memref<1x2048xf32, #tpu.memory_space<vmem>>, vector<1x2048xf32>
    %290 = vector.broadcast %289 : vector<1x2048xf32> to vector<8x2048xf32>
    %291 = arith.addf %288, %290 : vector<8x2048xf32>
    %cst_91 = arith.constant 0.000000e+00 : f32
    %292 = vector.broadcast %cst_91 : f32 to vector<8x2048xf32>
    %293 = arith.maximumf %291, %292 : vector<8x2048xf32>
    %c0_92 = arith.constant 0 : index
    %c0_93 = arith.constant 0 : index
    %294 = vector.load %arg13[%c0_92, %c0_93] : memref<2048x32xf32, #tpu.memory_space<vmem>>, vector<2048x32xf32>
    %cst_94 = arith.constant dense<0.000000e+00> : vector<8x32xf32>
    %295 = tpu.matmul %293, %294, %cst_94 {dimension_numbers = #tpu.dot_dimension_numbers<[1], [0], [0], [1], [0, 0, 1, 1], [], []>} : vector<8x2048xf32>, vector<2048x32xf32>, vector<8x32xf32> -> vector<8x32xf32>
    %c0_95 = arith.constant 0 : index
    %c0_96 = arith.constant 0 : index
    %296 = vector.load %arg14[%c0_95, %c0_96] : memref<1x32xf32, #tpu.memory_space<vmem>>, vector<1x32xf32>
    %297 = vector.broadcast %296 : vector<1x32xf32> to vector<8x32xf32>
    %298 = arith.addf %295, %297 : vector<8x32xf32>
    %299 = arith.addf %286, %298 : vector<8x32xf32>
    %c0_97 = arith.constant 0 : index
    %c0_98 = arith.constant 0 : index
    %300 = vector.load %arg15[%c0_97, %c0_98] : memref<1x32xf32, #tpu.memory_space<vmem>>, vector<1x32xf32>
    %c0_99 = arith.constant 0 : index
    %c0_100 = arith.constant 0 : index
    %301 = vector.load %arg16[%c0_99, %c0_100] : memref<1x32xf32, #tpu.memory_space<vmem>>, vector<1x32xf32>
    %cst_101 = arith.constant dense<0.000000e+00> : vector<8xf32>
    %302 = vector.multi_reduction <add>, %299, %cst_101 [1] : vector<8x32xf32> to vector<8xf32>
    %303 = vector.shape_cast %302 : vector<8xf32> to vector<8x1xf32>
    %cst_102 = arith.constant 3.200000e+01 : f32
    %304 = vector.broadcast %cst_102 : f32 to vector<8x1xf32>
    %305 = arith.divf %303, %304 : vector<8x1xf32>
    %306 = vector.broadcast %305 : vector<8x1xf32> to vector<8x32xf32>
    %307 = arith.subf %299, %306 : vector<8x32xf32>
    %308 = arith.mulf %307, %307 : vector<8x32xf32>
    %cst_103 = arith.constant dense<0.000000e+00> : vector<8xf32>
    %309 = vector.multi_reduction <add>, %308, %cst_103 [1] : vector<8x32xf32> to vector<8xf32>
    %310 = vector.shape_cast %309 : vector<8xf32> to vector<8x1xf32>
    %cst_104 = arith.constant 3.200000e+01 : f32
    %311 = vector.broadcast %cst_104 : f32 to vector<8x1xf32>
    %312 = arith.divf %310, %311 : vector<8x1xf32>
    %313 = vector.broadcast %305 : vector<8x1xf32> to vector<8x32xf32>
    %314 = arith.subf %299, %313 : vector<8x32xf32>
    %cst_105 = arith.constant 9.99999974E-6 : f32
    %315 = vector.broadcast %cst_105 : f32 to vector<8x1xf32>
    %316 = arith.addf %312, %315 : vector<8x1xf32>
    %317 = math.rsqrt %316 : vector<8x1xf32>
    %318 = vector.broadcast %317 : vector<8x1xf32> to vector<8x32xf32>
    %319 = arith.mulf %314, %318 : vector<8x32xf32>
    %320 = vector.broadcast %300 : vector<1x32xf32> to vector<8x32xf32>
    %321 = arith.mulf %319, %320 : vector<8x32xf32>
    %322 = vector.broadcast %301 : vector<1x32xf32> to vector<8x32xf32>
    %323 = arith.addf %321, %322 : vector<8x32xf32>
    %324 = vector.extract_strided_slice %323 {offsets = [0, 0], sizes = [4, 32], strides = [1, 1]} : vector<8x32xf32> to vector<4x32xf32>
    %cst_106 = arith.constant dense<0.000000e+00> : vector<32xf32>
    %325 = vector.multi_reduction <add>, %324, %cst_106 [0] : vector<4x32xf32> to vector<32xf32>
    %326 = vector.shape_cast %325 : vector<32xf32> to vector<1x32xf32>
    %cst_107 = arith.constant 4.000000e+00 : f32
    %327 = vector.broadcast %cst_107 : f32 to vector<1x32xf32>
    %328 = arith.divf %326, %327 : vector<1x32xf32>
    %329 = vector.extract_strided_slice %323 {offsets = [4, 0], sizes = [4, 32], strides = [1, 1]} : vector<8x32xf32> to vector<4x32xf32>
    %cst_108 = arith.constant dense<0.000000e+00> : vector<32xf32>
    %330 = vector.multi_reduction <add>, %329, %cst_108 [0] : vector<4x32xf32> to vector<32xf32>
    %331 = vector.shape_cast %330 : vector<32xf32> to vector<1x32xf32>
    %cst_109 = arith.constant 4.000000e+00 : f32
    %332 = vector.broadcast %cst_109 : f32 to vector<1x32xf32>
    %333 = arith.divf %331, %332 : vector<1x32xf32>
    %334 = tpu.concatenate %328, %333 in 0 : vector<1x32xf32>, vector<1x32xf32> -> vector<2x32xf32>
    %c0_110 = arith.constant 0 : index
    %c0_111 = arith.constant 0 : index
    %335 = vector.load %arg17[%c0_110, %c0_111] : memref<32x1xf32, #tpu.memory_space<vmem>>, vector<32x1xf32>
    %cst_112 = arith.constant dense<0.000000e+00> : vector<2x1xf32>
    %336 = tpu.matmul %334, %335, %cst_112 {dimension_numbers = #tpu.dot_dimension_numbers<[1], [0], [0], [1], [0, 0, 1, 1], [], []>} : vector<2x32xf32>, vector<32x1xf32>, vector<2x1xf32> -> vector<2x1xf32>
    %c0_113 = arith.constant 0 : index
    %c0_114 = arith.constant 0 : index
    %337 = vector.load %arg18[%c0_113, %c0_114] : memref<1x1xf32, #tpu.memory_space<vmem>>, vector<1x1xf32>
    %338 = vector.broadcast %337 : vector<1x1xf32> to vector<2x1xf32>
    %339 = arith.addf %336, %338 : vector<2x1xf32>
    %c0_115 = arith.constant 0 : index
    %c0_116 = arith.constant 0 : index
    %340 = vector.load %arg19[%c0_115, %c0_116] : memref<2x1xf32, #tpu.memory_space<vmem>>, vector<2x1xf32>
    tpu.vector_store %arg19[%c0_115, %c0_116], %339 {strides = array<i32>} : memref<2x1xf32, #tpu.memory_space<vmem>>, vector<2x1xf32>,
    return
  }
}

</mosaic_0001>

<llo_original>
// kernel: cnn_transformer_forward.1
$region0: #{cnn_transformer_forward.1}
  #allocation0 [shape = 'u32[]', space=smem, size = 0x4, offset = 0x4, fixed_abs, tag = 'smem constant byte address 0x4 - core index']
  #allocation1 [shape = 'u32[144,128]{1,0:T(1,128)}', space=vmem, size = 0x12000, scoped, tag = 'internal scratch']
  #allocation2 [shape = 'f32[1,1]{1,0:T(1,128)S(1)}', space=vmem, size = 0x200, scoped, tag = 'scoped memory for cnn_transformer_forward.1']
  %s0 = inlined_call_operand.vmem [shape: f32[32,257], index: 0, kind: input, shape index: {}]
  %s1 = inlined_call_operand.vmem [shape: f32[3,257,128], index: 1, kind: input, shape index: {}]
  %s2 = inlined_call_operand.vmem [shape: f32[1,128], index: 2, kind: input, shape index: {}]
  %s3 = inlined_call_operand.vmem [shape: f32[3,128,32], index: 3, kind: input, shape index: {}]
  %s4 = inlined_call_operand.vmem [shape: f32[1,32], index: 4, kind: input, shape index: {}]
  %s5 = inlined_call_operand.vmem [shape: f32[32,96], index: 5, kind: input, shape index: {}]
  %s6 = inlined_call_operand.vmem [shape: f32[1,96], index: 6, kind: input, shape index: {}]
  %s7 = inlined_call_operand.vmem [shape: f32[32,32], index: 7, kind: input, shape index: {}]
  %s8 = inlined_call_operand.vmem [shape: f32[1,32], index: 8, kind: input, shape index: {}]
  %s9 = inlined_call_operand.vmem [shape: f32[1,32], index: 9, kind: input, shape index: {}]
  %s10 = inlined_call_operand.vmem [shape: f32[1,32], index: 10, kind: input, shape index: {}]
  %s11 = inlined_call_operand.vmem [shape: f32[32,2048], index: 11, kind: input, shape index: {}]
  %s12 = inlined_call_operand.vmem [shape: f32[1,2048], index: 12, kind: input, shape index: {}]
  %s13 = inlined_call_operand.vmem [shape: f32[2048,32], index: 13, kind: input, shape index: {}]
  %s14 = inlined_call_operand.vmem [shape: f32[1,32], index: 14, kind: input, shape index: {}]
  %s15 = inlined_call_operand.vmem [shape: f32[1,32], index: 15, kind: input, shape index: {}]
  %s16 = inlined_call_operand.vmem [shape: f32[1,32], index: 16, kind: input, shape index: {}]
  %s17 = inlined_call_operand.vmem [shape: f32[32,1], index: 17, kind: input, shape index: {}]
  %s18 = inlined_call_operand.<no memory space> [shape: f32[1,1], index: 18, kind: input, shape index: {}]
  %s19 = inlined_call_operand.vmem [shape: f32[2,1], index: 19, kind: output, shape index: {}]
  %s20 = sld [smem:[#allocation0]]
  $region86: #{cnn_transformer_forward.1} parent=0
    _
  %s22 = ssub.s32 1, %s20
  %s23 = scalar_select 0, %s22, %s20
  %v24 = vstv %s18
  %25 = vst [vmem:[#allocation2] sm:$0x1] %v24
  // Predicated region
  $region2: #{cnn_transformer_forward.1} parent=0 // pred_check
    _
  $region3: #{cnn_transformer_forward.1} parent=0 // pred_check_branch
    %27 = sbr.rel (0) target = $region5
  $region4: #{cnn_transformer_forward.1} parent=0 // pred_region
    _
  $region5: #{cnn_transformer_forward.1} parent=0 // pred_fallthru
    _
  // Predicated region
  $region6: #{cnn_transformer_forward.1} parent=0 // pred_check
    _
  $region7: #{cnn_transformer_forward.1} parent=0 // pred_check_branch
    %29 = sbr.rel (0) target = $region9
  $region8: #{cnn_transformer_forward.1} parent=0 // pred_region
    _
  $region9: #{cnn_transformer_forward.1} parent=0 // pred_fallthru
    _
  // Predicated region
  $region10: #{cnn_transformer_forward.1} parent=0 // pred_check
    _
  $region11: #{cnn_transformer_forward.1} parent=0 // pred_check_branch
    %31 = sbr.rel (0) target = $region13
  $region12: #{cnn_transformer_forward.1} parent=0 // pred_region
    _
  $region13: #{cnn_transformer_forward.1} parent=0 // pred_fallthru
    _
  // Predicated region
  $region14: #{cnn_transformer_forward.1} parent=0 // pred_check
    _
  $region15: #{cnn_transformer_forward.1} parent=0 // pred_check_branch
    %33 = sbr.rel (0) target = $region17
  $region16: #{cnn_transformer_forward.1} parent=0 // pred_region
    _
  $region17: #{cnn_transformer_forward.1} parent=0 // pred_fallthru
    _
  // Predicated region
  $region18: #{cnn_transformer_forward.1} parent=0 // pred_check
    _
  $region19: #{cnn_transformer_forward.1} parent=0 // pred_check_branch
    %35 = sbr.rel (0) target = $region21
  $region20: #{cnn_transformer_forward.1} parent=0 // pred_region
    _
  $region21: #{cnn_transformer_forward.1} parent=0 // pred_fallthru
    _
  // Predicated region
  $region22: #{cnn_transformer_forward.1} parent=0 // pred_check
    _
  $region23: #{cnn_transformer_forward.1} parent=0 // pred_check_branch
    %37 = sbr.rel (0) target = $region25
  $region24: #{cnn_transformer_forward.1} parent=0 // pred_region
    _
  $region25: #{cnn_transformer_forward.1} parent=0 // pred_fallthru
    _
  // Predicated region
  $region26: #{cnn_transformer_forward.1} parent=0 // pred_check
    _
  $region27: #{cnn_transformer_forward.1} parent=0 // pred_check_branch
    %39 = sbr.rel (0) target = $region29
  $region28: #{cnn_transformer_forward.1} parent=0 // pred_region
    _
  $region29: #{cnn_transformer_forward.1} parent=0 // pred_fallthru
    _
  // Predicated region
  $region30: #{cnn_transformer_forward.1} parent=0 // pred_check
    _
  $region31: #{cnn_transformer_forward.1} parent=0 // pred_check_branch
    %41 = sbr.rel (0) target = $region33
  $region32: #{cnn_transformer_forward.1} parent=0 // pred_region
    _
  $region33: #{cnn_transformer_forward.1} parent=0 // pred_fallthru
    _
  // Predicated region
  $region34: #{cnn_transformer_forward.1} parent=0 // pred_check
    _
  $region35: #{cnn_transformer_forward.1} parent=0 // pred_check_branch
    %43 = sbr.rel (0) target = $region37
  $region36: #{cnn_transformer_forward.1} parent=0 // pred_region
    _
  $region37: #{cnn_transformer_forward.1} parent=0 // pred_fallthru
    _
  // Predicated region
  $region38: #{cnn_transformer_forward.1} parent=0 // pred_check
    _
  $region39: #{cnn_transformer_forward.1} parent=0 // pred_check_branch
    %45 = sbr.rel (0) target = $region41
  $region40: #{cnn_transformer_forward.1} parent=0 // pred_region
    _
  $region41: #{cnn_transformer_forward.1} parent=0 // pred_fallthru
    _
  // Predicated region
  $region42: #{cnn_transformer_forward.1} parent=0 // pred_check
    _
  $region43: #{cnn_transformer_forward.1} parent=0 // pred_check_branch
    %47 = sbr.rel (0) target = $region45
  $region44: #{cnn_transformer_forward.1} parent=0 // pred_region
    _
  $region45: #{cnn_transformer_forward.1} parent=0 // pred_fallthru
    _
  // Predicated region
  $region46: #{cnn_transformer_forward.1} parent=0 // pred_check
    _
  $region47: #{cnn_transformer_forward.1} parent=0 // pred_check_branch
    %49 = sbr.rel (0) target = $region49
  $region48: #{cnn_transformer_forward.1} parent=0 // pred_region
    _
  $region49: #{cnn_transformer_forward.1} parent=0 // pred_fallthru
    _
  // Predicated region
  $region50: #{cnn_transformer_forward.1} parent=0 // pred_check
    _
  $region51: #{cnn_transformer_forward.1} parent=0 // pred_check_branch
    %51 = sbr.rel (0) target = $region53
  $region52: #{cnn_transformer_forward.1} parent=0 // pred_region
    _
  $region53: #{cnn_transformer_forward.1} parent=0 // pred_fallthru
    _
  // Predicated region
  $region54: #{cnn_transformer_forward.1} parent=0 // pred_check
    _
  $region55: #{cnn_transformer_forward.1} parent=0 // pred_check_branch
    %53 = sbr.rel (0) target = $region57
  $region56: #{cnn_transformer_forward.1} parent=0 // pred_region
    _
  $region57: #{cnn_transformer_forward.1} parent=0 // pred_fallthru
    _
  // Predicated region
  $region58: #{cnn_transformer_forward.1} parent=0 // pred_check
    _
  $region59: #{cnn_transformer_forward.1} parent=0 // pred_check_branch
    %55 = sbr.rel (0) target = $region61
  $region60: #{cnn_transformer_forward.1} parent=0 // pred_region
    _
  $region61: #{cnn_transformer_forward.1} parent=0 // pred_fallthru
    _
  // Predicated region
  $region62: #{cnn_transformer_forward.1} parent=0 // pred_check
    _
  $region63: #{cnn_transformer_forward.1} parent=0 // pred_check_branch
    %57 = sbr.rel (0) target = $region65
  $region64: #{cnn_transformer_forward.1} parent=0 // pred_region
    _
  $region65: #{cnn_transformer_forward.1} parent=0 // pred_fallthru
    _
  // Predicated region
  $region66: #{cnn_transformer_forward.1} parent=0 // pred_check
    _
  $region67: #{cnn_transformer_forward.1} parent=0 // pred_check_branch
    %59 = sbr.rel (0) target = $region69
  $region68: #{cnn_transformer_forward.1} parent=0 // pred_region
    _
  $region69: #{cnn_transformer_forward.1} parent=0 // pred_fallthru
    _
  // Predicated region
  $region70: #{cnn_transformer_forward.1} parent=0 // pred_check
    _
  $region71: #{cnn_transformer_forward.1} parent=0 // pred_check_branch
    %61 = sbr.rel (0) target = $region73
  $region72: #{cnn_transformer_forward.1} parent=0 // pred_region
    _
  $region73: #{cnn_transformer_forward.1} parent=0 // pred_fallthru
    _
  // Predicated region
  $region74: #{cnn_transformer_forward.1} parent=0 // pred_check
    _
  $region75: #{cnn_transformer_forward.1} parent=0 // pred_check_branch
    %63 = sbr.rel (0) target = $region77
  $region76: #{cnn_transformer_forward.1} parent=0 // pred_region
    _
  $region77: #{cnn_transformer_forward.1} parent=0 // pred_fallthru
    _
  %v64 = vld [vmem:[%s0] sm:$0xff]
  %v65 = vld [vmem:[%s0 + $0x8] sm:$0xff]
  %v66 = vld [vmem:[%s0 + $0x10] sm:$0xff]
  %v67 = vld [vmem:[%s0 + $0x18] sm:$0xff]
  %v68 = vld [vmem:[%s0 + $0x20] sm:$0xff]
  %v69 = vld [vmem:[%s0 + $0x28] sm:$0xff]
  %v70 = vld [vmem:[%s0 + $0x30] sm:$0xff]
  %v71 = vld [vmem:[%s0 + $0x38] sm:$0xff]
  %v72 = vld [vmem:[%s0 + $0x40] sm:$0xff]
  %v73 = vld [vmem:[%s0 + $0x48] sm:$0xff]
  %v74 = vld [vmem:[%s0 + $0x50] sm:$0xff]
  %v75 = vld [vmem:[%s0 + $0x58] sm:$0xff]
  %vm88 = vcmask 1040384
  %v89 = vrot.slane %v64, 7
  %v90 = vrot.slane %v65, 7
  %v91 = vrot.slane %v66, 7
  %v92 = vrot.slane %v67, 7
  %v93 = vsel %vm88, %v89, %v92
  %v94 = vrot.slane %v68, 7
  %v95 = vsel %vm88, %v90, %v94
  %v96 = vrot.slane %v69, 7
  %v97 = vsel %vm88, %v91, %v96
  %v98 = vrot.slane %v70, 7
  %v99 = vsel %vm88, %v92, %v98
  %v100 = vrot.slane %v71, 7
  %v101 = vsel %vm88, %v94, %v100
  %v102 = vrot.slane %v72, 7
  %v103 = vsel %vm88, %v96, %v102
  %v104 = vrot.slane %v73, 7
  %v105 = vsel %vm88, %v98, %v104
  %v106 = vrot.slane %v74, 7
  %v107 = vsel %vm88, %v100, %v106
  %v108 = vrot.slane %v75, 7
  %v109 = vsel %vm88, %v102, %v108
  %v122 = vsel %vm88, 0.0, %v89
  %v123 = vsel %vm88, 0.0, %v90
  %v124 = vsel %vm88, 0.0, %v91
  %vm125 = vcmask 1046528
  %v126 = vrot.slane %v64, 1
  %v127 = vrot.slane %v67, 1
  %v128 = vsel %vm125, %v126, %v127
  %v129 = vrot.slane %v65, 1
  %v130 = vrot.slane %v68, 1
  %v131 = vsel %vm125, %v129, %v130
  %v132 = vrot.slane %v66, 1
  %v133 = vrot.slane %v69, 1
  %v134 = vsel %vm125, %v132, %v133
  %v135 = vrot.slane %v70, 1
  %v136 = vsel %vm125, %v127, %v135
  %v137 = vrot.slane %v71, 1
  %v138 = vsel %vm125, %v130, %v137
  %v139 = vrot.slane %v72, 1
  %v140 = vsel %vm125, %v133, %v139
  %v141 = vrot.slane %v73, 1
  %v142 = vsel %vm125, %v135, %v141
  %v143 = vrot.slane %v74, 1
  %v144 = vsel %vm125, %v137, %v143
  %v145 = vrot.slane %v75, 1
  %v146 = vsel %vm125, %v139, %v145
  %v159 = vsel %vm125, %v141, 0.0
  %v160 = vsel %vm125, %v143, 0.0
  %v161 = vsel %vm125, %v145, 0.0
  %v162 = vlaneseq
  %v163 = vshrl.u32 %v162, 7
  %v164 = vadd.s32 %v163, 8
  %v165 = vadd.s32 %v163, 16
  %v166 = vadd.s32 %v163, 24
  %vm167 = vcmp.lt.s32.totalorder %v163, 0
  %v168 = vsub.s32 0, %v163
  %v169 = vsel %vm167, %v168, %v163
  %v170 = vshrl.u32 %v169, 4
  %v171 = vand.u32 %v169, 15
  %v172 = vsub.s32 0, %v171
  %v173 = vsel %vm167, %v172, %v171
  %vm174 = vcmp.lt.s32.totalorder %v164, 0
  %v175 = vsub.s32 0, %v164
  %v176 = vsel %vm174, %v175, %v164
  %v177 = vshrl.u32 %v176, 4
  %v178 = vand.u32 %v176, 15
  %v179 = vsub.s32 0, %v178
  %v180 = vsel %vm174, %v179, %v178
  %vm181 = vcmp.lt.s32.totalorder %v165, 0
  %v182 = vsub.s32 0, %v165
  %v183 = vsel %vm181, %v182, %v165
  %v184 = vshrl.u32 %v183, 4
  %v185 = vand.u32 %v183, 15
  %v186 = vsub.s32 0, %v185
  %v187 = vsel %vm181, %v186, %v185
  %vm188 = vcmp.lt.s32.totalorder %v166, 0
  %v189 = vsub.s32 0, %v166
  %v190 = vsel %vm188, %v189, %v166
  %v191 = vshrl.u32 %v190, 4
  %v192 = vand.u32 %v190, 15
  %v193 = vsub.s32 0, %v192
  %v194 = vsel %vm188, %v193, %v192
  %vm195 = vcmp.ne.s32.totalorder %v173, 0
  %vm196 = vcmp.ne.s32.totalorder %v180, 0
  %vm197 = vcmp.ne.s32.totalorder %v187, 0
  %vm198 = vcmp.ne.s32.totalorder %v194, 0
  %vm199 = vcmp.lt.s32.totalorder %v173, 0
  %vm200 = vcmp.lt.s32.totalorder %v180, 0
  %vm201 = vcmp.lt.s32.totalorder %v187, 0
  %vm202 = vcmp.lt.s32.totalorder %v194, 0
  %vm203 = vmand %vm199, %vm195
  %vm204 = vmand %vm200, %vm196
  %vm205 = vmand %vm201, %vm197
  %vm206 = vmand %vm202, %vm198
  %v207 = vadd.s32 %v173, 16
  %v208 = vadd.s32 %v180, 16
  %v209 = vadd.s32 %v187, 16
  %v210 = vadd.s32 %v194, 16
  %v211 = vsel %vm203, %v207, %v173
  %v212 = vsel %vm204, %v208, %v180
  %v213 = vsel %vm205, %v209, %v187
  %v214 = vsel %vm206, %v210, %v194
  %vm215 = vcmp.eq.s32.totalorder %v211, 0
  %vm216 = vcmp.eq.s32.totalorder %v212, 0
  %vm217 = vcmp.eq.s32.totalorder %v213, 0
  %vm218 = vcmp.eq.s32.totalorder %v214, 0
  %v219 = vsel %vm215, 1, 0
  %v220 = vsel %vm216, 1, 0
  %v221 = vsel %vm217, 1, 0
  %v222 = vsel %vm218, 1, 0
  %vm223 = vcmp.eq.s32.totalorder %v219, 1
  %vm224 = vcmp.eq.s32.totalorder %v220, 1
  %vm225 = vcmp.eq.s32.totalorder %v221, 1
  %vm226 = vcmp.eq.s32.totalorder %v222, 1
  %v227 = vsel %vm223, 0.0, %v122
  %v228 = vsel %vm223, 0.0, %v123
  %v229 = vsel %vm223, 0.0, %v124
  %v230 = vsel %vm224, 0.0, %v93
  %v231 = vsel %vm224, 0.0, %v95
  %v232 = vsel %vm224, 0.0, %v97
  %v233 = vsel %vm225, 0.0, %v99
  %v234 = vsel %vm225, 0.0, %v101
  %v235 = vsel %vm225, 0.0, %v103
  %v236 = vsel %vm226, 0.0, %v105
  %v237 = vsel %vm226, 0.0, %v107
  %v238 = vsel %vm226, 0.0, %v109
  %vm239 = vcmp.eq.s32.totalorder %v211, 15
  %vm240 = vcmp.eq.s32.totalorder %v212, 15
  %vm241 = vcmp.eq.s32.totalorder %v213, 15
  %vm242 = vcmp.eq.s32.totalorder %v214, 15
  %v243 = vsel %vm239, 1, 0
  %v244 = vsel %vm240, 1, 0
  %v245 = vsel %vm241, 1, 0
  %v246 = vsel %vm242, 1, 0
  %vm247 = vcmp.eq.s32.totalorder %v243, 1
  %vm248 = vcmp.eq.s32.totalorder %v244, 1
  %vm249 = vcmp.eq.s32.totalorder %v245, 1
  %vm250 = vcmp.eq.s32.totalorder %v246, 1
  %v251 = vsel %vm247, 0.0, %v128
  %v252 = vsel %vm247, 0.0, %v131
  %v253 = vsel %vm247, 0.0, %v134
  %v254 = vsel %vm248, 0.0, %v136
  %v255 = vsel %vm248, 0.0, %v138
  %v256 = vsel %vm248, 0.0, %v140
  %v257 = vsel %vm249, 0.0, %v142
  %v258 = vsel %vm249, 0.0, %v144
  %v259 = vsel %vm249, 0.0, %v146
  %v260 = vsel %vm250, 0.0, %v159
  %v261 = vsel %vm250, 0.0, %v160
  %v262 = vsel %vm250, 0.0, %v161
  %v263 = vld [vmem:[%s1] sm:$0xff]
  %v264 = vld [vmem:[%s1 + $0x8] sm:$0xff]
  %v265 = vld [vmem:[%s1 + $0x10] sm:$0xff]
  %v266 = vld [vmem:[%s1 + $0x18] sm:$0xff]
  %v267 = vld [vmem:[%s1 + $0x20] sm:$0xff]
  %v268 = vld [vmem:[%s1 + $0x28] sm:$0xff]
  %v269 = vld [vmem:[%s1 + $0x30] sm:$0xff]
  %v270 = vld [vmem:[%s1 + $0x38] sm:$0xff]
  %v271 = vld [vmem:[%s1 + $0x40] sm:$0xff]
  %v272 = vld [vmem:[%s1 + $0x48] sm:$0xff]
  %v273 = vld [vmem:[%s1 + $0x50] sm:$0xff]
  %v274 = vld [vmem:[%s1 + $0x58] sm:$0xff]
  %v275 = vld [vmem:[%s1 + $0x60] sm:$0xff]
  %v276 = vld [vmem:[%s1 + $0x68] sm:$0xff]
  %v277 = vld [vmem:[%s1 + $0x70] sm:$0xff]
  %v278 = vld [vmem:[%s1 + $0x78] sm:$0xff]
  %v279 = vld [vmem:[%s1 + $0x80] sm:$0xff]
  %v280 = vld [vmem:[%s1 + $0x88] sm:$0xff]
  %v281 = vld [vmem:[%s1 + $0x90] sm:$0xff]
  %v282 = vld [vmem:[%s1 + $0x98] sm:$0xff]
  %v283 = vld [vmem:[%s1 + $0xa0] sm:$0xff]
  %v284 = vld [vmem:[%s1 + $0xa8] sm:$0xff]
  %v285 = vld [vmem:[%s1 + $0xb0] sm:$0xff]
  %v286 = vld [vmem:[%s1 + $0xb8] sm:$0xff]
  %v287 = vld [vmem:[%s1 + $0xc0] sm:$0xff]
  %v288 = vld [vmem:[%s1 + $0xc8] sm:$0xff]
  %v289 = vld [vmem:[%s1 + $0xd0] sm:$0xff]
  %v290 = vld [vmem:[%s1 + $0xd8] sm:$0xff]
  %v291 = vld [vmem:[%s1 + $0xe0] sm:$0xff]
  %v292 = vld [vmem:[%s1 + $0xe8] sm:$0xff]
  %v293 = vld [vmem:[%s1 + $0xf0] sm:$0xff]
  %v294 = vld [vmem:[%s1 + $0xf8] sm:$0xff]
  %v295 = vld [vmem:[%s1 + $0x100] sm:$0x1]
  %s296 = scalar_lea.vmem %s1, 264
  %v297 = vld [vmem:[%s296] sm:$0xff]
  %v298 = vld [vmem:[%s296 + $0x8] sm:$0xff]
  %v299 = vld [vmem:[%s296 + $0x10] sm:$0xff]
  %v300 = vld [vmem:[%s296 + $0x18] sm:$0xff]
  %v301 = vld [vmem:[%s296 + $0x20] sm:$0xff]
  %v302 = vld [vmem:[%s296 + $0x28] sm:$0xff]
  %v303 = vld [vmem:[%s296 + $0x30] sm:$0xff]
  %v304 = vld [vmem:[%s296 + $0x38] sm:$0xff]
  %v305 = vld [vmem:[%s296 + $0x40] sm:$0xff]
  %v306 = vld [vmem:[%s296 + $0x48] sm:$0xff]
  %v307 = vld [vmem:[%s296 + $0x50] sm:$0xff]
  %v308 = vld [vmem:[%s296 + $0x58] sm:$0xff]
  %v309 = vld [vmem:[%s296 + $0x60] sm:$0xff]
  %v310 = vld [vmem:[%s296 + $0x68] sm:$0xff]
  %v311 = vld [vmem:[%s296 + $0x70] sm:$0xff]
  %v312 = vld [vmem:[%s296 + $0x78] sm:$0xff]
  %v313 = vld [vmem:[%s296 + $0x80] sm:$0xff]
  %v314 = vld [vmem:[%s296 + $0x88] sm:$0xff]
  %v315 = vld [vmem:[%s296 + $0x90] sm:$0xff]
  %v316 = vld [vmem:[%s296 + $0x98] sm:$0xff]
  %v317 = vld [vmem:[%s296 + $0xa0] sm:$0xff]
  %v318 = vld [vmem:[%s296 + $0xa8] sm:$0xff]
  %v319 = vld [vmem:[%s296 + $0xb0] sm:$0xff]
  %v320 = vld [vmem:[%s296 + $0xb8] sm:$0xff]
  %v321 = vld [vmem:[%s296 + $0xc0] sm:$0xff]
  %v322 = vld [vmem:[%s296 + $0xc8] sm:$0xff]
  %v323 = vld [vmem:[%s296 + $0xd0] sm:$0xff]
  %v324 = vld [vmem:[%s296 + $0xd8] sm:$0xff]
  %v325 = vld [vmem:[%s296 + $0xe0] sm:$0xff]
  %v326 = vld [vmem:[%s296 + $0xe8] sm:$0xff]
  %v327 = vld [vmem:[%s296 + $0xf0] sm:$0xff]
  %v328 = vld [vmem:[%s296 + $0xf8] sm:$0xff]
  %v329 = vld [vmem:[%s296 + $0x100] sm:$0x1]
  %vm330 = vcmask 7168
  %v331 = vsel %vm330, %v66, 0
  %v333 = vsel %vm330, %v69, 0
  %v335 = vsel %vm330, %v72, 0
  %v337 = vsel %vm330, %v75, 0
  %v340 = vsel %vm88, %v329, 0
  %342 = vmatprep.subr.mxu0 0.0
  %343 = vmatpush1.msra.mxu0 %v297
  %344 = vmatprep.subr.mxu0 0.0
  %345 = vmatpush1.msra.mxu0 %v298
  %346 = vmatprep.subr.mxu0 0.0
  %347 = vmatpush1.msra.mxu0 %v299
  %348 = vmatprep.subr.mxu0 0.0
  %349 = vmatpush1.msra.mxu0 %v300
  %350 = vmatprep.subr.mxu0 0.0
  %351 = vmatpush1.msra.mxu0 %v301
  %352 = vmatprep.subr.mxu0 0.0
  %353 = vmatpush1.msra.mxu0 %v302
  %354 = vmatprep.subr.mxu0 0.0
  %355 = vmatpush1.msra.mxu0 %v303
  %356 = vmatprep.subr.mxu0 0.0
  %357 = vmatpush1.msra.mxu0 %v304
  %358 = vmatprep.subr.mxu0 0.0
  %359 = vmatpush1.msra.mxu0 %v305
  %360 = vmatprep.subr.mxu0 0.0
  %361 = vmatpush1.msra.mxu0 %v306
  %362 = vmatprep.subr.mxu0 0.0
  %363 = vmatpush1.msra.mxu0 %v307
  %364 = vmatprep.subr.mxu0 0.0
  %365 = vmatpush1.msra.mxu0 %v308
  %366 = vmatprep.subr.mxu0 0.0
  %367 = vmatpush1.msra.mxu0 %v309
  %368 = vmatprep.subr.mxu0 0.0
  %369 = vmatpush1.msra.mxu0 %v310
  %370 = vmatprep.subr.mxu0 0.0
  %371 = vmatpush1.msra.mxu0 %v311
  %372 = vmatprep.subr.mxu0 0.0
  %373 = vmatpush1.msra.mxu0 %v312
  %374 = vmatprep.subr.mxu0 0.0
  %375 = vmatpush1.msra.mxu0 %v313
  %376 = vmatprep.subr.mxu0 0.0
  %377 = vmatpush1.msra.mxu0 %v314
  %378 = vmatprep.subr.mxu0 0.0
  %379 = vmatpush1.msra.mxu0 %v315
  %380 = vmatprep.subr.mxu0 0.0
  %381 = vmatpush1.msra.mxu0 %v316
  %382 = vmatprep.subr.mxu0 0.0
  %383 = vmatpush1.msra.mxu0 %v317
  %384 = vmatprep.subr.mxu0 0.0
  %385 = vmatpush1.msra.mxu0 %v318
  %386 = vmatprep.subr.mxu0 0.0
  %387 = vmatpush1.msra.mxu0 %v319
  %388 = vmatprep.subr.mxu0 0.0
  %389 = vmatpush1.msra.mxu0 %v320
  %390 = vmatprep.subr.mxu0 0.0
  %391 = vmatpush1.msra.mxu0 %v321
  %392 = vmatprep.subr.mxu0 0.0
  %393 = vmatpush1.msra.mxu0 %v322
  %394 = vmatprep.subr.mxu0 0.0
  %395 = vmatpush1.msra.mxu0 %v323
  %396 = vmatprep.subr.mxu0 0.0
  %397 = vmatpush1.msra.mxu0 %v324
  %398 = vmatprep.subr.mxu0 0.0
  %399 = vmatpush1.msra.mxu0 %v325
  %400 = vmatprep.subr.mxu0 0.0
  %401 = vmatpush1.msra.mxu0 %v326
  %402 = vmatprep.subr.mxu0 0.0
  %403 = vmatpush1.msra.mxu0 %v327
  %404 = vmatprep.subr.mxu0 0.0
  %405 = vmatpush1.msra.mxu0 %v328
  %406 = vmatprep.mubr.f32.mxu0 %v65
  %407 = vmatmul.mubr.f32.gmra.mrb[0].mxu0 %v64
  %v408 = vpop.f32.mrb[0].mxu0
  %v409 = vadd.f32 0.0, %v408
  %v410 = vpop.f32.mrb[0].mxu0
  %411 = vmatprep.mubr.f32.mxu0 %v68
  %412 = vmatmul.mubr.f32.gmra.mrb[0].mxu0 %v67
  %v413 = vpop.f32.mrb[0].mxu0
  %v414 = vadd.f32 0.0, %v413
  %v415 = vpop.f32.mrb[0].mxu0
  %416 = vmatprep.mubr.f32.mxu0 %v71
  %417 = vmatmul.mubr.f32.gmra.mrb[0].mxu0 %v70
  %v418 = vpop.f32.mrb[0].mxu0
  %v419 = vadd.f32 0.0, %v418
  %v420 = vpop.f32.mrb[0].mxu0
  %421 = vmatprep.mubr.f32.mxu0 %v74
  %422 = vmatmul.mubr.f32.gmra.mrb[0].mxu0 %v73
  %v423 = vpop.f32.mrb[0].mxu0
  %v424 = vadd.f32 0.0, %v423
  %v425 = vpop.f32.mrb[0].mxu0
  %426 = vdwg.mxu0
  %427 = vmatprep.subr.mxu0 0.0
  %428 = vmatpush1.msra.mxu0 %v340
  %429 = vmatprep.subr.mxu0 0.0
  %430 = vmatpush1.msra.mxu0 0.0
  %431 = vmatprep.subr.mxu0 0.0
  %432 = vmatpush1.msra.mxu0 0.0
  %433 = vmatprep.subr.mxu0 0.0
  %434 = vmatpush1.msra.mxu0 0.0
  %435 = vmatprep.subr.mxu0 0.0
  %436 = vmatpush1.msra.mxu0 0.0
  %437 = vmatprep.subr.mxu0 0.0
  %438 = vmatpush1.msra.mxu0 0.0
  %439 = vmatprep.subr.mxu0 0.0
  %440 = vmatpush1.msra.mxu0 0.0
  %441 = vmatprep.subr.mxu0 0.0
  %442 = vmatpush1.msra.mxu0 0.0
  %443 = vmatprep.subr.mxu0 0.0
  %444 = vmatpush1.msra.mxu0 0.0
  %445 = vmatprep.subr.mxu0 0.0
  %446 = vmatpush1.msra.mxu0 0.0
  %447 = vmatprep.subr.mxu0 0.0
  %448 = vmatpush1.msra.mxu0 0.0
  %449 = vmatprep.subr.mxu0 0.0
  %450 = vmatpush1.msra.mxu0 0.0
  %451 = vmatprep.subr.mxu0 0.0
  %452 = vmatpush1.msra.mxu0 0.0
  %453 = vmatprep.subr.mxu0 0.0
  %454 = vmatpush1.msra.mxu0 0.0
  %455 = vmatprep.subr.mxu0 0.0
  %456 = vmatpush1.msra.mxu0 0.0
  %457 = vmatprep.subr.mxu0 0.0
  %458 = vmatpush1.msra.mxu0 0.0
  %459 = vmatprep.subr.mxu0 0.0
  %460 = vmatpush1.msra.mxu0 0.0
  %461 = vmatprep.subr.mxu0 0.0
  %462 = vmatpush1.msra.mxu0 0.0
  %463 = vmatprep.subr.mxu0 0.0
  %464 = vmatpush1.msra.mxu0 0.0
  %465 = vmatprep.subr.mxu0 0.0
  %466 = vmatpush1.msra.mxu0 0.0
  %467 = vmatprep.subr.mxu0 0.0
  %468 = vmatpush1.msra.mxu0 0.0
  %469 = vmatprep.subr.mxu0 0.0
  %470 = vmatpush1.msra.mxu0 0.0
  %471 = vmatprep.subr.mxu0 0.0
  %472 = vmatpush1.msra.mxu0 0.0
  %473 = vmatprep.subr.mxu0 0.0
  %474 = vmatpush1.msra.mxu0 0.0
  %475 = vmatprep.subr.mxu0 0.0
  %476 = vmatpush1.msra.mxu0 0.0
  %477 = vmatprep.subr.mxu0 0.0
  %478 = vmatpush1.msra.mxu0 0.0
  %479 = vmatprep.subr.mxu0 0.0
  %480 = vmatpush1.msra.mxu0 0.0
  %481 = vmatprep.subr.mxu0 0.0
  %482 = vmatpush1.msra.mxu0 0.0
  %483 = vmatprep.subr.mxu0 0.0
  %484 = vmatpush1.msra.mxu0 0.0
  %485 = vmatprep.subr.mxu0 0.0
  %486 = vmatpush1.msra.mxu0 0.0
  %487 = vmatprep.subr.mxu0 0.0
  %488 = vmatpush1.msra.mxu0 0.0
  %489 = vmatprep.subr.mxu0 0.0
  %490 = vmatpush1.msra.mxu0 0.0
  %491 = vmatprep.mubr.f32.mxu0 0.0
  %492 = vmatmul.mubr.f32.gmra.mrb[0].mxu0 %v331
  %v493 = vpop.f32.mrb[0].mxu0
  %v494 = vadd.f32 %v409, %v493
  %v495 = vpop.f32.mrb[0].mxu0
  %496 = vmatprep.mubr.f32.mxu0 0.0
  %497 = vmatmul.mubr.f32.gmra.mrb[0].mxu0 %v333
  %v498 = vpop.f32.mrb[0].mxu0
  %v499 = vadd.f32 %v414, %v498
  %v500 = vpop.f32.mrb[0].mxu0
  %501 = vmatprep.mubr.f32.mxu0 0.0
  %502 = vmatmul.mubr.f32.gmra.mrb[0].mxu0 %v335
  %v503 = vpop.f32.mrb[0].mxu0
  %v504 = vadd.f32 %v419, %v503
  %v505 = vpop.f32.mrb[0].mxu0
  %506 = vmatprep.mubr.f32.mxu0 0.0
  %507 = vmatmul.mubr.f32.gmra.mrb[0].mxu0 %v337
  %v508 = vpop.f32.mrb[0].mxu0
  %v509 = vadd.f32 %v424, %v508
  %v510 = vpop.f32.mrb[0].mxu0
  %511 = vdwg.mxu0
  %v513 = vsel %vm330, %v229, 0
  %v516 = vsel %vm330, %v232, 0
  %v519 = vsel %vm330, %v235, 0
  %v522 = vsel %vm330, %v238, 0
  %v525 = vsel %vm88, %v295, 0
  %527 = vmatprep.subr.mxu0 0.0
  %528 = vmatpush1.msra.mxu0 %v263
  %529 = vmatprep.subr.mxu0 0.0
  %530 = vmatpush1.msra.mxu0 %v264
  %531 = vmatprep.subr.mxu0 0.0
  %532 = vmatpush1.msra.mxu0 %v265
  %533 = vmatprep.subr.mxu0 0.0
  %534 = vmatpush1.msra.mxu0 %v266
  %535 = vmatprep.subr.mxu0 0.0
  %536 = vmatpush1.msra.mxu0 %v267
  %537 = vmatprep.subr.mxu0 0.0
  %538 = vmatpush1.msra.mxu0 %v268
  %539 = vmatprep.subr.mxu0 0.0
  %540 = vmatpush1.msra.mxu0 %v269
  %541 = vmatprep.subr.mxu0 0.0
  %542 = vmatpush1.msra.mxu0 %v270
  %543 = vmatprep.subr.mxu0 0.0
  %544 = vmatpush1.msra.mxu0 %v271
  %545 = vmatprep.subr.mxu0 0.0
  %546 = vmatpush1.msra.mxu0 %v272
  %547 = vmatprep.subr.mxu0 0.0
  %548 = vmatpush1.msra.mxu0 %v273
  %549 = vmatprep.subr.mxu0 0.0
  %550 = vmatpush1.msra.mxu0 %v274
  %551 = vmatprep.subr.mxu0 0.0
  %552 = vmatpush1.msra.mxu0 %v275
  %553 = vmatprep.subr.mxu0 0.0
  %554 = vmatpush1.msra.mxu0 %v276
  %555 = vmatprep.subr.mxu0 0.0
  %556 = vmatpush1.msra.mxu0 %v277
  %557 = vmatprep.subr.mxu0 0.0
  %558 = vmatpush1.msra.mxu0 %v278
  %559 = vmatprep.subr.mxu0 0.0
  %560 = vmatpush1.msra.mxu0 %v279
  %561 = vmatprep.subr.mxu0 0.0
  %562 = vmatpush1.msra.mxu0 %v280
  %563 = vmatprep.subr.mxu0 0.0
  %564 = vmatpush1.msra.mxu0 %v281
  %565 = vmatprep.subr.mxu0 0.0
  %566 = vmatpush1.msra.mxu0 %v282
  %567 = vmatprep.subr.mxu0 0.0
  %568 = vmatpush1.msra.mxu0 %v283
  %569 = vmatprep.subr.mxu0 0.0
  %570 = vmatpush1.msra.mxu0 %v284
  %571 = vmatprep.subr.mxu0 0.0
  %572 = vmatpush1.msra.mxu0 %v285
  %573 = vmatprep.subr.mxu0 0.0
  %574 = vmatpush1.msra.mxu0 %v286
  %575 = vmatprep.subr.mxu0 0.0
  %576 = vmatpush1.msra.mxu0 %v287
  %577 = vmatprep.subr.mxu0 0.0
  %578 = vmatpush1.msra.mxu0 %v288
  %579 = vmatprep.subr.mxu0 0.0
  %580 = vmatpush1.msra.mxu0 %v289
  %581 = vmatprep.subr.mxu0 0.0
  %582 = vmatpush1.msra.mxu0 %v290
  %583 = vmatprep.subr.mxu0 0.0
  %584 = vmatpush1.msra.mxu0 %v291
  %585 = vmatprep.subr.mxu0 0.0
  %586 = vmatpush1.msra.mxu0 %v292
  %587 = vmatprep.subr.mxu0 0.0
  %588 = vmatpush1.msra.mxu0 %v293
  %589 = vmatprep.subr.mxu0 0.0
  %590 = vmatpush1.msra.mxu0 %v294
  %591 = vmatprep.mubr.f32.mxu0 %v228
  %592 = vmatmul.mubr.f32.gmra.mrb[0].mxu0 %v227
  %v593 = vpop.f32.mrb[0].mxu0
  %v594 = vadd.f32 %v494, %v593
  %v595 = vpop.f32.mrb[0].mxu0
  %596 = vmatprep.mubr.f32.mxu0 %v231
  %597 = vmatmul.mubr.f32.gmra.mrb[0].mxu0 %v230
  %v598 = vpop.f32.mrb[0].mxu0
  %v599 = vadd.f32 %v499, %v598
  %v600 = vpop.f32.mrb[0].mxu0
  %601 = vmatprep.mubr.f32.mxu0 %v234
  %602 = vmatmul.mubr.f32.gmra.mrb[0].mxu0 %v233
  %v603 = vpop.f32.mrb[0].mxu0
  %v604 = vadd.f32 %v504, %v603
  %v605 = vpop.f32.mrb[0].mxu0
  %606 = vmatprep.mubr.f32.mxu0 %v237
  %607 = vmatmul.mubr.f32.gmra.mrb[0].mxu0 %v236
  %v608 = vpop.f32.mrb[0].mxu0
  %v609 = vadd.f32 %v509, %v608
  %v610 = vpop.f32.mrb[0].mxu0
  %611 = vdwg.mxu0
  %612 = vmatprep.subr.mxu0 0.0
  %613 = vmatpush1.msra.mxu0 %v525
  %614 = vmatprep.subr.mxu0 0.0
  %615 = vmatpush1.msra.mxu0 0.0
  %616 = vmatprep.subr.mxu0 0.0
  %617 = vmatpush1.msra.mxu0 0.0
  %618 = vmatprep.subr.mxu0 0.0
  %619 = vmatpush1.msra.mxu0 0.0
  %620 = vmatprep.subr.mxu0 0.0
  %621 = vmatpush1.msra.mxu0 0.0
  %622 = vmatprep.subr.mxu0 0.0
  %623 = vmatpush1.msra.mxu0 0.0
  %624 = vmatprep.subr.mxu0 0.0
  %625 = vmatpush1.msra.mxu0 0.0
  %626 = vmatprep.subr.mxu0 0.0
  %627 = vmatpush1.msra.mxu0 0.0
  %628 = vmatprep.subr.mxu0 0.0
  %629 = vmatpush1.msra.mxu0 0.0
  %630 = vmatprep.subr.mxu0 0.0
  %631 = vmatpush1.msra.mxu0 0.0
  %632 = vmatprep.subr.mxu0 0.0
  %633 = vmatpush1.msra.mxu0 0.0
  %634 = vmatprep.subr.mxu0 0.0
  %635 = vmatpush1.msra.mxu0 0.0
  %636 = vmatprep.subr.mxu0 0.0
  %637 = vmatpush1.msra.mxu0 0.0
  %638 = vmatprep.subr.mxu0 0.0
  %639 = vmatpush1.msra.mxu0 0.0
  %640 = vmatprep.subr.mxu0 0.0
  %641 = vmatpush1.msra.mxu0 0.0
  %642 = vmatprep.subr.mxu0 0.0
  %643 = vmatpush1.msra.mxu0 0.0
  %644 = vmatprep.subr.mxu0 0.0
  %645 = vmatpush1.msra.mxu0 0.0
  %646 = vmatprep.subr.mxu0 0.0
  %647 = vmatpush1.msra.mxu0 0.0
  %648 = vmatprep.subr.mxu0 0.0
  %649 = vmatpush1.msra.mxu0 0.0
  %650 = vmatprep.subr.mxu0 0.0
  %651 = vmatpush1.msra.mxu0 0.0
  %652 = vmatprep.subr.mxu0 0.0
  %653 = vmatpush1.msra.mxu0 0.0
  %654 = vmatprep.subr.mxu0 0.0
  %655 = vmatpush1.msra.mxu0 0.0
  %656 = vmatprep.subr.mxu0 0.0
  %657 = vmatpush1.msra.mxu0 0.0
  %658 = vmatprep.subr.mxu0 0.0
  %659 = vmatpush1.msra.mxu0 0.0
  %660 = vmatprep.subr.mxu0 0.0
  %661 = vmatpush1.msra.mxu0 0.0
  %662 = vmatprep.subr.mxu0 0.0
  %663 = vmatpush1.msra.mxu0 0.0
  %664 = vmatprep.subr.mxu0 0.0
  %665 = vmatpush1.msra.mxu0 0.0
  %666 = vmatprep.subr.mxu0 0.0
  %667 = vmatpush1.msra.mxu0 0.0
  %668 = vmatprep.subr.mxu0 0.0
  %669 = vmatpush1.msra.mxu0 0.0
  %670 = vmatprep.subr.mxu0 0.0
  %671 = vmatpush1.msra.mxu0 0.0
  %672 = vmatprep.subr.mxu0 0.0
  %673 = vmatpush1.msra.mxu0 0.0
  %674 = vmatprep.subr.mxu0 0.0
  %675 = vmatpush1.msra.mxu0 0.0
  %676 = vmatprep.mubr.f32.mxu0 0.0
  %677 = vmatmul.mubr.f32.gmra.mrb[0].mxu0 %v513
  %v678 = vpop.f32.mrb[0].mxu0
  %v679 = vadd.f32 %v594, %v678
  %v680 = vpop.f32.mrb[0].mxu0
  %681 = vmatprep.mubr.f32.mxu0 0.0
  %682 = vmatmul.mubr.f32.gmra.mrb[0].mxu0 %v516
  %v683 = vpop.f32.mrb[0].mxu0
  %v684 = vadd.f32 %v599, %v683
  %v685 = vpop.f32.mrb[0].mxu0
  %686 = vmatprep.mubr.f32.mxu0 0.0
  %687 = vmatmul.mubr.f32.gmra.mrb[0].mxu0 %v519
  %v688 = vpop.f32.mrb[0].mxu0
  %v689 = vadd.f32 %v604, %v688
  %v690 = vpop.f32.mrb[0].mxu0
  %691 = vmatprep.mubr.f32.mxu0 0.0
  %692 = vmatmul.mubr.f32.gmra.mrb[0].mxu0 %v522
  %v693 = vpop.f32.mrb[0].mxu0
  %v694 = vadd.f32 %v609, %v693
  %v695 = vpop.f32.mrb[0].mxu0
  %696 = vdwg.mxu0
  %s697 = scalar_lea.vmem %s1, 528
  %v698 = vld [vmem:[%s697] sm:$0xff]
  %v699 = vld [vmem:[%s697 + $0x8] sm:$0xff]
  %v700 = vld [vmem:[%s697 + $0x10] sm:$0xff]
  %v701 = vld [vmem:[%s697 + $0x18] sm:$0xff]
  %v702 = vld [vmem:[%s697 + $0x20] sm:$0xff]
  %v703 = vld [vmem:[%s697 + $0x28] sm:$0xff]
  %v704 = vld [vmem:[%s697 + $0x30] sm:$0xff]
  %v705 = vld [vmem:[%s697 + $0x38] sm:$0xff]
  %v706 = vld [vmem:[%s697 + $0x40] sm:$0xff]
  %v707 = vld [vmem:[%s697 + $0x48] sm:$0xff]
  %v708 = vld [vmem:[%s697 + $0x50] sm:$0xff]
  %v709 = vld [vmem:[%s697 + $0x58] sm:$0xff]
  %v710 = vld [vmem:[%s697 + $0x60] sm:$0xff]
  %v711 = vld [vmem:[%s697 + $0x68] sm:$0xff]
  %v712 = vld [vmem:[%s697 + $0x70] sm:$0xff]
  %v713 = vld [vmem:[%s697 + $0x78] sm:$0xff]
  %v714 = vld [vmem:[%s697 + $0x80] sm:$0xff]
  %v715 = vld [vmem:[%s697 + $0x88] sm:$0xff]
  %v716 = vld [vmem:[%s697 + $0x90] sm:$0xff]
  %v717 = vld [vmem:[%s697 + $0x98] sm:$0xff]
  %v718 = vld [vmem:[%s697 + $0xa0] sm:$0xff]
  %v719 = vld [vmem:[%s697 + $0xa8] sm:$0xff]
  %v720 = vld [vmem:[%s697 + $0xb0] sm:$0xff]
  %v721 = vld [vmem:[%s697 + $0xb8] sm:$0xff]
  %v722 = vld [vmem:[%s697 + $0xc0] sm:$0xff]
  %v723 = vld [vmem:[%s697 + $0xc8] sm:$0xff]
  %v724 = vld [vmem:[%s697 + $0xd0] sm:$0xff]
  %v725 = vld [vmem:[%s697 + $0xd8] sm:$0xff]
  %v726 = vld [vmem:[%s697 + $0xe0] sm:$0xff]
  %v727 = vld [vmem:[%s697 + $0xe8] sm:$0xff]
  %v728 = vld [vmem:[%s697 + $0xf0] sm:$0xff]
  %v729 = vld [vmem:[%s697 + $0xf8] sm:$0xff]
  %v730 = vld [vmem:[%s697 + $0x100] sm:$0x1]
  %v732 = vsel %vm330, %v253, 0
  %v735 = vsel %vm330, %v256, 0
  %v738 = vsel %vm330, %v259, 0
  %v741 = vsel %vm330, %v262, 0
  %v744 = vsel %vm88, %v730, 0
  %746 = vmatprep.subr.mxu0 0.0
  %747 = vmatpush1.msra.mxu0 %v698
  %748 = vmatprep.subr.mxu0 0.0
  %749 = vmatpush1.msra.mxu0 %v699
  %750 = vmatprep.subr.mxu0 0.0
  %751 = vmatpush1.msra.mxu0 %v700
  %752 = vmatprep.subr.mxu0 0.0
  %753 = vmatpush1.msra.mxu0 %v701
  %754 = vmatprep.subr.mxu0 0.0
  %755 = vmatpush1.msra.mxu0 %v702
  %756 = vmatprep.subr.mxu0 0.0
  %757 = vmatpush1.msra.mxu0 %v703
  %758 = vmatprep.subr.mxu0 0.0
  %759 = vmatpush1.msra.mxu0 %v704
  %760 = vmatprep.subr.mxu0 0.0
  %761 = vmatpush1.msra.mxu0 %v705
  %762 = vmatprep.subr.mxu0 0.0
  %763 = vmatpush1.msra.mxu0 %v706
  %764 = vmatprep.subr.mxu0 0.0
  %765 = vmatpush1.msra.mxu0 %v707
  %766 = vmatprep.subr.mxu0 0.0
  %767 = vmatpush1.msra.mxu0 %v708
  %768 = vmatprep.subr.mxu0 0.0
  %769 = vmatpush1.msra.mxu0 %v709
  %770 = vmatprep.subr.mxu0 0.0
  %771 = vmatpush1.msra.mxu0 %v710
  %772 = vmatprep.subr.mxu0 0.0
  %773 = vmatpush1.msra.mxu0 %v711
  %774 = vmatprep.subr.mxu0 0.0
  %775 = vmatpush1.msra.mxu0 %v712
  %776 = vmatprep.subr.mxu0 0.0
  %777 = vmatpush1.msra.mxu0 %v713
  %778 = vmatprep.subr.mxu0 0.0
  %779 = vmatpush1.msra.mxu0 %v714
  %780 = vmatprep.subr.mxu0 0.0
  %781 = vmatpush1.msra.mxu0 %v715
  %782 = vmatprep.subr.mxu0 0.0
  %783 = vmatpush1.msra.mxu0 %v716
  %784 = vmatprep.subr.mxu0 0.0
  %785 = vmatpush1.msra.mxu0 %v717
  %786 = vmatprep.subr.mxu0 0.0
  %787 = vmatpush1.msra.mxu0 %v718
  %788 = vmatprep.subr.mxu0 0.0
  %789 = vmatpush1.msra.mxu0 %v719
  %790 = vmatprep.subr.mxu0 0.0
  %791 = vmatpush1.msra.mxu0 %v720
  %792 = vmatprep.subr.mxu0 0.0
  %793 = vmatpush1.msra.mxu0 %v721
  %794 = vmatprep.subr.mxu0 0.0
  %795 = vmatpush1.msra.mxu0 %v722
  %796 = vmatprep.subr.mxu0 0.0
  %797 = vmatpush1.msra.mxu0 %v723
  %798 = vmatprep.subr.mxu0 0.0
  %799 = vmatpush1.msra.mxu0 %v724
  %800 = vmatprep.subr.mxu0 0.0
  %801 = vmatpush1.msra.mxu0 %v725
  %802 = vmatprep.subr.mxu0 0.0
  %803 = vmatpush1.msra.mxu0 %v726
  %804 = vmatprep.subr.mxu0 0.0
  %805 = vmatpush1.msra.mxu0 %v727
  %806 = vmatprep.subr.mxu0 0.0
  %807 = vmatpush1.msra.mxu0 %v728
  %808 = vmatprep.subr.mxu0 0.0
  %809 = vmatpush1.msra.mxu0 %v729
  %810 = vmatprep.mubr.f32.mxu0 %v252
  %811 = vmatmul.mubr.f32.gmra.mrb[0].mxu0 %v251
  %v812 = vpop.f32.mrb[0].mxu0
  %v813 = vadd.f32 0.0, %v812
  %v814 = vpop.f32.mrb[0].mxu0
  %815 = vmatprep.mubr.f32.mxu0 %v255
  %816 = vmatmul.mubr.f32.gmra.mrb[0].mxu0 %v254
  %v817 = vpop.f32.mrb[0].mxu0
  %v818 = vadd.f32 0.0, %v817
  %v819 = vpop.f32.mrb[0].mxu0
  %820 = vmatprep.mubr.f32.mxu0 %v258
  %821 = vmatmul.mubr.f32.gmra.mrb[0].mxu0 %v257
  %v822 = vpop.f32.mrb[0].mxu0
  %v823 = vadd.f32 0.0, %v822
  %v824 = vpop.f32.mrb[0].mxu0
  %825 = vmatprep.mubr.f32.mxu0 %v261
  %826 = vmatmul.mubr.f32.gmra.mrb[0].mxu0 %v260
  %v827 = vpop.f32.mrb[0].mxu0
  %v828 = vadd.f32 0.0, %v827
  %v829 = vpop.f32.mrb[0].mxu0
  %830 = vdwg.mxu0
  %831 = vmatprep.subr.mxu0 0.0
  %832 = vmatpush1.msra.mxu0 %v744
  %833 = vmatprep.subr.mxu0 0.0
  %834 = vmatpush1.msra.mxu0 0.0
  %835 = vmatprep.subr.mxu0 0.0
  %836 = vmatpush1.msra.mxu0 0.0
  %837 = vmatprep.subr.mxu0 0.0
  %838 = vmatpush1.msra.mxu0 0.0
  %839 = vmatprep.subr.mxu0 0.0
  %840 = vmatpush1.msra.mxu0 0.0
  %841 = vmatprep.subr.mxu0 0.0
  %842 = vmatpush1.msra.mxu0 0.0
  %843 = vmatprep.subr.mxu0 0.0
  %844 = vmatpush1.msra.mxu0 0.0
  %845 = vmatprep.subr.mxu0 0.0
  %846 = vmatpush1.msra.mxu0 0.0
  %847 = vmatprep.subr.mxu0 0.0
  %848 = vmatpush1.msra.mxu0 0.0
  %849 = vmatprep.subr.mxu0 0.0
  %850 = vmatpush1.msra.mxu0 0.0
  %851 = vmatprep.subr.mxu0 0.0
  %852 = vmatpush1.msra.mxu0 0.0
  %853 = vmatprep.subr.mxu0 0.0
  %854 = vmatpush1.msra.mxu0 0.0
  %855 = vmatprep.subr.mxu0 0.0
  %856 = vmatpush1.msra.mxu0 0.0
  %857 = vmatprep.subr.mxu0 0.0
  %858 = vmatpush1.msra.mxu0 0.0
  %859 = vmatprep.subr.mxu0 0.0
  %860 = vmatpush1.msra.mxu0 0.0
  %861 = vmatprep.subr.mxu0 0.0
  %862 = vmatpush1.msra.mxu0 0.0
  %863 = vmatprep.subr.mxu0 0.0
  %864 = vmatpush1.msra.mxu0 0.0
  %865 = vmatprep.subr.mxu0 0.0
  %866 = vmatpush1.msra.mxu0 0.0
  %867 = vmatprep.subr.mxu0 0.0
  %868 = vmatpush1.msra.mxu0 0.0
  %869 = vmatprep.subr.mxu0 0.0
  %870 = vmatpush1.msra.mxu0 0.0
  %871 = vmatprep.subr.mxu0 0.0
  %872 = vmatpush1.msra.mxu0 0.0
  %873 = vmatprep.subr.mxu0 0.0
  %874 = vmatpush1.msra.mxu0 0.0
  %875 = vmatprep.subr.mxu0 0.0
  %876 = vmatpush1.msra.mxu0 0.0
  %877 = vmatprep.subr.mxu0 0.0
  %878 = vmatpush1.msra.mxu0 0.0
  %879 = vmatprep.subr.mxu0 0.0
  %880 = vmatpush1.msra.mxu0 0.0
  %881 = vmatprep.subr.mxu0 0.0
  %882 = vmatpush1.msra.mxu0 0.0
  %883 = vmatprep.subr.mxu0 0.0
  %884 = vmatpush1.msra.mxu0 0.0
  %885 = vmatprep.subr.mxu0 0.0
  %886 = vmatpush1.msra.mxu0 0.0
  %887 = vmatprep.subr.mxu0 0.0
  %888 = vmatpush1.msra.mxu0 0.0
  %889 = vmatprep.subr.mxu0 0.0
  %890 = vmatpush1.msra.mxu0 0.0
  %891 = vmatprep.subr.mxu0 0.0
  %892 = vmatpush1.msra.mxu0 0.0
  %893 = vmatprep.subr.mxu0 0.0
  %894 = vmatpush1.msra.mxu0 0.0
  %895 = vmatprep.mubr.f32.mxu0 0.0
  %896 = vmatmul.mubr.f32.gmra.mrb[0].mxu0 %v732
  %v897 = vpop.f32.mrb[0].mxu0
  %v898 = vadd.f32 %v813, %v897
  %v899 = vpop.f32.mrb[0].mxu0
  %900 = vmatprep.mubr.f32.mxu0 0.0
  %901 = vmatmul.mubr.f32.gmra.mrb[0].mxu0 %v735
  %v902 = vpop.f32.mrb[0].mxu0
  %v903 = vadd.f32 %v818, %v902
  %v904 = vpop.f32.mrb[0].mxu0
  %905 = vmatprep.mubr.f32.mxu0 0.0
  %906 = vmatmul.mubr.f32.gmra.mrb[0].mxu0 %v738
  %v907 = vpop.f32.mrb[0].mxu0
  %v908 = vadd.f32 %v823, %v907
  %v909 = vpop.f32.mrb[0].mxu0
  %910 = vmatprep.mubr.f32.mxu0 0.0
  %911 = vmatmul.mubr.f32.gmra.mrb[0].mxu0 %v741
  %v912 = vpop.f32.mrb[0].mxu0
  %v913 = vadd.f32 %v828, %v912
  %v914 = vpop.f32.mrb[0].mxu0
  %915 = vdwg.mxu0
  %v916 = vadd.f32 %v679, %v898
  %v917 = vadd.f32 %v684, %v903
  %v918 = vadd.f32 %v689, %v908
  %v919 = vadd.f32 %v694, %v913
  %v920 = vld [vmem:[%s2] sm:$0x1]
  %v922 = vlaneseq
  %v923 = vshrl.u32 %v922, 7
  %v924 = vsub.s32 0, %v923
  %v925 = vrot.slane %v920, %v924
  %v927 = vadd.f32 %v916, %v925
  %v928 = vadd.f32 %v917, %v925
  %v929 = vadd.f32 %v918, %v925
  %v930 = vadd.f32 %v919, %v925
  %v931 = vmax.f32 %v927, 0.0
  %v932 = vmax.f32 %v928, 0.0
  %v933 = vmax.f32 %v929, 0.0
  %v934 = vmax.f32 %v930, 0.0
  %v936 = vrot.slane %v931, 1
  %v938 = vmax.f32 %v931, %v936
  %v940 = vrot.slane %v932, 1
  %v942 = vmax.f32 %v932, %v940
  %v944 = vrot.slane %v933, 1
  %v946 = vmax.f32 %v933, %v944
  %v948 = vrot.slane %v934, 1
  %v950 = vmax.f32 %v934, %v948
  %v952 = vrot.slane %v938, 1
  %v954 = vrot.slane %v938, 2
  %v956 = vrot.slane %v938, 3
  %v959 = vrot.slane %v942, 4
  %v961 = vrot.slane %v942, 5
  %v963 = vrot.slane %v942, 6
  %v965 = vrot.slane %v942, 7
  %v968 = vrot.slane %v946, 1
  %v970 = vrot.slane %v946, 2
  %v972 = vrot.slane %v946, 3
  %v975 = vrot.slane %v950, 4
  %v977 = vrot.slane %v950, 5
  %v979 = vrot.slane %v950, 6
  %v981 = vrot.slane %v950, 7
  %v983 = vsel %vm88, %v938, %v952
  %vm984 = vcmask 1041408
  %v985 = vsel %vm984, %v983, %v954
  %vm986 = vcmask 1042432
  %v987 = vsel %vm986, %v985, %v956
  %vm988 = vcmask 1043456
  %v989 = vsel %vm988, %v987, %v959
  %vm990 = vcmask 1044480
  %v991 = vsel %vm990, %v989, %v961
  %vm992 = vcmask 1045504
  %v993 = vsel %vm992, %v991, %v963
  %v994 = vsel %vm125, %v993, %v965
  %v995 = vsel %vm88, %v946, %v968
  %v996 = vsel %vm984, %v995, %v970
  %v997 = vsel %vm986, %v996, %v972
  %v998 = vsel %vm988, %v997, %v975
  %v999 = vsel %vm990, %v998, %v977
  %v1000 = vsel %vm992, %v999, %v979
  %v1001 = vsel %vm125, %v1000, %v981
  %v1004 = vrot.slane %v994, 7
  %v1005 = vrot.slane %v1001, 7
  %v1006 = vsel %vm88, %v1004, %v1005
  %v1009 = vsel %vm88, 0.0, %v1004
  %v1010 = vrot.slane %v994, 1
  %v1011 = vrot.slane %v1001, 1
  %v1012 = vsel %vm125, %v1010, %v1011
  %v1015 = vsel %vm125, %v1011, 0.0
  %vm1016 = vcmp.lt.s32.totalorder %v163, 0
  %v1017 = vsub.s32 0, %v163
  %v1018 = vsel %vm1016, %v1017, %v163
  %v1019 = vshrl.u32 %v1018, 3
  %v1020 = vand.u32 %v1018, 7
  %v1021 = vsub.s32 0, %v1020
  %v1022 = vsel %vm1016, %v1021, %v1020
  %vm1023 = vcmp.lt.s32.totalorder %v164, 0
  %v1024 = vsub.s32 0, %v164
  %v1025 = vsel %vm1023, %v1024, %v164
  %v1026 = vshrl.u32 %v1025, 3
  %v1027 = vand.u32 %v1025, 7
  %v1028 = vsub.s32 0, %v1027
  %v1029 = vsel %vm1023, %v1028, %v1027
  %vm1030 = vcmp.ne.s32.totalorder %v1022, 0
  %vm1031 = vcmp.ne.s32.totalorder %v1029, 0
  %vm1032 = vcmp.lt.s32.totalorder %v1022, 0
  %vm1033 = vcmp.lt.s32.totalorder %v1029, 0
  %vm1034 = vmand %vm1032, %vm1030
  %vm1035 = vmand %vm1033, %vm1031
  %v1036 = vadd.s32 %v1022, 8
  %v1037 = vadd.s32 %v1029, 8
  %v1038 = vsel %vm1034, %v1036, %v1022
  %v1039 = vsel %vm1035, %v1037, %v1029
  %vm1040 = vcmp.eq.s32.totalorder %v1038, 0
  %vm1041 = vcmp.eq.s32.totalorder %v1039, 0
  %v1042 = vsel %vm1040, 1, 0
  %v1043 = vsel %vm1041, 1, 0
  %vm1044 = vcmp.eq.s32.totalorder %v1042, 1
  %vm1045 = vcmp.eq.s32.totalorder %v1043, 1
  %v1046 = vsel %vm1044, 0.0, %v1009
  %v1047 = vsel %vm1045, 0.0, %v1006
  %vm1048 = vcmp.eq.s32.totalorder %v1038, 7
  %vm1049 = vcmp.eq.s32.totalorder %v1039, 7
  %v1050 = vsel %vm1048, 1, 0
  %v1051 = vsel %vm1049, 1, 0
  %vm1052 = vcmp.eq.s32.totalorder %v1050, 1
  %vm1053 = vcmp.eq.s32.totalorder %v1051, 1
  %v1054 = vsel %vm1052, 0.0, %v1012
  %v1055 = vsel %vm1053, 0.0, %v1015
  %v1056 = vld [vmem:[%s3] sm:$0xff]
  %v1057 = vld [vmem:[%s3 + $0x8] sm:$0xff]
  %v1058 = vld [vmem:[%s3 + $0x10] sm:$0xff]
  %v1059 = vld [vmem:[%s3 + $0x18] sm:$0xff]
  %v1060 = vld [vmem:[%s3 + $0x20] sm:$0xff]
  %v1061 = vld [vmem:[%s3 + $0x28] sm:$0xff]
  %v1062 = vld [vmem:[%s3 + $0x30] sm:$0xff]
  %v1063 = vld [vmem:[%s3 + $0x38] sm:$0xff]
  %v1064 = vld [vmem:[%s3 + $0x40] sm:$0xff]
  %v1065 = vld [vmem:[%s3 + $0x48] sm:$0xff]
  %v1066 = vld [vmem:[%s3 + $0x50] sm:$0xff]
  %v1067 = vld [vmem:[%s3 + $0x58] sm:$0xff]
  %v1068 = vld [vmem:[%s3 + $0x60] sm:$0xff]
  %v1069 = vld [vmem:[%s3 + $0x68] sm:$0xff]
  %v1070 = vld [vmem:[%s3 + $0x70] sm:$0xff]
  %v1071 = vld [vmem:[%s3 + $0x78] sm:$0xff]
  %s1072 = scalar_lea.vmem %s3, 128
  %v1073 = vld [vmem:[%s1072] sm:$0xff]
  %v1074 = vld [vmem:[%s1072 + $0x8] sm:$0xff]
  %v1075 = vld [vmem:[%s1072 + $0x10] sm:$0xff]
  %v1076 = vld [vmem:[%s1072 + $0x18] sm:$0xff]
  %v1077 = vld [vmem:[%s1072 + $0x20] sm:$0xff]
  %v1078 = vld [vmem:[%s1072 + $0x28] sm:$0xff]
  %v1079 = vld [vmem:[%s1072 + $0x30] sm:$0xff]
  %v1080 = vld [vmem:[%s1072 + $0x38] sm:$0xff]
  %v1081 = vld [vmem:[%s1072 + $0x40] sm:$0xff]
  %v1082 = vld [vmem:[%s1072 + $0x48] sm:$0xff]
  %v1083 = vld [vmem:[%s1072 + $0x50] sm:$0xff]
  %v1084 = vld [vmem:[%s1072 + $0x58] sm:$0xff]
  %v1085 = vld [vmem:[%s1072 + $0x60] sm:$0xff]
  %v1086 = vld [vmem:[%s1072 + $0x68] sm:$0xff]
  %v1087 = vld [vmem:[%s1072 + $0x70] sm:$0xff]
  %v1088 = vld [vmem:[%s1072 + $0x78] sm:$0xff]
  %1089 = vmatprep.subr.mxu0 0.0
  %1090 = vmatpush1.msra.mxu0 %v1073
  %1091 = vmatprep.subr.mxu0 0.0
  %1092 = vmatpush1.msra.mxu0 %v1074
  %1093 = vmatprep.subr.mxu0 0.0
  %1094 = vmatpush1.msra.mxu0 %v1075
  %1095 = vmatprep.subr.mxu0 0.0
  %1096 = vmatpush1.msra.mxu0 %v1076
  %1097 = vmatprep.subr.mxu0 0.0
  %1098 = vmatpush1.msra.mxu0 %v1077
  %1099 = vmatprep.subr.mxu0 0.0
  %1100 = vmatpush1.msra.mxu0 %v1078
  %1101 = vmatprep.subr.mxu0 0.0
  %1102 = vmatpush1.msra.mxu0 %v1079
  %1103 = vmatprep.subr.mxu0 0.0
  %1104 = vmatpush1.msra.mxu0 %v1080
  %1105 = vmatprep.subr.mxu0 0.0
  %1106 = vmatpush1.msra.mxu0 %v1081
  %1107 = vmatprep.subr.mxu0 0.0
  %1108 = vmatpush1.msra.mxu0 %v1082
  %1109 = vmatprep.subr.mxu0 0.0
  %1110 = vmatpush1.msra.mxu0 %v1083
  %1111 = vmatprep.subr.mxu0 0.0
  %1112 = vmatpush1.msra.mxu0 %v1084
  %1113 = vmatprep.subr.mxu0 0.0
  %1114 = vmatpush1.msra.mxu0 %v1085
  %1115 = vmatprep.subr.mxu0 0.0
  %1116 = vmatpush1.msra.mxu0 %v1086
  %1117 = vmatprep.subr.mxu0 0.0
  %1118 = vmatpush1.msra.mxu0 %v1087
  %1119 = vmatprep.subr.mxu0 0.0
  %1120 = vmatpush1.msra.mxu0 %v1088
  %1121 = vmatprep.subr.mxu0 0.0
  %1122 = vmatpush1.msra.mxu0 0.0
  %1123 = vmatprep.subr.mxu0 0.0
  %1124 = vmatpush1.msra.mxu0 0.0
  %1125 = vmatprep.subr.mxu0 0.0
  %1126 = vmatpush1.msra.mxu0 0.0
  %1127 = vmatprep.subr.mxu0 0.0
  %1128 = vmatpush1.msra.mxu0 0.0
  %1129 = vmatprep.subr.mxu0 0.0
  %1130 = vmatpush1.msra.mxu0 0.0
  %1131 = vmatprep.subr.mxu0 0.0
  %1132 = vmatpush1.msra.mxu0 0.0
  %1133 = vmatprep.subr.mxu0 0.0
  %1134 = vmatpush1.msra.mxu0 0.0
  %1135 = vmatprep.subr.mxu0 0.0
  %1136 = vmatpush1.msra.mxu0 0.0
  %1137 = vmatprep.subr.mxu0 0.0
  %1138 = vmatpush1.msra.mxu0 0.0
  %1139 = vmatprep.subr.mxu0 0.0
  %1140 = vmatpush1.msra.mxu0 0.0
  %1141 = vmatprep.subr.mxu0 0.0
  %1142 = vmatpush1.msra.mxu0 0.0
  %1143 = vmatprep.subr.mxu0 0.0
  %1144 = vmatpush1.msra.mxu0 0.0
  %1145 = vmatprep.subr.mxu0 0.0
  %1146 = vmatpush1.msra.mxu0 0.0
  %1147 = vmatprep.subr.mxu0 0.0
  %1148 = vmatpush1.msra.mxu0 0.0
  %1149 = vmatprep.subr.mxu0 0.0
  %1150 = vmatpush1.msra.mxu0 0.0
  %1151 = vmatprep.subr.mxu0 0.0
  %1152 = vmatpush1.msra.mxu0 0.0
  %1153 = vmatprep.mubr.f32.mxu0 0.0
  %1154 = vmatmul.mubr.f32.gmra.mrb[0].mxu0 %v994
  %v1155 = vpop.f32.mrb[0].mxu0
  %v1156 = vadd.f32 0.0, %v1155
  %v1157 = vpop.f32.mrb[0].mxu0
  %1158 = vmatprep.mubr.f32.mxu0 0.0
  %1159 = vmatmul.mubr.f32.gmra.mrb[0].mxu0 %v1001
  %v1160 = vpop.f32.mrb[0].mxu0
  %v1161 = vadd.f32 0.0, %v1160
  %v1162 = vpop.f32.mrb[0].mxu0
  %1163 = vdwg.mxu0
  %1164 = vmatprep.subr.mxu0 0.0
  %1165 = vmatpush1.msra.mxu0 %v1056
  %1166 = vmatprep.subr.mxu0 0.0
  %1167 = vmatpush1.msra.mxu0 %v1057
  %1168 = vmatprep.subr.mxu0 0.0
  %1169 = vmatpush1.msra.mxu0 %v1058
  %1170 = vmatprep.subr.mxu0 0.0
  %1171 = vmatpush1.msra.mxu0 %v1059
  %1172 = vmatprep.subr.mxu0 0.0
  %1173 = vmatpush1.msra.mxu0 %v1060
  %1174 = vmatprep.subr.mxu0 0.0
  %1175 = vmatpush1.msra.mxu0 %v1061
  %1176 = vmatprep.subr.mxu0 0.0
  %1177 = vmatpush1.msra.mxu0 %v1062
  %1178 = vmatprep.subr.mxu0 0.0
  %1179 = vmatpush1.msra.mxu0 %v1063
  %1180 = vmatprep.subr.mxu0 0.0
  %1181 = vmatpush1.msra.mxu0 %v1064
  %1182 = vmatprep.subr.mxu0 0.0
  %1183 = vmatpush1.msra.mxu0 %v1065
  %1184 = vmatprep.subr.mxu0 0.0
  %1185 = vmatpush1.msra.mxu0 %v1066
  %1186 = vmatprep.subr.mxu0 0.0
  %1187 = vmatpush1.msra.mxu0 %v1067
  %1188 = vmatprep.subr.mxu0 0.0
  %1189 = vmatpush1.msra.mxu0 %v1068
  %1190 = vmatprep.subr.mxu0 0.0
  %1191 = vmatpush1.msra.mxu0 %v1069
  %1192 = vmatprep.subr.mxu0 0.0
  %1193 = vmatpush1.msra.mxu0 %v1070
  %1194 = vmatprep.subr.mxu0 0.0
  %1195 = vmatpush1.msra.mxu0 %v1071
  %1196 = vmatprep.subr.mxu0 0.0
  %1197 = vmatpush1.msra.mxu0 0.0
  %1198 = vmatprep.subr.mxu0 0.0
  %1199 = vmatpush1.msra.mxu0 0.0
  %1200 = vmatprep.subr.mxu0 0.0
  %1201 = vmatpush1.msra.mxu0 0.0
  %1202 = vmatprep.subr.mxu0 0.0
  %1203 = vmatpush1.msra.mxu0 0.0
  %1204 = vmatprep.subr.mxu0 0.0
  %1205 = vmatpush1.msra.mxu0 0.0
  %1206 = vmatprep.subr.mxu0 0.0
  %1207 = vmatpush1.msra.mxu0 0.0
  %1208 = vmatprep.subr.mxu0 0.0
  %1209 = vmatpush1.msra.mxu0 0.0
  %1210 = vmatprep.subr.mxu0 0.0
  %1211 = vmatpush1.msra.mxu0 0.0
  %1212 = vmatprep.subr.mxu0 0.0
  %1213 = vmatpush1.msra.mxu0 0.0
  %1214 = vmatprep.subr.mxu0 0.0
  %1215 = vmatpush1.msra.mxu0 0.0
  %1216 = vmatprep.subr.mxu0 0.0
  %1217 = vmatpush1.msra.mxu0 0.0
  %1218 = vmatprep.subr.mxu0 0.0
  %1219 = vmatpush1.msra.mxu0 0.0
  %1220 = vmatprep.subr.mxu0 0.0
  %1221 = vmatpush1.msra.mxu0 0.0
  %1222 = vmatprep.subr.mxu0 0.0
  %1223 = vmatpush1.msra.mxu0 0.0
  %1224 = vmatprep.subr.mxu0 0.0
  %1225 = vmatpush1.msra.mxu0 0.0
  %1226 = vmatprep.subr.mxu0 0.0
  %1227 = vmatpush1.msra.mxu0 0.0
  %1228 = vmatprep.mubr.f32.mxu0 0.0
  %1229 = vmatmul.mubr.f32.gmra.mrb[0].mxu0 %v1046
  %v1230 = vpop.f32.mrb[0].mxu0
  %v1231 = vadd.f32 %v1156, %v1230
  %v1232 = vpop.f32.mrb[0].mxu0
  %1233 = vmatprep.mubr.f32.mxu0 0.0
  %1234 = vmatmul.mubr.f32.gmra.mrb[0].mxu0 %v1047
  %v1235 = vpop.f32.mrb[0].mxu0
  %v1236 = vadd.f32 %v1161, %v1235
  %v1237 = vpop.f32.mrb[0].mxu0
  %1238 = vdwg.mxu0
  %s1239 = scalar_lea.vmem %s3, 256
  %v1240 = vld [vmem:[%s1239] sm:$0xff]
  %v1241 = vld [vmem:[%s1239 + $0x8] sm:$0xff]
  %v1242 = vld [vmem:[%s1239 + $0x10] sm:$0xff]
  %v1243 = vld [vmem:[%s1239 + $0x18] sm:$0xff]
  %v1244 = vld [vmem:[%s1239 + $0x20] sm:$0xff]
  %v1245 = vld [vmem:[%s1239 + $0x28] sm:$0xff]
  %v1246 = vld [vmem:[%s1239 + $0x30] sm:$0xff]
  %v1247 = vld [vmem:[%s1239 + $0x38] sm:$0xff]
  %v1248 = vld [vmem:[%s1239 + $0x40] sm:$0xff]
  %v1249 = vld [vmem:[%s1239 + $0x48] sm:$0xff]
  %v1250 = vld [vmem:[%s1239 + $0x50] sm:$0xff]
  %v1251 = vld [vmem:[%s1239 + $0x58] sm:$0xff]
  %v1252 = vld [vmem:[%s1239 + $0x60] sm:$0xff]
  %v1253 = vld [vmem:[%s1239 + $0x68] sm:$0xff]
  %v1254 = vld [vmem:[%s1239 + $0x70] sm:$0xff]
  %v1255 = vld [vmem:[%s1239 + $0x78] sm:$0xff]
  %1256 = vmatprep.subr.mxu0 0.0
  %1257 = vmatpush1.msra.mxu0 %v1240
  %1258 = vmatprep.subr.mxu0 0.0
  %1259 = vmatpush1.msra.mxu0 %v1241
  %1260 = vmatprep.subr.mxu0 0.0
  %1261 = vmatpush1.msra.mxu0 %v1242
  %1262 = vmatprep.subr.mxu0 0.0
  %1263 = vmatpush1.msra.mxu0 %v1243
  %1264 = vmatprep.subr.mxu0 0.0
  %1265 = vmatpush1.msra.mxu0 %v1244
  %1266 = vmatprep.subr.mxu0 0.0
  %1267 = vmatpush1.msra.mxu0 %v1245
  %1268 = vmatprep.subr.mxu0 0.0
  %1269 = vmatpush1.msra.mxu0 %v1246
  %1270 = vmatprep.subr.mxu0 0.0
  %1271 = vmatpush1.msra.mxu0 %v1247
  %1272 = vmatprep.subr.mxu0 0.0
  %1273 = vmatpush1.msra.mxu0 %v1248
  %1274 = vmatprep.subr.mxu0 0.0
  %1275 = vmatpush1.msra.mxu0 %v1249
  %1276 = vmatprep.subr.mxu0 0.0
  %1277 = vmatpush1.msra.mxu0 %v1250
  %1278 = vmatprep.subr.mxu0 0.0
  %1279 = vmatpush1.msra.mxu0 %v1251
  %1280 = vmatprep.subr.mxu0 0.0
  %1281 = vmatpush1.msra.mxu0 %v1252
  %1282 = vmatprep.subr.mxu0 0.0
  %1283 = vmatpush1.msra.mxu0 %v1253
  %1284 = vmatprep.subr.mxu0 0.0
  %1285 = vmatpush1.msra.mxu0 %v1254
  %1286 = vmatprep.subr.mxu0 0.0
  %1287 = vmatpush1.msra.mxu0 %v1255
  %1288 = vmatprep.subr.mxu0 0.0
  %1289 = vmatpush1.msra.mxu0 0.0
  %1290 = vmatprep.subr.mxu0 0.0
  %1291 = vmatpush1.msra.mxu0 0.0
  %1292 = vmatprep.subr.mxu0 0.0
  %1293 = vmatpush1.msra.mxu0 0.0
  %1294 = vmatprep.subr.mxu0 0.0
  %1295 = vmatpush1.msra.mxu0 0.0
  %1296 = vmatprep.subr.mxu0 0.0
  %1297 = vmatpush1.msra.mxu0 0.0
  %1298 = vmatprep.subr.mxu0 0.0
  %1299 = vmatpush1.msra.mxu0 0.0
  %1300 = vmatprep.subr.mxu0 0.0
  %1301 = vmatpush1.msra.mxu0 0.0
  %1302 = vmatprep.subr.mxu0 0.0
  %1303 = vmatpush1.msra.mxu0 0.0
  %1304 = vmatprep.subr.mxu0 0.0
  %1305 = vmatpush1.msra.mxu0 0.0
  %1306 = vmatprep.subr.mxu0 0.0
  %1307 = vmatpush1.msra.mxu0 0.0
  %1308 = vmatprep.subr.mxu0 0.0
  %1309 = vmatpush1.msra.mxu0 0.0
  %1310 = vmatprep.subr.mxu0 0.0
  %1311 = vmatpush1.msra.mxu0 0.0
  %1312 = vmatprep.subr.mxu0 0.0
  %1313 = vmatpush1.msra.mxu0 0.0
  %1314 = vmatprep.subr.mxu0 0.0
  %1315 = vmatpush1.msra.mxu0 0.0
  %1316 = vmatprep.subr.mxu0 0.0
  %1317 = vmatpush1.msra.mxu0 0.0
  %1318 = vmatprep.subr.mxu0 0.0
  %1319 = vmatpush1.msra.mxu0 0.0
  %1320 = vmatprep.mubr.f32.mxu0 0.0
  %1321 = vmatmul.mubr.f32.gmra.mrb[0].mxu0 %v1054
  %v1322 = vpop.f32.mrb[0].mxu0
  %v1323 = vadd.f32 0.0, %v1322
  %v1324 = vpop.f32.mrb[0].mxu0
  %1325 = vmatprep.mubr.f32.mxu0 0.0
  %1326 = vmatmul.mubr.f32.gmra.mrb[0].mxu0 %v1055
  %v1327 = vpop.f32.mrb[0].mxu0
  %v1328 = vadd.f32 0.0, %v1327
  %v1329 = vpop.f32.mrb[0].mxu0
  %1330 = vdwg.mxu0
  %v1331 = vadd.f32 %v1231, %v1323
  %v1332 = vadd.f32 %v1236, %v1328
  %v1333 = vld [vmem:[%s4] sm:$0x1]
  %v1335 = vlaneseq
  %v1336 = vshrl.u32 %v1335, 7
  %v1337 = vsub.s32 0, %v1336
  %v1338 = vrot.slane %v1333, %v1337
  %v1340 = vadd.f32 %v1331, %v1338
  %v1341 = vadd.f32 %v1332, %v1338
  %v1342 = vmax.f32 %v1340, 0.0
  %v1343 = vmax.f32 %v1341, 0.0
  %v1345 = vrot.slane %v1342, 1
  %v1347 = vmax.f32 %v1342, %v1345
  %v1349 = vrot.slane %v1343, 1
  %v1351 = vmax.f32 %v1343, %v1349
  %v1353 = vrot.slane %v1347, 1
  %v1355 = vrot.slane %v1347, 2
  %v1357 = vrot.slane %v1347, 3
  %v1360 = vrot.slane %v1351, 4
  %v1362 = vrot.slane %v1351, 5
  %v1364 = vrot.slane %v1351, 6
  %v1366 = vrot.slane %v1351, 7
  %v1368 = vsel %vm88, %v1347, %v1353
  %v1369 = vsel %vm984, %v1368, %v1355
  %v1370 = vsel %vm986, %v1369, %v1357
  %v1371 = vsel %vm988, %v1370, %v1360
  %v1372 = vsel %vm990, %v1371, %v1362
  %v1373 = vsel %vm992, %v1372, %v1364
  %v1374 = vsel %vm125, %v1373, %v1366
  %v1375 = vld [vmem:[%s5] sm:$0xff]
  %v1376 = vld [vmem:[%s5 + $0x8] sm:$0xff]
  %v1377 = vld [vmem:[%s5 + $0x10] sm:$0xff]
  %v1378 = vld [vmem:[%s5 + $0x18] sm:$0xff]
  %v1379 = vld [vmem:[%s6] sm:$0x1]
  %v1381 = vlaneseq
  %v1382 = vshrl.u32 %v1381, 7
  %v1383 = vsub.s32 0, %v1382
  %v1384 = vrot.slane %v1379, %v1383
  %vm1386 = vcmask 261120
  %v1388 = vsel %vm1386, %v1374, 0
  %1390 = vmatprep.subr.mxu0 0.0
  %1391 = vmatpush1.msra.mxu0 %v1375
  %1392 = vmatprep.subr.mxu0 0.0
  %1393 = vmatpush1.msra.mxu0 %v1376
  %1394 = vmatprep.subr.mxu0 0.0
  %1395 = vmatpush1.msra.mxu0 %v1377
  %1396 = vmatprep.subr.mxu0 0.0
  %1397 = vmatpush1.msra.mxu0 %v1378
  %1398 = vmatprep.subr.mxu0 0.0
  %1399 = vmatpush1.msra.mxu0 0.0
  %1400 = vmatprep.subr.mxu0 0.0
  %1401 = vmatpush1.msra.mxu0 0.0
  %1402 = vmatprep.subr.mxu0 0.0
  %1403 = vmatpush1.msra.mxu0 0.0
  %1404 = vmatprep.subr.mxu0 0.0
  %1405 = vmatpush1.msra.mxu0 0.0
  %1406 = vmatprep.subr.mxu0 0.0
  %1407 = vmatpush1.msra.mxu0 0.0
  %1408 = vmatprep.subr.mxu0 0.0
  %1409 = vmatpush1.msra.mxu0 0.0
  %1410 = vmatprep.subr.mxu0 0.0
  %1411 = vmatpush1.msra.mxu0 0.0
  %1412 = vmatprep.subr.mxu0 0.0
  %1413 = vmatpush1.msra.mxu0 0.0
  %1414 = vmatprep.subr.mxu0 0.0
  %1415 = vmatpush1.msra.mxu0 0.0
  %1416 = vmatprep.subr.mxu0 0.0
  %1417 = vmatpush1.msra.mxu0 0.0
  %1418 = vmatprep.subr.mxu0 0.0
  %1419 = vmatpush1.msra.mxu0 0.0
  %1420 = vmatprep.subr.mxu0 0.0
  %1421 = vmatpush1.msra.mxu0 0.0
  %1422 = vmatprep.subr.mxu0 0.0
  %1423 = vmatpush1.msra.mxu0 0.0
  %1424 = vmatprep.subr.mxu0 0.0
  %1425 = vmatpush1.msra.mxu0 0.0
  %1426 = vmatprep.subr.mxu0 0.0
  %1427 = vmatpush1.msra.mxu0 0.0
  %1428 = vmatprep.subr.mxu0 0.0
  %1429 = vmatpush1.msra.mxu0 0.0
  %1430 = vmatprep.subr.mxu0 0.0
  %1431 = vmatpush1.msra.mxu0 0.0
  %1432 = vmatprep.subr.mxu0 0.0
  %1433 = vmatpush1.msra.mxu0 0.0
  %1434 = vmatprep.subr.mxu0 0.0
  %1435 = vmatpush1.msra.mxu0 0.0
  %1436 = vmatprep.subr.mxu0 0.0
  %1437 = vmatpush1.msra.mxu0 0.0
  %1438 = vmatprep.subr.mxu0 0.0
  %1439 = vmatpush1.msra.mxu0 0.0
  %1440 = vmatprep.subr.mxu0 0.0
  %1441 = vmatpush1.msra.mxu0 0.0
  %1442 = vmatprep.subr.mxu0 0.0
  %1443 = vmatpush1.msra.mxu0 0.0
  %1444 = vmatprep.subr.mxu0 0.0
  %1445 = vmatpush1.msra.mxu0 0.0
  %1446 = vmatprep.subr.mxu0 0.0
  %1447 = vmatpush1.msra.mxu0 0.0
  %1448 = vmatprep.subr.mxu0 0.0
  %1449 = vmatpush1.msra.mxu0 0.0
  %1450 = vmatprep.subr.mxu0 0.0
  %1451 = vmatpush1.msra.mxu0 0.0
  %1452 = vmatprep.subr.mxu0 0.0
  %1453 = vmatpush1.msra.mxu0 0.0
  %1454 = vmatprep.mubr.f32.mxu0 0.0
  %1455 = vmatmul.mubr.f32.gmra.mrb[0].mxu0 %v1388
  %v1456 = vpop.f32.mrb[0].mxu0
  %v1457 = vadd.f32 %v1384, %v1456
  %v1458 = vpop.f32.mrb[0].mxu0
  %1459 = vdwg.mxu0
  %v1460 = vld [vmem:[%s7] sm:$0xff]
  %v1461 = vld [vmem:[%s7 + $0x8] sm:$0xff]
  %v1462 = vld [vmem:[%s7 + $0x10] sm:$0xff]
  %v1463 = vld [vmem:[%s7 + $0x18] sm:$0xff]
  %1465 = vrot.lane.b32.xlu0 %v1457, 96
  %v1466 = vpop.permute.xlu0 %1465
  %vm1467 = vcmask 130048
  %v1468 = vsel %vm1467, %v1457, 0
  %v1470 = vsel %vm1467, %v1466, 0
  %1472 = vmatprep.subr.mxu0 0.0
  %1473 = vmatpush1.xpose.msra.mxu0 %v1470
  %1474 = vmatprep.subr.mxu0 0.0
  %1475 = vmatpush1.xpose.msra.mxu0 0.0
  %1476 = vmatprep.subr.mxu0 0.0
  %1477 = vmatpush1.xpose.msra.mxu0 0.0
  %1478 = vmatprep.subr.mxu0 0.0
  %1479 = vmatpush1.xpose.msra.mxu0 0.0
  %1480 = vmatprep.subr.mxu0 0.0
  %1481 = vmatpush1.xpose.msra.mxu0 0.0
  %1482 = vmatprep.subr.mxu0 0.0
  %1483 = vmatpush1.xpose.msra.mxu0 0.0
  %1484 = vmatprep.subr.mxu0 0.0
  %1485 = vmatpush1.xpose.msra.mxu0 0.0
  %1486 = vmatprep.subr.mxu0 0.0
  %1487 = vmatpush1.xpose.msra.mxu0 0.0
  %1488 = vmatprep.subr.mxu0 0.0
  %1489 = vmatpush1.xpose.msra.mxu0 0.0
  %1490 = vmatprep.subr.mxu0 0.0
  %1491 = vmatpush1.xpose.msra.mxu0 0.0
  %1492 = vmatprep.subr.mxu0 0.0
  %1493 = vmatpush1.xpose.msra.mxu0 0.0
  %1494 = vmatprep.subr.mxu0 0.0
  %1495 = vmatpush1.xpose.msra.mxu0 0.0
  %1496 = vmatprep.subr.mxu0 0.0
  %1497 = vmatpush1.xpose.msra.mxu0 0.0
  %1498 = vmatprep.subr.mxu0 0.0
  %1499 = vmatpush1.xpose.msra.mxu0 0.0
  %1500 = vmatprep.subr.mxu0 0.0
  %1501 = vmatpush1.xpose.msra.mxu0 0.0
  %1502 = vmatprep.subr.mxu0 0.0
  %1503 = vmatpush1.xpose.msra.mxu0 0.0
  %1504 = vmatprep.subr.mxu0 0.0
  %1505 = vmatpush1.xpose.msra.mxu0 0.0
  %1506 = vmatprep.subr.mxu0 0.0
  %1507 = vmatpush1.xpose.msra.mxu0 0.0
  %1508 = vmatprep.subr.mxu0 0.0
  %1509 = vmatpush1.xpose.msra.mxu0 0.0
  %1510 = vmatprep.subr.mxu0 0.0
  %1511 = vmatpush1.xpose.msra.mxu0 0.0
  %1512 = vmatprep.subr.mxu0 0.0
  %1513 = vmatpush1.xpose.msra.mxu0 0.0
  %1514 = vmatprep.subr.mxu0 0.0
  %1515 = vmatpush1.xpose.msra.mxu0 0.0
  %1516 = vmatprep.subr.mxu0 0.0
  %1517 = vmatpush1.xpose.msra.mxu0 0.0
  %1518 = vmatprep.subr.mxu0 0.0
  %1519 = vmatpush1.xpose.msra.mxu0 0.0
  %1520 = vmatprep.subr.mxu0 0.0
  %1521 = vmatpush1.xpose.msra.mxu0 0.0
  %1522 = vmatprep.subr.mxu0 0.0
  %1523 = vmatpush1.xpose.msra.mxu0 0.0
  %1524 = vmatprep.subr.mxu0 0.0
  %1525 = vmatpush1.xpose.msra.mxu0 0.0
  %1526 = vmatprep.subr.mxu0 0.0
  %1527 = vmatpush1.xpose.msra.mxu0 0.0
  %1528 = vmatprep.subr.mxu0 0.0
  %1529 = vmatpush1.xpose.msra.mxu0 0.0
  %1530 = vmatprep.subr.mxu0 0.0
  %1531 = vmatpush1.xpose.msra.mxu0 0.0
  %1532 = vmatprep.subr.mxu0 0.0
  %1533 = vmatpush1.xpose.msra.mxu0 0.0
  %1534 = vmatprep.subr.mxu0 0.0
  %1535 = vmatpush1.xpose.msra.mxu0 0.0
  %1536 = vmatprep.mubr.f32.mxu0 0.0
  %1537 = vmatmul.mubr.f32.gmra.mrb[0].mxu0 %v1468
  %v1538 = vpop.f32.mrb[0].mxu0
  %v1539 = vadd.f32 0.0, %v1538
  %v1540 = vpop.f32.mrb[0].mxu0
  %1541 = vdwg.mxu0
  %v1542 = vmul.f32 %v1539, 0.25
  %vm1543 = vcmask 27648
  %v1544 = vsel %vm1543, %v1542, -inf
  %1545 = vmax.xlane.f32.xlu0 %v1544
  %v1546 = vpop.xlane.xlu0 %1545
  %v1547 = vsub.f32 %v1542, %v1546
  %v1548 = vmul.f32 %v1547, 1.442695
  %v1549 = vpow.pop %v1548
  %v1550 = vsel %vm1543, %v1549, 0.0
  %1551 = vadd.xlane.f32.xlu0 %v1550
  %v1552 = vpop.xlane.xlu0 %1551
  %v1553 = vrcp.pop %v1552
  %v1554 = vmul.f32 %v1549, %v1553
  %1555 = vrot.lane.b32.xlu0 %v1457, 64
  %v1556 = vpop.permute.xlu0 %1555
  %vm1557 = vcmask 31744
  %v1559 = vsel %vm1557, %v1554, 0
  %v1561 = vsel %vm988, %v1556, 0
  %1563 = vmatprep.subr.mxu0 0.0
  %1564 = vmatpush1.msra.mxu0 %v1561
  %1565 = vmatprep.subr.mxu0 0.0
  %1566 = vmatpush1.msra.mxu0 0.0
  %1567 = vmatprep.subr.mxu0 0.0
  %1568 = vmatpush1.msra.mxu0 0.0
  %1569 = vmatprep.subr.mxu0 0.0
  %1570 = vmatpush1.msra.mxu0 0.0
  %1571 = vmatprep.subr.mxu0 0.0
  %1572 = vmatpush1.msra.mxu0 0.0
  %1573 = vmatprep.subr.mxu0 0.0
  %1574 = vmatpush1.msra.mxu0 0.0
  %1575 = vmatprep.subr.mxu0 0.0
  %1576 = vmatpush1.msra.mxu0 0.0
  %1577 = vmatprep.subr.mxu0 0.0
  %1578 = vmatpush1.msra.mxu0 0.0
  %1579 = vmatprep.subr.mxu0 0.0
  %1580 = vmatpush1.msra.mxu0 0.0
  %1581 = vmatprep.subr.mxu0 0.0
  %1582 = vmatpush1.msra.mxu0 0.0
  %1583 = vmatprep.subr.mxu0 0.0
  %1584 = vmatpush1.msra.mxu0 0.0
  %1585 = vmatprep.subr.mxu0 0.0
  %1586 = vmatpush1.msra.mxu0 0.0
  %1587 = vmatprep.subr.mxu0 0.0
  %1588 = vmatpush1.msra.mxu0 0.0
  %1589 = vmatprep.subr.mxu0 0.0
  %1590 = vmatpush1.msra.mxu0 0.0
  %1591 = vmatprep.subr.mxu0 0.0
  %1592 = vmatpush1.msra.mxu0 0.0
  %1593 = vmatprep.subr.mxu0 0.0
  %1594 = vmatpush1.msra.mxu0 0.0
  %1595 = vmatprep.subr.mxu0 0.0
  %1596 = vmatpush1.msra.mxu0 0.0
  %1597 = vmatprep.subr.mxu0 0.0
  %1598 = vmatpush1.msra.mxu0 0.0
  %1599 = vmatprep.subr.mxu0 0.0
  %1600 = vmatpush1.msra.mxu0 0.0
  %1601 = vmatprep.subr.mxu0 0.0
  %1602 = vmatpush1.msra.mxu0 0.0
  %1603 = vmatprep.subr.mxu0 0.0
  %1604 = vmatpush1.msra.mxu0 0.0
  %1605 = vmatprep.subr.mxu0 0.0
  %1606 = vmatpush1.msra.mxu0 0.0
  %1607 = vmatprep.subr.mxu0 0.0
  %1608 = vmatpush1.msra.mxu0 0.0
  %1609 = vmatprep.subr.mxu0 0.0
  %1610 = vmatpush1.msra.mxu0 0.0
  %1611 = vmatprep.subr.mxu0 0.0
  %1612 = vmatpush1.msra.mxu0 0.0
  %1613 = vmatprep.subr.mxu0 0.0
  %1614 = vmatpush1.msra.mxu0 0.0
  %1615 = vmatprep.subr.mxu0 0.0
  %1616 = vmatpush1.msra.mxu0 0.0
  %1617 = vmatprep.subr.mxu0 0.0
  %1618 = vmatpush1.msra.mxu0 0.0
  %1619 = vmatprep.subr.mxu0 0.0
  %1620 = vmatpush1.msra.mxu0 0.0
  %1621 = vmatprep.subr.mxu0 0.0
  %1622 = vmatpush1.msra.mxu0 0.0
  %1623 = vmatprep.subr.mxu0 0.0
  %1624 = vmatpush1.msra.mxu0 0.0
  %1625 = vmatprep.subr.mxu0 0.0
  %1626 = vmatpush1.msra.mxu0 0.0
  %1627 = vmatprep.mubr.f32.mxu0 0.0
  %1628 = vmatmul.mubr.f32.gmra.mrb[0].mxu0 %v1559
  %v1629 = vpop.f32.mrb[0].mxu0
  %v1630 = vadd.f32 0.0, %v1629
  %v1631 = vpop.f32.mrb[0].mxu0
  %1632 = vdwg.mxu0
  %1633 = vrot.lane.b32.xlu0 %v1457, 112
  %v1634 = vpop.permute.xlu0 %1633
  %1635 = vrot.lane.b32.xlu0 %v1457, 80
  %v1636 = vpop.permute.xlu0 %1635
  %v1637 = vsel %vm1467, %v1634, 0
  %v1639 = vsel %vm1467, %v1636, 0
  %1641 = vmatprep.subr.mxu0 0.0
  %1642 = vmatpush1.xpose.msra.mxu0 %v1639
  %1643 = vmatprep.subr.mxu0 0.0
  %1644 = vmatpush1.xpose.msra.mxu0 0.0
  %1645 = vmatprep.subr.mxu0 0.0
  %1646 = vmatpush1.xpose.msra.mxu0 0.0
  %1647 = vmatprep.subr.mxu0 0.0
  %1648 = vmatpush1.xpose.msra.mxu0 0.0
  %1649 = vmatprep.subr.mxu0 0.0
  %1650 = vmatpush1.xpose.msra.mxu0 0.0
  %1651 = vmatprep.subr.mxu0 0.0
  %1652 = vmatpush1.xpose.msra.mxu0 0.0
  %1653 = vmatprep.subr.mxu0 0.0
  %1654 = vmatpush1.xpose.msra.mxu0 0.0
  %1655 = vmatprep.subr.mxu0 0.0
  %1656 = vmatpush1.xpose.msra.mxu0 0.0
  %1657 = vmatprep.subr.mxu0 0.0
  %1658 = vmatpush1.xpose.msra.mxu0 0.0
  %1659 = vmatprep.subr.mxu0 0.0
  %1660 = vmatpush1.xpose.msra.mxu0 0.0
  %1661 = vmatprep.subr.mxu0 0.0
  %1662 = vmatpush1.xpose.msra.mxu0 0.0
  %1663 = vmatprep.subr.mxu0 0.0
  %1664 = vmatpush1.xpose.msra.mxu0 0.0
  %1665 = vmatprep.subr.mxu0 0.0
  %1666 = vmatpush1.xpose.msra.mxu0 0.0
  %1667 = vmatprep.subr.mxu0 0.0
  %1668 = vmatpush1.xpose.msra.mxu0 0.0
  %1669 = vmatprep.subr.mxu0 0.0
  %1670 = vmatpush1.xpose.msra.mxu0 0.0
  %1671 = vmatprep.subr.mxu0 0.0
  %1672 = vmatpush1.xpose.msra.mxu0 0.0
  %1673 = vmatprep.subr.mxu0 0.0
  %1674 = vmatpush1.xpose.msra.mxu0 0.0
  %1675 = vmatprep.subr.mxu0 0.0
  %1676 = vmatpush1.xpose.msra.mxu0 0.0
  %1677 = vmatprep.subr.mxu0 0.0
  %1678 = vmatpush1.xpose.msra.mxu0 0.0
  %1679 = vmatprep.subr.mxu0 0.0
  %1680 = vmatpush1.xpose.msra.mxu0 0.0
  %1681 = vmatprep.subr.mxu0 0.0
  %1682 = vmatpush1.xpose.msra.mxu0 0.0
  %1683 = vmatprep.subr.mxu0 0.0
  %1684 = vmatpush1.xpose.msra.mxu0 0.0
  %1685 = vmatprep.subr.mxu0 0.0
  %1686 = vmatpush1.xpose.msra.mxu0 0.0
  %1687 = vmatprep.subr.mxu0 0.0
  %1688 = vmatpush1.xpose.msra.mxu0 0.0
  %1689 = vmatprep.subr.mxu0 0.0
  %1690 = vmatpush1.xpose.msra.mxu0 0.0
  %1691 = vmatprep.subr.mxu0 0.0
  %1692 = vmatpush1.xpose.msra.mxu0 0.0
  %1693 = vmatprep.subr.mxu0 0.0
  %1694 = vmatpush1.xpose.msra.mxu0 0.0
  %1695 = vmatprep.subr.mxu0 0.0
  %1696 = vmatpush1.xpose.msra.mxu0 0.0
  %1697 = vmatprep.subr.mxu0 0.0
  %1698 = vmatpush1.xpose.msra.mxu0 0.0
  %1699 = vmatprep.subr.mxu0 0.0
  %1700 = vmatpush1.xpose.msra.mxu0 0.0
  %1701 = vmatprep.subr.mxu0 0.0
  %1702 = vmatpush1.xpose.msra.mxu0 0.0
  %1703 = vmatprep.subr.mxu0 0.0
  %1704 = vmatpush1.xpose.msra.mxu0 0.0
  %1705 = vmatprep.mubr.f32.mxu0 0.0
  %1706 = vmatmul.mubr.f32.gmra.mrb[0].mxu0 %v1637
  %v1707 = vpop.f32.mrb[0].mxu0
  %v1708 = vadd.f32 0.0, %v1707
  %v1709 = vpop.f32.mrb[0].mxu0
  %1710 = vdwg.mxu0
  %v1711 = vmul.f32 %v1708, 0.25
  %v1712 = vsel %vm1543, %v1711, -inf
  %1713 = vmax.xlane.f32.xlu0 %v1712
  %v1714 = vpop.xlane.xlu0 %1713
  %v1715 = vsub.f32 %v1711, %v1714
  %v1716 = vmul.f32 %v1715, 1.442695
  %v1717 = vpow.pop %v1716
  %v1718 = vsel %vm1543, %v1717, 0.0
  %1719 = vadd.xlane.f32.xlu0 %v1718
  %v1720 = vpop.xlane.xlu0 %1719
  %v1721 = vrcp.pop %v1720
  %v1722 = vmul.f32 %v1717, %v1721
  %1723 = vrot.lane.b32.xlu0 %v1457, 48
  %v1724 = vpop.permute.xlu0 %1723
  %v1726 = vsel %vm1557, %v1722, 0
  %v1728 = vsel %vm988, %v1724, 0
  %1730 = vmatprep.subr.mxu0 0.0
  %1731 = vmatpush1.msra.mxu0 %v1728
  %1732 = vmatprep.subr.mxu0 0.0
  %1733 = vmatpush1.msra.mxu0 0.0
  %1734 = vmatprep.subr.mxu0 0.0
  %1735 = vmatpush1.msra.mxu0 0.0
  %1736 = vmatprep.subr.mxu0 0.0
  %1737 = vmatpush1.msra.mxu0 0.0
  %1738 = vmatprep.subr.mxu0 0.0
  %1739 = vmatpush1.msra.mxu0 0.0
  %1740 = vmatprep.subr.mxu0 0.0
  %1741 = vmatpush1.msra.mxu0 0.0
  %1742 = vmatprep.subr.mxu0 0.0
  %1743 = vmatpush1.msra.mxu0 0.0
  %1744 = vmatprep.subr.mxu0 0.0
  %1745 = vmatpush1.msra.mxu0 0.0
  %1746 = vmatprep.subr.mxu0 0.0
  %1747 = vmatpush1.msra.mxu0 0.0
  %1748 = vmatprep.subr.mxu0 0.0
  %1749 = vmatpush1.msra.mxu0 0.0
  %1750 = vmatprep.subr.mxu0 0.0
  %1751 = vmatpush1.msra.mxu0 0.0
  %1752 = vmatprep.subr.mxu0 0.0
  %1753 = vmatpush1.msra.mxu0 0.0
  %1754 = vmatprep.subr.mxu0 0.0
  %1755 = vmatpush1.msra.mxu0 0.0
  %1756 = vmatprep.subr.mxu0 0.0
  %1757 = vmatpush1.msra.mxu0 0.0
  %1758 = vmatprep.subr.mxu0 0.0
  %1759 = vmatpush1.msra.mxu0 0.0
  %1760 = vmatprep.subr.mxu0 0.0
  %1761 = vmatpush1.msra.mxu0 0.0
  %1762 = vmatprep.subr.mxu0 0.0
  %1763 = vmatpush1.msra.mxu0 0.0
  %1764 = vmatprep.subr.mxu0 0.0
  %1765 = vmatpush1.msra.mxu0 0.0
  %1766 = vmatprep.subr.mxu0 0.0
  %1767 = vmatpush1.msra.mxu0 0.0
  %1768 = vmatprep.subr.mxu0 0.0
  %1769 = vmatpush1.msra.mxu0 0.0
  %1770 = vmatprep.subr.mxu0 0.0
  %1771 = vmatpush1.msra.mxu0 0.0
  %1772 = vmatprep.subr.mxu0 0.0
  %1773 = vmatpush1.msra.mxu0 0.0
  %1774 = vmatprep.subr.mxu0 0.0
  %1775 = vmatpush1.msra.mxu0 0.0
  %1776 = vmatprep.subr.mxu0 0.0
  %1777 = vmatpush1.msra.mxu0 0.0
  %1778 = vmatprep.subr.mxu0 0.0
  %1779 = vmatpush1.msra.mxu0 0.0
  %1780 = vmatprep.subr.mxu0 0.0
  %1781 = vmatpush1.msra.mxu0 0.0
  %1782 = vmatprep.subr.mxu0 0.0
  %1783 = vmatpush1.msra.mxu0 0.0
  %1784 = vmatprep.subr.mxu0 0.0
  %1785 = vmatpush1.msra.mxu0 0.0
  %1786 = vmatprep.subr.mxu0 0.0
  %1787 = vmatpush1.msra.mxu0 0.0
  %1788 = vmatprep.subr.mxu0 0.0
  %1789 = vmatpush1.msra.mxu0 0.0
  %1790 = vmatprep.subr.mxu0 0.0
  %1791 = vmatpush1.msra.mxu0 0.0
  %1792 = vmatprep.subr.mxu0 0.0
  %1793 = vmatpush1.msra.mxu0 0.0
  %1794 = vmatprep.mubr.f32.mxu0 0.0
  %1795 = vmatmul.mubr.f32.gmra.mrb[0].mxu0 %v1726
  %v1796 = vpop.f32.mrb[0].mxu0
  %v1797 = vadd.f32 0.0, %v1796
  %v1798 = vpop.f32.mrb[0].mxu0
  %1799 = vdwg.mxu0
  %v1801 = vsel %vm1467, %v1797, 0
  %1803 = vmatprep.subr.mxu0 0.0
  %1804 = vmatpush1.msra.mxu0 %v1462
  %1805 = vmatprep.subr.mxu0 0.0
  %1806 = vmatpush1.msra.mxu0 %v1463
  %1807 = vmatprep.subr.mxu0 0.0
  %1808 = vmatpush1.msra.mxu0 0.0
  %1809 = vmatprep.subr.mxu0 0.0
  %1810 = vmatpush1.msra.mxu0 0.0
  %1811 = vmatprep.subr.mxu0 0.0
  %1812 = vmatpush1.msra.mxu0 0.0
  %1813 = vmatprep.subr.mxu0 0.0
  %1814 = vmatpush1.msra.mxu0 0.0
  %1815 = vmatprep.subr.mxu0 0.0
  %1816 = vmatpush1.msra.mxu0 0.0
  %1817 = vmatprep.subr.mxu0 0.0
  %1818 = vmatpush1.msra.mxu0 0.0
  %1819 = vmatprep.subr.mxu0 0.0
  %1820 = vmatpush1.msra.mxu0 0.0
  %1821 = vmatprep.subr.mxu0 0.0
  %1822 = vmatpush1.msra.mxu0 0.0
  %1823 = vmatprep.subr.mxu0 0.0
  %1824 = vmatpush1.msra.mxu0 0.0
  %1825 = vmatprep.subr.mxu0 0.0
  %1826 = vmatpush1.msra.mxu0 0.0
  %1827 = vmatprep.subr.mxu0 0.0
  %1828 = vmatpush1.msra.mxu0 0.0
  %1829 = vmatprep.subr.mxu0 0.0
  %1830 = vmatpush1.msra.mxu0 0.0
  %1831 = vmatprep.subr.mxu0 0.0
  %1832 = vmatpush1.msra.mxu0 0.0
  %1833 = vmatprep.subr.mxu0 0.0
  %1834 = vmatpush1.msra.mxu0 0.0
  %1835 = vmatprep.subr.mxu0 0.0
  %1836 = vmatpush1.msra.mxu0 0.0
  %1837 = vmatprep.subr.mxu0 0.0
  %1838 = vmatpush1.msra.mxu0 0.0
  %1839 = vmatprep.subr.mxu0 0.0
  %1840 = vmatpush1.msra.mxu0 0.0
  %1841 = vmatprep.subr.mxu0 0.0
  %1842 = vmatpush1.msra.mxu0 0.0
  %1843 = vmatprep.subr.mxu0 0.0
  %1844 = vmatpush1.msra.mxu0 0.0
  %1845 = vmatprep.subr.mxu0 0.0
  %1846 = vmatpush1.msra.mxu0 0.0
  %1847 = vmatprep.subr.mxu0 0.0
  %1848 = vmatpush1.msra.mxu0 0.0
  %1849 = vmatprep.subr.mxu0 0.0
  %1850 = vmatpush1.msra.mxu0 0.0
  %1851 = vmatprep.subr.mxu0 0.0
  %1852 = vmatpush1.msra.mxu0 0.0
  %1853 = vmatprep.subr.mxu0 0.0
  %1854 = vmatpush1.msra.mxu0 0.0
  %1855 = vmatprep.subr.mxu0 0.0
  %1856 = vmatpush1.msra.mxu0 0.0
  %1857 = vmatprep.subr.mxu0 0.0
  %1858 = vmatpush1.msra.mxu0 0.0
  %1859 = vmatprep.subr.mxu0 0.0
  %1860 = vmatpush1.msra.mxu0 0.0
  %1861 = vmatprep.subr.mxu0 0.0
  %1862 = vmatpush1.msra.mxu0 0.0
  %1863 = vmatprep.subr.mxu0 0.0
  %1864 = vmatpush1.msra.mxu0 0.0
  %1865 = vmatprep.subr.mxu0 0.0
  %1866 = vmatpush1.msra.mxu0 0.0
  %1867 = vmatprep.mubr.f32.mxu0 0.0
  %1868 = vmatmul.mubr.f32.gmra.mrb[0].mxu0 %v1801
  %v1869 = vpop.f32.mrb[0].mxu0
  %v1870 = vadd.f32 0.0, %v1869
  %v1871 = vpop.f32.mrb[0].mxu0
  %1872 = vdwg.mxu0
  %v1874 = vsel %vm1467, %v1630, 0
  %1876 = vmatprep.subr.mxu0 0.0
  %1877 = vmatpush1.msra.mxu0 %v1460
  %1878 = vmatprep.subr.mxu0 0.0
  %1879 = vmatpush1.msra.mxu0 %v1461
  %1880 = vmatprep.subr.mxu0 0.0
  %1881 = vmatpush1.msra.mxu0 0.0
  %1882 = vmatprep.subr.mxu0 0.0
  %1883 = vmatpush1.msra.mxu0 0.0
  %1884 = vmatprep.subr.mxu0 0.0
  %1885 = vmatpush1.msra.mxu0 0.0
  %1886 = vmatprep.subr.mxu0 0.0
  %1887 = vmatpush1.msra.mxu0 0.0
  %1888 = vmatprep.subr.mxu0 0.0
  %1889 = vmatpush1.msra.mxu0 0.0
  %1890 = vmatprep.subr.mxu0 0.0
  %1891 = vmatpush1.msra.mxu0 0.0
  %1892 = vmatprep.subr.mxu0 0.0
  %1893 = vmatpush1.msra.mxu0 0.0
  %1894 = vmatprep.subr.mxu0 0.0
  %1895 = vmatpush1.msra.mxu0 0.0
  %1896 = vmatprep.subr.mxu0 0.0
  %1897 = vmatpush1.msra.mxu0 0.0
  %1898 = vmatprep.subr.mxu0 0.0
  %1899 = vmatpush1.msra.mxu0 0.0
  %1900 = vmatprep.subr.mxu0 0.0
  %1901 = vmatpush1.msra.mxu0 0.0
  %1902 = vmatprep.subr.mxu0 0.0
  %1903 = vmatpush1.msra.mxu0 0.0
  %1904 = vmatprep.subr.mxu0 0.0
  %1905 = vmatpush1.msra.mxu0 0.0
  %1906 = vmatprep.subr.mxu0 0.0
  %1907 = vmatpush1.msra.mxu0 0.0
  %1908 = vmatprep.subr.mxu0 0.0
  %1909 = vmatpush1.msra.mxu0 0.0
  %1910 = vmatprep.subr.mxu0 0.0
  %1911 = vmatpush1.msra.mxu0 0.0
  %1912 = vmatprep.subr.mxu0 0.0
  %1913 = vmatpush1.msra.mxu0 0.0
  %1914 = vmatprep.subr.mxu0 0.0
  %1915 = vmatpush1.msra.mxu0 0.0
  %1916 = vmatprep.subr.mxu0 0.0
  %1917 = vmatpush1.msra.mxu0 0.0
  %1918 = vmatprep.subr.mxu0 0.0
  %1919 = vmatpush1.msra.mxu0 0.0
  %1920 = vmatprep.subr.mxu0 0.0
  %1921 = vmatpush1.msra.mxu0 0.0
  %1922 = vmatprep.subr.mxu0 0.0
  %1923 = vmatpush1.msra.mxu0 0.0
  %1924 = vmatprep.subr.mxu0 0.0
  %1925 = vmatpush1.msra.mxu0 0.0
  %1926 = vmatprep.subr.mxu0 0.0
  %1927 = vmatpush1.msra.mxu0 0.0
  %1928 = vmatprep.subr.mxu0 0.0
  %1929 = vmatpush1.msra.mxu0 0.0
  %1930 = vmatprep.subr.mxu0 0.0
  %1931 = vmatpush1.msra.mxu0 0.0
  %1932 = vmatprep.subr.mxu0 0.0
  %1933 = vmatpush1.msra.mxu0 0.0
  %1934 = vmatprep.subr.mxu0 0.0
  %1935 = vmatpush1.msra.mxu0 0.0
  %1936 = vmatprep.subr.mxu0 0.0
  %1937 = vmatpush1.msra.mxu0 0.0
  %1938 = vmatprep.subr.mxu0 0.0
  %1939 = vmatpush1.msra.mxu0 0.0
  %1940 = vmatprep.mubr.f32.mxu0 0.0
  %1941 = vmatmul.mubr.f32.gmra.mrb[0].mxu0 %v1874
  %v1942 = vpop.f32.mrb[0].mxu0
  %v1943 = vadd.f32 %v1870, %v1942
  %v1944 = vpop.f32.mrb[0].mxu0
  %1945 = vdwg.mxu0
  %v1946 = vrot.slane %v1457, 4
  %1947 = vrot.lane.b32.xlu0 %v1946, 96
  %v1948 = vpop.permute.xlu0 %1947
  %v1949 = vsel %vm1467, %v1946, 0
  %v1951 = vsel %vm1467, %v1948, 0
  %1953 = vmatprep.subr.mxu0 0.0
  %1954 = vmatpush1.xpose.msra.mxu0 %v1951
  %1955 = vmatprep.subr.mxu0 0.0
  %1956 = vmatpush1.xpose.msra.mxu0 0.0
  %1957 = vmatprep.subr.mxu0 0.0
  %1958 = vmatpush1.xpose.msra.mxu0 0.0
  %1959 = vmatprep.subr.mxu0 0.0
  %1960 = vmatpush1.xpose.msra.mxu0 0.0
  %1961 = vmatprep.subr.mxu0 0.0
  %1962 = vmatpush1.xpose.msra.mxu0 0.0
  %1963 = vmatprep.subr.mxu0 0.0
  %1964 = vmatpush1.xpose.msra.mxu0 0.0
  %1965 = vmatprep.subr.mxu0 0.0
  %1966 = vmatpush1.xpose.msra.mxu0 0.0
  %1967 = vmatprep.subr.mxu0 0.0
  %1968 = vmatpush1.xpose.msra.mxu0 0.0
  %1969 = vmatprep.subr.mxu0 0.0
  %1970 = vmatpush1.xpose.msra.mxu0 0.0
  %1971 = vmatprep.subr.mxu0 0.0
  %1972 = vmatpush1.xpose.msra.mxu0 0.0
  %1973 = vmatprep.subr.mxu0 0.0
  %1974 = vmatpush1.xpose.msra.mxu0 0.0
  %1975 = vmatprep.subr.mxu0 0.0
  %1976 = vmatpush1.xpose.msra.mxu0 0.0
  %1977 = vmatprep.subr.mxu0 0.0
  %1978 = vmatpush1.xpose.msra.mxu0 0.0
  %1979 = vmatprep.subr.mxu0 0.0
  %1980 = vmatpush1.xpose.msra.mxu0 0.0
  %1981 = vmatprep.subr.mxu0 0.0
  %1982 = vmatpush1.xpose.msra.mxu0 0.0
  %1983 = vmatprep.subr.mxu0 0.0
  %1984 = vmatpush1.xpose.msra.mxu0 0.0
  %1985 = vmatprep.subr.mxu0 0.0
  %1986 = vmatpush1.xpose.msra.mxu0 0.0
  %1987 = vmatprep.subr.mxu0 0.0
  %1988 = vmatpush1.xpose.msra.mxu0 0.0
  %1989 = vmatprep.subr.mxu0 0.0
  %1990 = vmatpush1.xpose.msra.mxu0 0.0
  %1991 = vmatprep.subr.mxu0 0.0
  %1992 = vmatpush1.xpose.msra.mxu0 0.0
  %1993 = vmatprep.subr.mxu0 0.0
  %1994 = vmatpush1.xpose.msra.mxu0 0.0
  %1995 = vmatprep.subr.mxu0 0.0
  %1996 = vmatpush1.xpose.msra.mxu0 0.0
  %1997 = vmatprep.subr.mxu0 0.0
  %1998 = vmatpush1.xpose.msra.mxu0 0.0
  %1999 = vmatprep.subr.mxu0 0.0
  %2000 = vmatpush1.xpose.msra.mxu0 0.0
  %2001 = vmatprep.subr.mxu0 0.0
  %2002 = vmatpush1.xpose.msra.mxu0 0.0
  %2003 = vmatprep.subr.mxu0 0.0
  %2004 = vmatpush1.xpose.msra.mxu0 0.0
  %2005 = vmatprep.subr.mxu0 0.0
  %2006 = vmatpush1.xpose.msra.mxu0 0.0
  %2007 = vmatprep.subr.mxu0 0.0
  %2008 = vmatpush1.xpose.msra.mxu0 0.0
  %2009 = vmatprep.subr.mxu0 0.0
  %2010 = vmatpush1.xpose.msra.mxu0 0.0
  %2011 = vmatprep.subr.mxu0 0.0
  %2012 = vmatpush1.xpose.msra.mxu0 0.0
  %2013 = vmatprep.subr.mxu0 0.0
  %2014 = vmatpush1.xpose.msra.mxu0 0.0
  %2015 = vmatprep.subr.mxu0 0.0
  %2016 = vmatpush1.xpose.msra.mxu0 0.0
  %2017 = vmatprep.mubr.f32.mxu0 0.0
  %2018 = vmatmul.mubr.f32.gmra.mrb[0].mxu0 %v1949
  %v2019 = vpop.f32.mrb[0].mxu0
  %v2020 = vadd.f32 0.0, %v2019
  %v2021 = vpop.f32.mrb[0].mxu0
  %2022 = vdwg.mxu0
  %v2023 = vmul.f32 %v2020, 0.25
  %v2024 = vsel %vm1543, %v2023, -inf
  %2025 = vmax.xlane.f32.xlu0 %v2024
  %v2026 = vpop.xlane.xlu0 %2025
  %v2027 = vsub.f32 %v2023, %v2026
  %v2028 = vmul.f32 %v2027, 1.442695
  %v2029 = vpow.pop %v2028
  %v2030 = vsel %vm1543, %v2029, 0.0
  %2031 = vadd.xlane.f32.xlu0 %v2030
  %v2032 = vpop.xlane.xlu0 %2031
  %v2033 = vrcp.pop %v2032
  %v2034 = vmul.f32 %v2029, %v2033
  %2035 = vrot.lane.b32.xlu0 %v1946, 64
  %v2036 = vpop.permute.xlu0 %2035
  %v2038 = vsel %vm1557, %v2034, 0
  %v2040 = vsel %vm988, %v2036, 0
  %2042 = vmatprep.subr.mxu0 0.0
  %2043 = vmatpush1.msra.mxu0 %v2040
  %2044 = vmatprep.subr.mxu0 0.0
  %2045 = vmatpush1.msra.mxu0 0.0
  %2046 = vmatprep.subr.mxu0 0.0
  %2047 = vmatpush1.msra.mxu0 0.0
  %2048 = vmatprep.subr.mxu0 0.0
  %2049 = vmatpush1.msra.mxu0 0.0
  %2050 = vmatprep.subr.mxu0 0.0
  %2051 = vmatpush1.msra.mxu0 0.0
  %2052 = vmatprep.subr.mxu0 0.0
  %2053 = vmatpush1.msra.mxu0 0.0
  %2054 = vmatprep.subr.mxu0 0.0
  %2055 = vmatpush1.msra.mxu0 0.0
  %2056 = vmatprep.subr.mxu0 0.0
  %2057 = vmatpush1.msra.mxu0 0.0
  %2058 = vmatprep.subr.mxu0 0.0
  %2059 = vmatpush1.msra.mxu0 0.0
  %2060 = vmatprep.subr.mxu0 0.0
  %2061 = vmatpush1.msra.mxu0 0.0
  %2062 = vmatprep.subr.mxu0 0.0
  %2063 = vmatpush1.msra.mxu0 0.0
  %2064 = vmatprep.subr.mxu0 0.0
  %2065 = vmatpush1.msra.mxu0 0.0
  %2066 = vmatprep.subr.mxu0 0.0
  %2067 = vmatpush1.msra.mxu0 0.0
  %2068 = vmatprep.subr.mxu0 0.0
  %2069 = vmatpush1.msra.mxu0 0.0
  %2070 = vmatprep.subr.mxu0 0.0
  %2071 = vmatpush1.msra.mxu0 0.0
  %2072 = vmatprep.subr.mxu0 0.0
  %2073 = vmatpush1.msra.mxu0 0.0
  %2074 = vmatprep.subr.mxu0 0.0
  %2075 = vmatpush1.msra.mxu0 0.0
  %2076 = vmatprep.subr.mxu0 0.0
  %2077 = vmatpush1.msra.mxu0 0.0
  %2078 = vmatprep.subr.mxu0 0.0
  %2079 = vmatpush1.msra.mxu0 0.0
  %2080 = vmatprep.subr.mxu0 0.0
  %2081 = vmatpush1.msra.mxu0 0.0
  %2082 = vmatprep.subr.mxu0 0.0
  %2083 = vmatpush1.msra.mxu0 0.0
  %2084 = vmatprep.subr.mxu0 0.0
  %2085 = vmatpush1.msra.mxu0 0.0
  %2086 = vmatprep.subr.mxu0 0.0
  %2087 = vmatpush1.msra.mxu0 0.0
  %2088 = vmatprep.subr.mxu0 0.0
  %2089 = vmatpush1.msra.mxu0 0.0
  %2090 = vmatprep.subr.mxu0 0.0
  %2091 = vmatpush1.msra.mxu0 0.0
  %2092 = vmatprep.subr.mxu0 0.0
  %2093 = vmatpush1.msra.mxu0 0.0
  %2094 = vmatprep.subr.mxu0 0.0
  %2095 = vmatpush1.msra.mxu0 0.0
  %2096 = vmatprep.subr.mxu0 0.0
  %2097 = vmatpush1.msra.mxu0 0.0
  %2098 = vmatprep.subr.mxu0 0.0
  %2099 = vmatpush1.msra.mxu0 0.0
  %2100 = vmatprep.subr.mxu0 0.0
  %2101 = vmatpush1.msra.mxu0 0.0
  %2102 = vmatprep.subr.mxu0 0.0
  %2103 = vmatpush1.msra.mxu0 0.0
  %2104 = vmatprep.subr.mxu0 0.0
  %2105 = vmatpush1.msra.mxu0 0.0
  %2106 = vmatprep.mubr.f32.mxu0 0.0
  %2107 = vmatmul.mubr.f32.gmra.mrb[0].mxu0 %v2038
  %v2108 = vpop.f32.mrb[0].mxu0
  %v2109 = vadd.f32 0.0, %v2108
  %v2110 = vpop.f32.mrb[0].mxu0
  %2111 = vdwg.mxu0
  %2112 = vrot.lane.b32.xlu0 %v1946, 112
  %v2113 = vpop.permute.xlu0 %2112
  %2114 = vrot.lane.b32.xlu0 %v1946, 80
  %v2115 = vpop.permute.xlu0 %2114
  %v2116 = vsel %vm1467, %v2113, 0
  %v2118 = vsel %vm1467, %v2115, 0
  %2120 = vmatprep.subr.mxu0 0.0
  %2121 = vmatpush1.xpose.msra.mxu0 %v2118
  %2122 = vmatprep.subr.mxu0 0.0
  %2123 = vmatpush1.xpose.msra.mxu0 0.0
  %2124 = vmatprep.subr.mxu0 0.0
  %2125 = vmatpush1.xpose.msra.mxu0 0.0
  %2126 = vmatprep.subr.mxu0 0.0
  %2127 = vmatpush1.xpose.msra.mxu0 0.0
  %2128 = vmatprep.subr.mxu0 0.0
  %2129 = vmatpush1.xpose.msra.mxu0 0.0
  %2130 = vmatprep.subr.mxu0 0.0
  %2131 = vmatpush1.xpose.msra.mxu0 0.0
  %2132 = vmatprep.subr.mxu0 0.0
  %2133 = vmatpush1.xpose.msra.mxu0 0.0
  %2134 = vmatprep.subr.mxu0 0.0
  %2135 = vmatpush1.xpose.msra.mxu0 0.0
  %2136 = vmatprep.subr.mxu0 0.0
  %2137 = vmatpush1.xpose.msra.mxu0 0.0
  %2138 = vmatprep.subr.mxu0 0.0
  %2139 = vmatpush1.xpose.msra.mxu0 0.0
  %2140 = vmatprep.subr.mxu0 0.0
  %2141 = vmatpush1.xpose.msra.mxu0 0.0
  %2142 = vmatprep.subr.mxu0 0.0
  %2143 = vmatpush1.xpose.msra.mxu0 0.0
  %2144 = vmatprep.subr.mxu0 0.0
  %2145 = vmatpush1.xpose.msra.mxu0 0.0
  %2146 = vmatprep.subr.mxu0 0.0
  %2147 = vmatpush1.xpose.msra.mxu0 0.0
  %2148 = vmatprep.subr.mxu0 0.0
  %2149 = vmatpush1.xpose.msra.mxu0 0.0
  %2150 = vmatprep.subr.mxu0 0.0
  %2151 = vmatpush1.xpose.msra.mxu0 0.0
  %2152 = vmatprep.subr.mxu0 0.0
  %2153 = vmatpush1.xpose.msra.mxu0 0.0
  %2154 = vmatprep.subr.mxu0 0.0
  %2155 = vmatpush1.xpose.msra.mxu0 0.0
  %2156 = vmatprep.subr.mxu0 0.0
  %2157 = vmatpush1.xpose.msra.mxu0 0.0
  %2158 = vmatprep.subr.mxu0 0.0
  %2159 = vmatpush1.xpose.msra.mxu0 0.0
  %2160 = vmatprep.subr.mxu0 0.0
  %2161 = vmatpush1.xpose.msra.mxu0 0.0
  %2162 = vmatprep.subr.mxu0 0.0
  %2163 = vmatpush1.xpose.msra.mxu0 0.0
  %2164 = vmatprep.subr.mxu0 0.0
  %2165 = vmatpush1.xpose.msra.mxu0 0.0
  %2166 = vmatprep.subr.mxu0 0.0
  %2167 = vmatpush1.xpose.msra.mxu0 0.0
  %2168 = vmatprep.subr.mxu0 0.0
  %2169 = vmatpush1.xpose.msra.mxu0 0.0
  %2170 = vmatprep.subr.mxu0 0.0
  %2171 = vmatpush1.xpose.msra.mxu0 0.0
  %2172 = vmatprep.subr.mxu0 0.0
  %2173 = vmatpush1.xpose.msra.mxu0 0.0
  %2174 = vmatprep.subr.mxu0 0.0
  %2175 = vmatpush1.xpose.msra.mxu0 0.0
  %2176 = vmatprep.subr.mxu0 0.0
  %2177 = vmatpush1.xpose.msra.mxu0 0.0
  %2178 = vmatprep.subr.mxu0 0.0
  %2179 = vmatpush1.xpose.msra.mxu0 0.0
  %2180 = vmatprep.subr.mxu0 0.0
  %2181 = vmatpush1.xpose.msra.mxu0 0.0
  %2182 = vmatprep.subr.mxu0 0.0
  %2183 = vmatpush1.xpose.msra.mxu0 0.0
  %2184 = vmatprep.mubr.f32.mxu0 0.0
  %2185 = vmatmul.mubr.f32.gmra.mrb[0].mxu0 %v2116
  %v2186 = vpop.f32.mrb[0].mxu0
  %v2187 = vadd.f32 0.0, %v2186
  %v2188 = vpop.f32.mrb[0].mxu0
  %2189 = vdwg.mxu0
  %v2190 = vmul.f32 %v2187, 0.25
  %v2191 = vsel %vm1543, %v2190, -inf
  %2192 = vmax.xlane.f32.xlu0 %v2191
  %v2193 = vpop.xlane.xlu0 %2192
  %v2194 = vsub.f32 %v2190, %v2193
  %v2195 = vmul.f32 %v2194, 1.442695
  %v2196 = vpow.pop %v2195
  %v2197 = vsel %vm1543, %v2196, 0.0
  %2198 = vadd.xlane.f32.xlu0 %v2197
  %v2199 = vpop.xlane.xlu0 %2198
  %v2200 = vrcp.pop %v2199
  %v2201 = vmul.f32 %v2196, %v2200
  %2202 = vrot.lane.b32.xlu0 %v1946, 48
  %v2203 = vpop.permute.xlu0 %2202
  %v2205 = vsel %vm1557, %v2201, 0
  %v2207 = vsel %vm988, %v2203, 0
  %2209 = vmatprep.subr.mxu0 0.0
  %2210 = vmatpush1.msra.mxu0 %v2207
  %2211 = vmatprep.subr.mxu0 0.0
  %2212 = vmatpush1.msra.mxu0 0.0
  %2213 = vmatprep.subr.mxu0 0.0
  %2214 = vmatpush1.msra.mxu0 0.0
  %2215 = vmatprep.subr.mxu0 0.0
  %2216 = vmatpush1.msra.mxu0 0.0
  %2217 = vmatprep.subr.mxu0 0.0
  %2218 = vmatpush1.msra.mxu0 0.0
  %2219 = vmatprep.subr.mxu0 0.0
  %2220 = vmatpush1.msra.mxu0 0.0
  %2221 = vmatprep.subr.mxu0 0.0
  %2222 = vmatpush1.msra.mxu0 0.0
  %2223 = vmatprep.subr.mxu0 0.0
  %2224 = vmatpush1.msra.mxu0 0.0
  %2225 = vmatprep.subr.mxu0 0.0
  %2226 = vmatpush1.msra.mxu0 0.0
  %2227 = vmatprep.subr.mxu0 0.0
  %2228 = vmatpush1.msra.mxu0 0.0
  %2229 = vmatprep.subr.mxu0 0.0
  %2230 = vmatpush1.msra.mxu0 0.0
  %2231 = vmatprep.subr.mxu0 0.0
  %2232 = vmatpush1.msra.mxu0 0.0
  %2233 = vmatprep.subr.mxu0 0.0
  %2234 = vmatpush1.msra.mxu0 0.0
  %2235 = vmatprep.subr.mxu0 0.0
  %2236 = vmatpush1.msra.mxu0 0.0
  %2237 = vmatprep.subr.mxu0 0.0
  %2238 = vmatpush1.msra.mxu0 0.0
  %2239 = vmatprep.subr.mxu0 0.0
  %2240 = vmatpush1.msra.mxu0 0.0
  %2241 = vmatprep.subr.mxu0 0.0
  %2242 = vmatpush1.msra.mxu0 0.0
  %2243 = vmatprep.subr.mxu0 0.0
  %2244 = vmatpush1.msra.mxu0 0.0
  %2245 = vmatprep.subr.mxu0 0.0
  %2246 = vmatpush1.msra.mxu0 0.0
  %2247 = vmatprep.subr.mxu0 0.0
  %2248 = vmatpush1.msra.mxu0 0.0
  %2249 = vmatprep.subr.mxu0 0.0
  %2250 = vmatpush1.msra.mxu0 0.0
  %2251 = vmatprep.subr.mxu0 0.0
  %2252 = vmatpush1.msra.mxu0 0.0
  %2253 = vmatprep.subr.mxu0 0.0
  %2254 = vmatpush1.msra.mxu0 0.0
  %2255 = vmatprep.subr.mxu0 0.0
  %2256 = vmatpush1.msra.mxu0 0.0
  %2257 = vmatprep.subr.mxu0 0.0
  %2258 = vmatpush1.msra.mxu0 0.0
  %2259 = vmatprep.subr.mxu0 0.0
  %2260 = vmatpush1.msra.mxu0 0.0
  %2261 = vmatprep.subr.mxu0 0.0
  %2262 = vmatpush1.msra.mxu0 0.0
  %2263 = vmatprep.subr.mxu0 0.0
  %2264 = vmatpush1.msra.mxu0 0.0
  %2265 = vmatprep.subr.mxu0 0.0
  %2266 = vmatpush1.msra.mxu0 0.0
  %2267 = vmatprep.subr.mxu0 0.0
  %2268 = vmatpush1.msra.mxu0 0.0
  %2269 = vmatprep.subr.mxu0 0.0
  %2270 = vmatpush1.msra.mxu0 0.0
  %2271 = vmatprep.subr.mxu0 0.0
  %2272 = vmatpush1.msra.mxu0 0.0
  %2273 = vmatprep.mubr.f32.mxu0 0.0
  %2274 = vmatmul.mubr.f32.gmra.mrb[0].mxu0 %v2205
  %v2275 = vpop.f32.mrb[0].mxu0
  %v2276 = vadd.f32 0.0, %v2275
  %v2277 = vpop.f32.mrb[0].mxu0
  %2278 = vdwg.mxu0
  %v2280 = vsel %vm1467, %v2276, 0
  %2282 = vmatprep.subr.mxu0 0.0
  %2283 = vmatpush1.msra.mxu0 %v1462
  %2284 = vmatprep.subr.mxu0 0.0
  %2285 = vmatpush1.msra.mxu0 %v1463
  %2286 = vmatprep.subr.mxu0 0.0
  %2287 = vmatpush1.msra.mxu0 0.0
  %2288 = vmatprep.subr.mxu0 0.0
  %2289 = vmatpush1.msra.mxu0 0.0
  %2290 = vmatprep.subr.mxu0 0.0
  %2291 = vmatpush1.msra.mxu0 0.0
  %2292 = vmatprep.subr.mxu0 0.0
  %2293 = vmatpush1.msra.mxu0 0.0
  %2294 = vmatprep.subr.mxu0 0.0
  %2295 = vmatpush1.msra.mxu0 0.0
  %2296 = vmatprep.subr.mxu0 0.0
  %2297 = vmatpush1.msra.mxu0 0.0
  %2298 = vmatprep.subr.mxu0 0.0
  %2299 = vmatpush1.msra.mxu0 0.0
  %2300 = vmatprep.subr.mxu0 0.0
  %2301 = vmatpush1.msra.mxu0 0.0
  %2302 = vmatprep.subr.mxu0 0.0
  %2303 = vmatpush1.msra.mxu0 0.0
  %2304 = vmatprep.subr.mxu0 0.0
  %2305 = vmatpush1.msra.mxu0 0.0
  %2306 = vmatprep.subr.mxu0 0.0
  %2307 = vmatpush1.msra.mxu0 0.0
  %2308 = vmatprep.subr.mxu0 0.0
  %2309 = vmatpush1.msra.mxu0 0.0
  %2310 = vmatprep.subr.mxu0 0.0
  %2311 = vmatpush1.msra.mxu0 0.0
  %2312 = vmatprep.subr.mxu0 0.0
  %2313 = vmatpush1.msra.mxu0 0.0
  %2314 = vmatprep.subr.mxu0 0.0
  %2315 = vmatpush1.msra.mxu0 0.0
  %2316 = vmatprep.subr.mxu0 0.0
  %2317 = vmatpush1.msra.mxu0 0.0
  %2318 = vmatprep.subr.mxu0 0.0
  %2319 = vmatpush1.msra.mxu0 0.0
  %2320 = vmatprep.subr.mxu0 0.0
  %2321 = vmatpush1.msra.mxu0 0.0
  %2322 = vmatprep.subr.mxu0 0.0
  %2323 = vmatpush1.msra.mxu0 0.0
  %2324 = vmatprep.subr.mxu0 0.0
  %2325 = vmatpush1.msra.mxu0 0.0
  %2326 = vmatprep.subr.mxu0 0.0
  %2327 = vmatpush1.msra.mxu0 0.0
  %2328 = vmatprep.subr.mxu0 0.0
  %2329 = vmatpush1.msra.mxu0 0.0
  %2330 = vmatprep.subr.mxu0 0.0
  %2331 = vmatpush1.msra.mxu0 0.0
  %2332 = vmatprep.subr.mxu0 0.0
  %2333 = vmatpush1.msra.mxu0 0.0
  %2334 = vmatprep.subr.mxu0 0.0
  %2335 = vmatpush1.msra.mxu0 0.0
  %2336 = vmatprep.subr.mxu0 0.0
  %2337 = vmatpush1.msra.mxu0 0.0
  %2338 = vmatprep.subr.mxu0 0.0
  %2339 = vmatpush1.msra.mxu0 0.0
  %2340 = vmatprep.subr.mxu0 0.0
  %2341 = vmatpush1.msra.mxu0 0.0
  %2342 = vmatprep.subr.mxu0 0.0
  %2343 = vmatpush1.msra.mxu0 0.0
  %2344 = vmatprep.subr.mxu0 0.0
  %2345 = vmatpush1.msra.mxu0 0.0
  %2346 = vmatprep.mubr.f32.mxu0 0.0
  %2347 = vmatmul.mubr.f32.gmra.mrb[0].mxu0 %v2280
  %v2348 = vpop.f32.mrb[0].mxu0
  %v2349 = vadd.f32 0.0, %v2348
  %v2350 = vpop.f32.mrb[0].mxu0
  %2351 = vdwg.mxu0
  %v2353 = vsel %vm1467, %v2109, 0
  %2355 = vmatprep.subr.mxu0 0.0
  %2356 = vmatpush1.msra.mxu0 %v1460
  %2357 = vmatprep.subr.mxu0 0.0
  %2358 = vmatpush1.msra.mxu0 %v1461
  %2359 = vmatprep.subr.mxu0 0.0
  %2360 = vmatpush1.msra.mxu0 0.0
  %2361 = vmatprep.subr.mxu0 0.0
  %2362 = vmatpush1.msra.mxu0 0.0
  %2363 = vmatprep.subr.mxu0 0.0
  %2364 = vmatpush1.msra.mxu0 0.0
  %2365 = vmatprep.subr.mxu0 0.0
  %2366 = vmatpush1.msra.mxu0 0.0
  %2367 = vmatprep.subr.mxu0 0.0
  %2368 = vmatpush1.msra.mxu0 0.0
  %2369 = vmatprep.subr.mxu0 0.0
  %2370 = vmatpush1.msra.mxu0 0.0
  %2371 = vmatprep.subr.mxu0 0.0
  %2372 = vmatpush1.msra.mxu0 0.0
  %2373 = vmatprep.subr.mxu0 0.0
  %2374 = vmatpush1.msra.mxu0 0.0
  %2375 = vmatprep.subr.mxu0 0.0
  %2376 = vmatpush1.msra.mxu0 0.0
  %2377 = vmatprep.subr.mxu0 0.0
  %2378 = vmatpush1.msra.mxu0 0.0
  %2379 = vmatprep.subr.mxu0 0.0
  %2380 = vmatpush1.msra.mxu0 0.0
  %2381 = vmatprep.subr.mxu0 0.0
  %2382 = vmatpush1.msra.mxu0 0.0
  %2383 = vmatprep.subr.mxu0 0.0
  %2384 = vmatpush1.msra.mxu0 0.0
  %2385 = vmatprep.subr.mxu0 0.0
  %2386 = vmatpush1.msra.mxu0 0.0
  %2387 = vmatprep.subr.mxu0 0.0
  %2388 = vmatpush1.msra.mxu0 0.0
  %2389 = vmatprep.subr.mxu0 0.0
  %2390 = vmatpush1.msra.mxu0 0.0
  %2391 = vmatprep.subr.mxu0 0.0
  %2392 = vmatpush1.msra.mxu0 0.0
  %2393 = vmatprep.subr.mxu0 0.0
  %2394 = vmatpush1.msra.mxu0 0.0
  %2395 = vmatprep.subr.mxu0 0.0
  %2396 = vmatpush1.msra.mxu0 0.0
  %2397 = vmatprep.subr.mxu0 0.0
  %2398 = vmatpush1.msra.mxu0 0.0
  %2399 = vmatprep.subr.mxu0 0.0
  %2400 = vmatpush1.msra.mxu0 0.0
  %2401 = vmatprep.subr.mxu0 0.0
  %2402 = vmatpush1.msra.mxu0 0.0
  %2403 = vmatprep.subr.mxu0 0.0
  %2404 = vmatpush1.msra.mxu0 0.0
  %2405 = vmatprep.subr.mxu0 0.0
  %2406 = vmatpush1.msra.mxu0 0.0
  %2407 = vmatprep.subr.mxu0 0.0
  %2408 = vmatpush1.msra.mxu0 0.0
  %2409 = vmatprep.subr.mxu0 0.0
  %2410 = vmatpush1.msra.mxu0 0.0
  %2411 = vmatprep.subr.mxu0 0.0
  %2412 = vmatpush1.msra.mxu0 0.0
  %2413 = vmatprep.subr.mxu0 0.0
  %2414 = vmatpush1.msra.mxu0 0.0
  %2415 = vmatprep.subr.mxu0 0.0
  %2416 = vmatpush1.msra.mxu0 0.0
  %2417 = vmatprep.subr.mxu0 0.0
  %2418 = vmatpush1.msra.mxu0 0.0
  %2419 = vmatprep.mubr.f32.mxu0 0.0
  %2420 = vmatmul.mubr.f32.gmra.mrb[0].mxu0 %v2353
  %v2421 = vpop.f32.mrb[0].mxu0
  %v2422 = vadd.f32 %v2349, %v2421
  %v2423 = vpop.f32.mrb[0].mxu0
  %2424 = vdwg.mxu0
  %v2426 = vrot.slane %v2422, 4
  %v2428 = vsel %vm988, %v1943, %v2426
  %v2429 = vld [vmem:[%s8] sm:$0x1]
  %v2431 = vlaneseq
  %v2432 = vshrl.u32 %v2431, 7
  %v2433 = vsub.s32 0, %v2432
  %v2434 = vrot.slane %v2429, %v2433
  %v2436 = vadd.f32 %v2428, %v2434
  %v2437 = vadd.f32 %v1374, %v2436
  %v2438 = vld [vmem:[%s9] sm:$0x1]
  %v2439 = vld [vmem:[%s10] sm:$0x1]
  %v2440 = vsel %vm1386, %v2437, 0.0
  %2441 = vadd.xlane.f32.xlu0 %v2440
  %v2442 = vpop.xlane.xlu0 %2441
  %v2443 = vrcp.pop 32.0
  %v2444 = vmul.f32 %v2442, %v2443
  %v2445 = vsub.f32 %v2437, %v2444
  %v2446 = vmul.f32 %v2445, %v2445
  %v2447 = vsel %vm1386, %v2446, 0.0
  %2448 = vadd.xlane.f32.xlu0 %v2447
  %v2449 = vpop.xlane.xlu0 %2448
  %v2450 = vmul.f32 %v2449, %v2443
  %v2451 = vadd.f32 %v2450, 1e-05
  %v2452 = vrsqrt.pop %v2451
  %v2453 = vmul.f32 %v2445, %v2452
  %v2455 = vlaneseq
  %v2456 = vshrl.u32 %v2455, 7
  %v2457 = vsub.s32 0, %v2456
  %v2458 = vrot.slane %v2438, %v2457
  %v2460 = vmul.f32 %v2453, %v2458
  %v2462 = vlaneseq
  %v2463 = vshrl.u32 %v2462, 7
  %v2464 = vsub.s32 0, %v2463
  %v2465 = vrot.slane %v2439, %v2464
  %v2467 = vadd.f32 %v2460, %v2465
  %v2468 = vld [vmem:[%s11] sm:$0xff]
  %v2469 = vld [vmem:[%s11 + $0x8] sm:$0xff]
  %v2470 = vld [vmem:[%s11 + $0x10] sm:$0xff]
  %v2471 = vld [vmem:[%s11 + $0x18] sm:$0xff]
  %v2472 = vld [vmem:[%s11 + $0x20] sm:$0xff]
  %v2473 = vld [vmem:[%s11 + $0x28] sm:$0xff]
  %v2474 = vld [vmem:[%s11 + $0x30] sm:$0xff]
  %v2475 = vld [vmem:[%s11 + $0x38] sm:$0xff]
  %v2476 = vld [vmem:[%s11 + $0x40] sm:$0xff]
  %v2477 = vld [vmem:[%s11 + $0x48] sm:$0xff]
  %v2478 = vld [vmem:[%s11 + $0x50] sm:$0xff]
  %v2479 = vld [vmem:[%s11 + $0x58] sm:$0xff]
  %v2480 = vld [vmem:[%s11 + $0x60] sm:$0xff]
  %v2481 = vld [vmem:[%s11 + $0x68] sm:$0xff]
  %v2482 = vld [vmem:[%s11 + $0x70] sm:$0xff]
  %v2483 = vld [vmem:[%s11 + $0x78] sm:$0xff]
  %v2484 = vld [vmem:[%s11 + $0x80] sm:$0xff]
  %v2485 = vld [vmem:[%s11 + $0x88] sm:$0xff]
  %v2486 = vld [vmem:[%s11 + $0x90] sm:$0xff]
  %v2487 = vld [vmem:[%s11 + $0x98] sm:$0xff]
  %v2488 = vld [vmem:[%s11 + $0xa0] sm:$0xff]
  %v2489 = vld [vmem:[%s11 + $0xa8] sm:$0xff]
  %v2490 = vld [vmem:[%s11 + $0xb0] sm:$0xff]
  %v2491 = vld [vmem:[%s11 + $0xb8] sm:$0xff]
  %v2492 = vld [vmem:[%s11 + $0xc0] sm:$0xff]
  %v2493 = vld [vmem:[%s11 + $0xc8] sm:$0xff]
  %v2494 = vld [vmem:[%s11 + $0xd0] sm:$0xff]
  %v2495 = vld [vmem:[%s11 + $0xd8] sm:$0xff]
  %v2496 = vld [vmem:[%s11 + $0xe0] sm:$0xff]
  %v2497 = vld [vmem:[%s11 + $0xe8] sm:$0xff]
  %v2498 = vld [vmem:[%s11 + $0xf0] sm:$0xff]
  %v2499 = vld [vmem:[%s11 + $0xf8] sm:$0xff]
  %v2500 = vld [vmem:[%s11 + $0x100] sm:$0xff]
  %v2501 = vld [vmem:[%s11 + $0x108] sm:$0xff]
  %v2502 = vld [vmem:[%s11 + $0x110] sm:$0xff]
  %v2503 = vld [vmem:[%s11 + $0x118] sm:$0xff]
  %v2504 = vld [vmem:[%s11 + $0x120] sm:$0xff]
  %v2505 = vld [vmem:[%s11 + $0x128] sm:$0xff]
  %v2506 = vld [vmem:[%s11 + $0x130] sm:$0xff]
  %v2507 = vld [vmem:[%s11 + $0x138] sm:$0xff]
  %v2508 = vld [vmem:[%s11 + $0x140] sm:$0xff]
  %v2509 = vld [vmem:[%s11 + $0x148] sm:$0xff]
  %v2510 = vld [vmem:[%s11 + $0x150] sm:$0xff]
  %v2511 = vld [vmem:[%s11 + $0x158] sm:$0xff]
  %v2512 = vld [vmem:[%s11 + $0x160] sm:$0xff]
  %v2513 = vld [vmem:[%s11 + $0x168] sm:$0xff]
  %v2514 = vld [vmem:[%s11 + $0x170] sm:$0xff]
  %v2515 = vld [vmem:[%s11 + $0x178] sm:$0xff]
  %v2516 = vld [vmem:[%s11 + $0x180] sm:$0xff]
  %v2517 = vld [vmem:[%s11 + $0x188] sm:$0xff]
  %v2518 = vld [vmem:[%s11 + $0x190] sm:$0xff]
  %v2519 = vld [vmem:[%s11 + $0x198] sm:$0xff]
  %v2520 = vld [vmem:[%s11 + $0x1a0] sm:$0xff]
  %v2521 = vld [vmem:[%s11 + $0x1a8] sm:$0xff]
  %v2522 = vld [vmem:[%s11 + $0x1b0] sm:$0xff]
  %v2523 = vld [vmem:[%s11 + $0x1b8] sm:$0xff]
  %v2524 = vld [vmem:[%s11 + $0x1c0] sm:$0xff]
  %v2525 = vld [vmem:[%s11 + $0x1c8] sm:$0xff]
  %v2526 = vld [vmem:[%s11 + $0x1d0] sm:$0xff]
  %v2527 = vld [vmem:[%s11 + $0x1d8] sm:$0xff]
  %v2528 = vld [vmem:[%s11 + $0x1e0] sm:$0xff]
  %v2529 = vld [vmem:[%s11 + $0x1e8] sm:$0xff]
  %v2530 = vld [vmem:[%s11 + $0x1f0] sm:$0xff]
  %v2531 = vld [vmem:[%s11 + $0x1f8] sm:$0xff]
  %v2532 = vld [vmem:[%s12] sm:$0xff]
  %v2533 = vld [vmem:[%s12 + $0x8] sm:$0xff]
  %v2536 = vlaneseq
  %v2537 = vshrl.u32 %v2536, 7
  %v2538 = vsub.s32 0, %v2537
  %v2539 = vrot.slane %v2532, %v2538
  %v2540 = vlaneseq
  %v2541 = vshrl.u32 %v2540, 7
  %v2542 = vsub.s32 1, %v2541
  %v2543 = vrot.slane %v2532, %v2542
  %v2544 = vlaneseq
  %v2545 = vshrl.u32 %v2544, 7
  %v2546 = vsub.s32 2, %v2545
  %v2547 = vrot.slane %v2532, %v2546
  %v2548 = vlaneseq
  %v2549 = vshrl.u32 %v2548, 7
  %v2550 = vsub.s32 3, %v2549
  %v2551 = vrot.slane %v2532, %v2550
  %v2552 = vlaneseq
  %v2553 = vshrl.u32 %v2552, 7
  %v2554 = vsub.s32 4, %v2553
  %v2555 = vrot.slane %v2532, %v2554
  %v2556 = vlaneseq
  %v2557 = vshrl.u32 %v2556, 7
  %v2558 = vsub.s32 5, %v2557
  %v2559 = vrot.slane %v2532, %v2558
  %v2560 = vlaneseq
  %v2561 = vshrl.u32 %v2560, 7
  %v2562 = vsub.s32 6, %v2561
  %v2563 = vrot.slane %v2532, %v2562
  %v2564 = vlaneseq
  %v2565 = vshrl.u32 %v2564, 7
  %v2566 = vsub.s32 7, %v2565
  %v2567 = vrot.slane %v2532, %v2566
  %v2568 = vlaneseq
  %v2569 = vshrl.u32 %v2568, 7
  %v2570 = vsub.s32 0, %v2569
  %v2571 = vrot.slane %v2533, %v2570
  %v2572 = vlaneseq
  %v2573 = vshrl.u32 %v2572, 7
  %v2574 = vsub.s32 1, %v2573
  %v2575 = vrot.slane %v2533, %v2574
  %v2576 = vlaneseq
  %v2577 = vshrl.u32 %v2576, 7
  %v2578 = vsub.s32 2, %v2577
  %v2579 = vrot.slane %v2533, %v2578
  %v2580 = vlaneseq
  %v2581 = vshrl.u32 %v2580, 7
  %v2582 = vsub.s32 3, %v2581
  %v2583 = vrot.slane %v2533, %v2582
  %v2584 = vlaneseq
  %v2585 = vshrl.u32 %v2584, 7
  %v2586 = vsub.s32 4, %v2585
  %v2587 = vrot.slane %v2533, %v2586
  %v2588 = vlaneseq
  %v2589 = vshrl.u32 %v2588, 7
  %v2590 = vsub.s32 5, %v2589
  %v2591 = vrot.slane %v2533, %v2590
  %v2592 = vlaneseq
  %v2593 = vshrl.u32 %v2592, 7
  %v2594 = vsub.s32 6, %v2593
  %v2595 = vrot.slane %v2533, %v2594
  %v2596 = vlaneseq
  %v2597 = vshrl.u32 %v2596, 7
  %v2598 = vsub.s32 7, %v2597
  %v2599 = vrot.slane %v2533, %v2598
  %v2617 = vsel %vm1386, %v2467, 0
  %2619 = vmatprep.subr.mxu0 %v2469
  %2620 = vmatpush1.msra.mxu0 %v2468
  %2621 = vmatprep.subr.mxu0 %v2485
  %2622 = vmatpush1.msra.mxu0 %v2484
  %2623 = vmatprep.subr.mxu0 %v2501
  %2624 = vmatpush1.msra.mxu0 %v2500
  %2625 = vmatprep.subr.mxu0 %v2517
  %2626 = vmatpush1.msra.mxu0 %v2516
  %2627 = vmatprep.subr.mxu0 0.0
  %2628 = vmatpush1.msra.mxu0 0.0
  %2629 = vmatprep.subr.mxu0 0.0
  %2630 = vmatpush1.msra.mxu0 0.0
  %2631 = vmatprep.subr.mxu0 0.0
  %2632 = vmatpush1.msra.mxu0 0.0
  %2633 = vmatprep.subr.mxu0 0.0
  %2634 = vmatpush1.msra.mxu0 0.0
  %2635 = vmatprep.subr.mxu0 0.0
  %2636 = vmatpush1.msra.mxu0 0.0
  %2637 = vmatprep.subr.mxu0 0.0
  %2638 = vmatpush1.msra.mxu0 0.0
  %2639 = vmatprep.subr.mxu0 0.0
  %2640 = vmatpush1.msra.mxu0 0.0
  %2641 = vmatprep.subr.mxu0 0.0
  %2642 = vmatpush1.msra.mxu0 0.0
  %2643 = vmatprep.subr.mxu0 0.0
  %2644 = vmatpush1.msra.mxu0 0.0
  %2645 = vmatprep.subr.mxu0 0.0
  %2646 = vmatpush1.msra.mxu0 0.0
  %2647 = vmatprep.subr.mxu0 0.0
  %2648 = vmatpush1.msra.mxu0 0.0
  %2649 = vmatprep.subr.mxu0 0.0
  %2650 = vmatpush1.msra.mxu0 0.0
  %2651 = vmatprep.subr.mxu0 0.0
  %2652 = vmatpush1.msra.mxu0 0.0
  %2653 = vmatprep.subr.mxu0 0.0
  %2654 = vmatpush1.msra.mxu0 0.0
  %2655 = vmatprep.subr.mxu0 0.0
  %2656 = vmatpush1.msra.mxu0 0.0
  %2657 = vmatprep.subr.mxu0 0.0
  %2658 = vmatpush1.msra.mxu0 0.0
  %2659 = vmatprep.subr.mxu0 0.0
  %2660 = vmatpush1.msra.mxu0 0.0
  %2661 = vmatprep.subr.mxu0 0.0
  %2662 = vmatpush1.msra.mxu0 0.0
  %2663 = vmatprep.subr.mxu0 0.0
  %2664 = vmatpush1.msra.mxu0 0.0
  %2665 = vmatprep.subr.mxu0 0.0
  %2666 = vmatpush1.msra.mxu0 0.0
  %2667 = vmatprep.subr.mxu0 0.0
  %2668 = vmatpush1.msra.mxu0 0.0
  %2669 = vmatprep.subr.mxu0 0.0
  %2670 = vmatpush1.msra.mxu0 0.0
  %2671 = vmatprep.subr.mxu0 0.0
  %2672 = vmatpush1.msra.mxu0 0.0
  %2673 = vmatprep.subr.mxu0 0.0
  %2674 = vmatpush1.msra.mxu0 0.0
  %2675 = vmatprep.subr.mxu0 0.0
  %2676 = vmatpush1.msra.mxu0 0.0
  %2677 = vmatprep.subr.mxu0 0.0
  %2678 = vmatpush1.msra.mxu0 0.0
  %2679 = vmatprep.subr.mxu0 0.0
  %2680 = vmatpush1.msra.mxu0 0.0
  %2681 = vmatprep.subr.mxu0 0.0
  %2682 = vmatpush1.msra.mxu0 0.0
  %2683 = vmatprep.mubr.f32.mxu0 0.0
  %2684 = vmatmul.mubr.f32.gmra.mrb[0].mxu0 %v2617
  %v2685 = vpop.f32.mrb[0].mxu0
  %v2686 = vadd.f32 %v2539, %v2685
  %v2687 = vpop.f32.mrb[0].mxu0
  %v2688 = vadd.f32 %v2543, %v2687
  %2689 = vdwg.mxu0
  %2690 = vmatprep.subr.mxu0 %v2471
  %2691 = vmatpush1.msra.mxu0 %v2470
  %2692 = vmatprep.subr.mxu0 %v2487
  %2693 = vmatpush1.msra.mxu0 %v2486
  %2694 = vmatprep.subr.mxu0 %v2503
  %2695 = vmatpush1.msra.mxu0 %v2502
  %2696 = vmatprep.subr.mxu0 %v2519
  %2697 = vmatpush1.msra.mxu0 %v2518
  %2698 = vmatprep.subr.mxu0 0.0
  %2699 = vmatpush1.msra.mxu0 0.0
  %2700 = vmatprep.subr.mxu0 0.0
  %2701 = vmatpush1.msra.mxu0 0.0
  %2702 = vmatprep.subr.mxu0 0.0
  %2703 = vmatpush1.msra.mxu0 0.0
  %2704 = vmatprep.subr.mxu0 0.0
  %2705 = vmatpush1.msra.mxu0 0.0
  %2706 = vmatprep.subr.mxu0 0.0
  %2707 = vmatpush1.msra.mxu0 0.0
  %2708 = vmatprep.subr.mxu0 0.0
  %2709 = vmatpush1.msra.mxu0 0.0
  %2710 = vmatprep.subr.mxu0 0.0
  %2711 = vmatpush1.msra.mxu0 0.0
  %2712 = vmatprep.subr.mxu0 0.0
  %2713 = vmatpush1.msra.mxu0 0.0
  %2714 = vmatprep.subr.mxu0 0.0
  %2715 = vmatpush1.msra.mxu0 0.0
  %2716 = vmatprep.subr.mxu0 0.0
  %2717 = vmatpush1.msra.mxu0 0.0
  %2718 = vmatprep.subr.mxu0 0.0
  %2719 = vmatpush1.msra.mxu0 0.0
  %2720 = vmatprep.subr.mxu0 0.0
  %2721 = vmatpush1.msra.mxu0 0.0
  %2722 = vmatprep.subr.mxu0 0.0
  %2723 = vmatpush1.msra.mxu0 0.0
  %2724 = vmatprep.subr.mxu0 0.0
  %2725 = vmatpush1.msra.mxu0 0.0
  %2726 = vmatprep.subr.mxu0 0.0
  %2727 = vmatpush1.msra.mxu0 0.0
  %2728 = vmatprep.subr.mxu0 0.0
  %2729 = vmatpush1.msra.mxu0 0.0
  %2730 = vmatprep.subr.mxu0 0.0
  %2731 = vmatpush1.msra.mxu0 0.0
  %2732 = vmatprep.subr.mxu0 0.0
  %2733 = vmatpush1.msra.mxu0 0.0
  %2734 = vmatprep.subr.mxu0 0.0
  %2735 = vmatpush1.msra.mxu0 0.0
  %2736 = vmatprep.subr.mxu0 0.0
  %2737 = vmatpush1.msra.mxu0 0.0
  %2738 = vmatprep.subr.mxu0 0.0
  %2739 = vmatpush1.msra.mxu0 0.0
  %2740 = vmatprep.subr.mxu0 0.0
  %2741 = vmatpush1.msra.mxu0 0.0
  %2742 = vmatprep.subr.mxu0 0.0
  %2743 = vmatpush1.msra.mxu0 0.0
  %2744 = vmatprep.subr.mxu0 0.0
  %2745 = vmatpush1.msra.mxu0 0.0
  %2746 = vmatprep.subr.mxu0 0.0
  %2747 = vmatpush1.msra.mxu0 0.0
  %2748 = vmatprep.subr.mxu0 0.0
  %2749 = vmatpush1.msra.mxu0 0.0
  %2750 = vmatprep.subr.mxu0 0.0
  %2751 = vmatpush1.msra.mxu0 0.0
  %2752 = vmatprep.subr.mxu0 0.0
  %2753 = vmatpush1.msra.mxu0 0.0
  %2754 = vmatprep.mubr.f32.mxu0 0.0
  %2755 = vmatmul.mubr.f32.gmra.mrb[0].mxu0 %v2617
  %v2756 = vpop.f32.mrb[0].mxu0
  %v2757 = vadd.f32 %v2547, %v2756
  %v2758 = vpop.f32.mrb[0].mxu0
  %v2759 = vadd.f32 %v2551, %v2758
  %2760 = vdwg.mxu0
  %2761 = vmatprep.subr.mxu0 %v2473
  %2762 = vmatpush1.msra.mxu0 %v2472
  %2763 = vmatprep.subr.mxu0 %v2489
  %2764 = vmatpush1.msra.mxu0 %v2488
  %2765 = vmatprep.subr.mxu0 %v2505
  %2766 = vmatpush1.msra.mxu0 %v2504
  %2767 = vmatprep.subr.mxu0 %v2521
  %2768 = vmatpush1.msra.mxu0 %v2520
  %2769 = vmatprep.subr.mxu0 0.0
  %2770 = vmatpush1.msra.mxu0 0.0
  %2771 = vmatprep.subr.mxu0 0.0
  %2772 = vmatpush1.msra.mxu0 0.0
  %2773 = vmatprep.subr.mxu0 0.0
  %2774 = vmatpush1.msra.mxu0 0.0
  %2775 = vmatprep.subr.mxu0 0.0
  %2776 = vmatpush1.msra.mxu0 0.0
  %2777 = vmatprep.subr.mxu0 0.0
  %2778 = vmatpush1.msra.mxu0 0.0
  %2779 = vmatprep.subr.mxu0 0.0
  %2780 = vmatpush1.msra.mxu0 0.0
  %2781 = vmatprep.subr.mxu0 0.0
  %2782 = vmatpush1.msra.mxu0 0.0
  %2783 = vmatprep.subr.mxu0 0.0
  %2784 = vmatpush1.msra.mxu0 0.0
  %2785 = vmatprep.subr.mxu0 0.0
  %2786 = vmatpush1.msra.mxu0 0.0
  %2787 = vmatprep.subr.mxu0 0.0
  %2788 = vmatpush1.msra.mxu0 0.0
  %2789 = vmatprep.subr.mxu0 0.0
  %2790 = vmatpush1.msra.mxu0 0.0
  %2791 = vmatprep.subr.mxu0 0.0
  %2792 = vmatpush1.msra.mxu0 0.0
  %2793 = vmatprep.subr.mxu0 0.0
  %2794 = vmatpush1.msra.mxu0 0.0
  %2795 = vmatprep.subr.mxu0 0.0
  %2796 = vmatpush1.msra.mxu0 0.0
  %2797 = vmatprep.subr.mxu0 0.0
  %2798 = vmatpush1.msra.mxu0 0.0
  %2799 = vmatprep.subr.mxu0 0.0
  %2800 = vmatpush1.msra.mxu0 0.0
  %2801 = vmatprep.subr.mxu0 0.0
  %2802 = vmatpush1.msra.mxu0 0.0
  %2803 = vmatprep.subr.mxu0 0.0
  %2804 = vmatpush1.msra.mxu0 0.0
  %2805 = vmatprep.subr.mxu0 0.0
  %2806 = vmatpush1.msra.mxu0 0.0
  %2807 = vmatprep.subr.mxu0 0.0
  %2808 = vmatpush1.msra.mxu0 0.0
  %2809 = vmatprep.subr.mxu0 0.0
  %2810 = vmatpush1.msra.mxu0 0.0
  %2811 = vmatprep.subr.mxu0 0.0
  %2812 = vmatpush1.msra.mxu0 0.0
  %2813 = vmatprep.subr.mxu0 0.0
  %2814 = vmatpush1.msra.mxu0 0.0
  %2815 = vmatprep.subr.mxu0 0.0
  %2816 = vmatpush1.msra.mxu0 0.0
  %2817 = vmatprep.subr.mxu0 0.0
  %2818 = vmatpush1.msra.mxu0 0.0
  %2819 = vmatprep.subr.mxu0 0.0
  %2820 = vmatpush1.msra.mxu0 0.0
  %2821 = vmatprep.subr.mxu0 0.0
  %2822 = vmatpush1.msra.mxu0 0.0
  %2823 = vmatprep.subr.mxu0 0.0
  %2824 = vmatpush1.msra.mxu0 0.0
  %2825 = vmatprep.mubr.f32.mxu0 0.0
  %2826 = vmatmul.mubr.f32.gmra.mrb[0].mxu0 %v2617
  %v2827 = vpop.f32.mrb[0].mxu0
  %v2828 = vadd.f32 %v2555, %v2827
  %v2829 = vpop.f32.mrb[0].mxu0
  %v2830 = vadd.f32 %v2559, %v2829
  %2831 = vdwg.mxu0
  %2832 = vmatprep.subr.mxu0 %v2475
  %2833 = vmatpush1.msra.mxu0 %v2474
  %2834 = vmatprep.subr.mxu0 %v2491
  %2835 = vmatpush1.msra.mxu0 %v2490
  %2836 = vmatprep.subr.mxu0 %v2507
  %2837 = vmatpush1.msra.mxu0 %v2506
  %2838 = vmatprep.subr.mxu0 %v2523
  %2839 = vmatpush1.msra.mxu0 %v2522
  %2840 = vmatprep.subr.mxu0 0.0
  %2841 = vmatpush1.msra.mxu0 0.0
  %2842 = vmatprep.subr.mxu0 0.0
  %2843 = vmatpush1.msra.mxu0 0.0
  %2844 = vmatprep.subr.mxu0 0.0
  %2845 = vmatpush1.msra.mxu0 0.0
  %2846 = vmatprep.subr.mxu0 0.0
  %2847 = vmatpush1.msra.mxu0 0.0
  %2848 = vmatprep.subr.mxu0 0.0
  %2849 = vmatpush1.msra.mxu0 0.0
  %2850 = vmatprep.subr.mxu0 0.0
  %2851 = vmatpush1.msra.mxu0 0.0
  %2852 = vmatprep.subr.mxu0 0.0
  %2853 = vmatpush1.msra.mxu0 0.0
  %2854 = vmatprep.subr.mxu0 0.0
  %2855 = vmatpush1.msra.mxu0 0.0
  %2856 = vmatprep.subr.mxu0 0.0
  %2857 = vmatpush1.msra.mxu0 0.0
  %2858 = vmatprep.subr.mxu0 0.0
  %2859 = vmatpush1.msra.mxu0 0.0
  %2860 = vmatprep.subr.mxu0 0.0
  %2861 = vmatpush1.msra.mxu0 0.0
  %2862 = vmatprep.subr.mxu0 0.0
  %2863 = vmatpush1.msra.mxu0 0.0
  %2864 = vmatprep.subr.mxu0 0.0
  %2865 = vmatpush1.msra.mxu0 0.0
  %2866 = vmatprep.subr.mxu0 0.0
  %2867 = vmatpush1.msra.mxu0 0.0
  %2868 = vmatprep.subr.mxu0 0.0
  %2869 = vmatpush1.msra.mxu0 0.0
  %2870 = vmatprep.subr.mxu0 0.0
  %2871 = vmatpush1.msra.mxu0 0.0
  %2872 = vmatprep.subr.mxu0 0.0
  %2873 = vmatpush1.msra.mxu0 0.0
  %2874 = vmatprep.subr.mxu0 0.0
  %2875 = vmatpush1.msra.mxu0 0.0
  %2876 = vmatprep.subr.mxu0 0.0
  %2877 = vmatpush1.msra.mxu0 0.0
  %2878 = vmatprep.subr.mxu0 0.0
  %2879 = vmatpush1.msra.mxu0 0.0
  %2880 = vmatprep.subr.mxu0 0.0
  %2881 = vmatpush1.msra.mxu0 0.0
  %2882 = vmatprep.subr.mxu0 0.0
  %2883 = vmatpush1.msra.mxu0 0.0
  %2884 = vmatprep.subr.mxu0 0.0
  %2885 = vmatpush1.msra.mxu0 0.0
  %2886 = vmatprep.subr.mxu0 0.0
  %2887 = vmatpush1.msra.mxu0 0.0
  %2888 = vmatprep.subr.mxu0 0.0
  %2889 = vmatpush1.msra.mxu0 0.0
  %2890 = vmatprep.subr.mxu0 0.0
  %2891 = vmatpush1.msra.mxu0 0.0
  %2892 = vmatprep.subr.mxu0 0.0
  %2893 = vmatpush1.msra.mxu0 0.0
  %2894 = vmatprep.subr.mxu0 0.0
  %2895 = vmatpush1.msra.mxu0 0.0
  %2896 = vmatprep.mubr.f32.mxu0 0.0
  %2897 = vmatmul.mubr.f32.gmra.mrb[0].mxu0 %v2617
  %v2898 = vpop.f32.mrb[0].mxu0
  %v2899 = vadd.f32 %v2563, %v2898
  %v2900 = vpop.f32.mrb[0].mxu0
  %v2901 = vadd.f32 %v2567, %v2900
  %2902 = vdwg.mxu0
  %2903 = vmatprep.subr.mxu0 %v2477
  %2904 = vmatpush1.msra.mxu0 %v2476
  %2905 = vmatprep.subr.mxu0 %v2493
  %2906 = vmatpush1.msra.mxu0 %v2492
  %2907 = vmatprep.subr.mxu0 %v2509
  %2908 = vmatpush1.msra.mxu0 %v2508
  %2909 = vmatprep.subr.mxu0 %v2525
  %2910 = vmatpush1.msra.mxu0 %v2524
  %2911 = vmatprep.subr.mxu0 0.0
  %2912 = vmatpush1.msra.mxu0 0.0
  %2913 = vmatprep.subr.mxu0 0.0
  %2914 = vmatpush1.msra.mxu0 0.0
  %2915 = vmatprep.subr.mxu0 0.0
  %2916 = vmatpush1.msra.mxu0 0.0
  %2917 = vmatprep.subr.mxu0 0.0
  %2918 = vmatpush1.msra.mxu0 0.0
  %2919 = vmatprep.subr.mxu0 0.0
  %2920 = vmatpush1.msra.mxu0 0.0
  %2921 = vmatprep.subr.mxu0 0.0
  %2922 = vmatpush1.msra.mxu0 0.0
  %2923 = vmatprep.subr.mxu0 0.0
  %2924 = vmatpush1.msra.mxu0 0.0
  %2925 = vmatprep.subr.mxu0 0.0
  %2926 = vmatpush1.msra.mxu0 0.0
  %2927 = vmatprep.subr.mxu0 0.0
  %2928 = vmatpush1.msra.mxu0 0.0
  %2929 = vmatprep.subr.mxu0 0.0
  %2930 = vmatpush1.msra.mxu0 0.0
  %2931 = vmatprep.subr.mxu0 0.0
  %2932 = vmatpush1.msra.mxu0 0.0
  %2933 = vmatprep.subr.mxu0 0.0
  %2934 = vmatpush1.msra.mxu0 0.0
  %2935 = vmatprep.subr.mxu0 0.0
  %2936 = vmatpush1.msra.mxu0 0.0
  %2937 = vmatprep.subr.mxu0 0.0
  %2938 = vmatpush1.msra.mxu0 0.0
  %2939 = vmatprep.subr.mxu0 0.0
  %2940 = vmatpush1.msra.mxu0 0.0
  %2941 = vmatprep.subr.mxu0 0.0
  %2942 = vmatpush1.msra.mxu0 0.0
  %2943 = vmatprep.subr.mxu0 0.0
  %2944 = vmatpush1.msra.mxu0 0.0
  %2945 = vmatprep.subr.mxu0 0.0
  %2946 = vmatpush1.msra.mxu0 0.0
  %2947 = vmatprep.subr.mxu0 0.0
  %2948 = vmatpush1.msra.mxu0 0.0
  %2949 = vmatprep.subr.mxu0 0.0
  %2950 = vmatpush1.msra.mxu0 0.0
  %2951 = vmatprep.subr.mxu0 0.0
  %2952 = vmatpush1.msra.mxu0 0.0
  %2953 = vmatprep.subr.mxu0 0.0
  %2954 = vmatpush1.msra.mxu0 0.0
  %2955 = vmatprep.subr.mxu0 0.0
  %2956 = vmatpush1.msra.mxu0 0.0
  %2957 = vmatprep.subr.mxu0 0.0
  %2958 = vmatpush1.msra.mxu0 0.0
  %2959 = vmatprep.subr.mxu0 0.0
  %2960 = vmatpush1.msra.mxu0 0.0
  %2961 = vmatprep.subr.mxu0 0.0
  %2962 = vmatpush1.msra.mxu0 0.0
  %2963 = vmatprep.subr.mxu0 0.0
  %2964 = vmatpush1.msra.mxu0 0.0
  %2965 = vmatprep.subr.mxu0 0.0
  %2966 = vmatpush1.msra.mxu0 0.0
  %2967 = vmatprep.mubr.f32.mxu0 0.0
  %2968 = vmatmul.mubr.f32.gmra.mrb[0].mxu0 %v2617
  %v2969 = vpop.f32.mrb[0].mxu0
  %v2970 = vadd.f32 %v2571, %v2969
  %v2971 = vpop.f32.mrb[0].mxu0
  %v2972 = vadd.f32 %v2575, %v2971
  %2973 = vdwg.mxu0
  %2974 = vmatprep.subr.mxu0 %v2479
  %2975 = vmatpush1.msra.mxu0 %v2478
  %2976 = vmatprep.subr.mxu0 %v2495
  %2977 = vmatpush1.msra.mxu0 %v2494
  %2978 = vmatprep.subr.mxu0 %v2511
  %2979 = vmatpush1.msra.mxu0 %v2510
  %2980 = vmatprep.subr.mxu0 %v2527
  %2981 = vmatpush1.msra.mxu0 %v2526
  %2982 = vmatprep.subr.mxu0 0.0
  %2983 = vmatpush1.msra.mxu0 0.0
  %2984 = vmatprep.subr.mxu0 0.0
  %2985 = vmatpush1.msra.mxu0 0.0
  %2986 = vmatprep.subr.mxu0 0.0
  %2987 = vmatpush1.msra.mxu0 0.0
  %2988 = vmatprep.subr.mxu0 0.0
  %2989 = vmatpush1.msra.mxu0 0.0
  %2990 = vmatprep.subr.mxu0 0.0
  %2991 = vmatpush1.msra.mxu0 0.0
  %2992 = vmatprep.subr.mxu0 0.0
  %2993 = vmatpush1.msra.mxu0 0.0
  %2994 = vmatprep.subr.mxu0 0.0
  %2995 = vmatpush1.msra.mxu0 0.0
  %2996 = vmatprep.subr.mxu0 0.0
  %2997 = vmatpush1.msra.mxu0 0.0
  %2998 = vmatprep.subr.mxu0 0.0
  %2999 = vmatpush1.msra.mxu0 0.0
  %3000 = vmatprep.subr.mxu0 0.0
  %3001 = vmatpush1.msra.mxu0 0.0
  %3002 = vmatprep.subr.mxu0 0.0
  %3003 = vmatpush1.msra.mxu0 0.0
  %3004 = vmatprep.subr.mxu0 0.0
  %3005 = vmatpush1.msra.mxu0 0.0
  %3006 = vmatprep.subr.mxu0 0.0
  %3007 = vmatpush1.msra.mxu0 0.0
  %3008 = vmatprep.subr.mxu0 0.0
  %3009 = vmatpush1.msra.mxu0 0.0
  %3010 = vmatprep.subr.mxu0 0.0
  %3011 = vmatpush1.msra.mxu0 0.0
  %3012 = vmatprep.subr.mxu0 0.0
  %3013 = vmatpush1.msra.mxu0 0.0
  %3014 = vmatprep.subr.mxu0 0.0
  %3015 = vmatpush1.msra.mxu0 0.0
  %3016 = vmatprep.subr.mxu0 0.0
  %3017 = vmatpush1.msra.mxu0 0.0
  %3018 = vmatprep.subr.mxu0 0.0
  %3019 = vmatpush1.msra.mxu0 0.0
  %3020 = vmatprep.subr.mxu0 0.0
  %3021 = vmatpush1.msra.mxu0 0.0
  %3022 = vmatprep.subr.mxu0 0.0
  %3023 = vmatpush1.msra.mxu0 0.0
  %3024 = vmatprep.subr.mxu0 0.0
  %3025 = vmatpush1.msra.mxu0 0.0
  %3026 = vmatprep.subr.mxu0 0.0
  %3027 = vmatpush1.msra.mxu0 0.0
  %3028 = vmatprep.subr.mxu0 0.0
  %3029 = vmatpush1.msra.mxu0 0.0
  %3030 = vmatprep.subr.mxu0 0.0
  %3031 = vmatpush1.msra.mxu0 0.0
  %3032 = vmatprep.subr.mxu0 0.0
  %3033 = vmatpush1.msra.mxu0 0.0
  %3034 = vmatprep.subr.mxu0 0.0
  %3035 = vmatpush1.msra.mxu0 0.0
  %3036 = vmatprep.subr.mxu0 0.0
  %3037 = vmatpush1.msra.mxu0 0.0
  %3038 = vmatprep.mubr.f32.mxu0 0.0
  %3039 = vmatmul.mubr.f32.gmra.mrb[0].mxu0 %v2617
  %v3040 = vpop.f32.mrb[0].mxu0
  %v3041 = vadd.f32 %v2579, %v3040
  %v3042 = vpop.f32.mrb[0].mxu0
  %v3043 = vadd.f32 %v2583, %v3042
  %3044 = vdwg.mxu0
  %3045 = vmatprep.subr.mxu0 %v2481
  %3046 = vmatpush1.msra.mxu0 %v2480
  %3047 = vmatprep.subr.mxu0 %v2497
  %3048 = vmatpush1.msra.mxu0 %v2496
  %3049 = vmatprep.subr.mxu0 %v2513
  %3050 = vmatpush1.msra.mxu0 %v2512
  %3051 = vmatprep.subr.mxu0 %v2529
  %3052 = vmatpush1.msra.mxu0 %v2528
  %3053 = vmatprep.subr.mxu0 0.0
  %3054 = vmatpush1.msra.mxu0 0.0
  %3055 = vmatprep.subr.mxu0 0.0
  %3056 = vmatpush1.msra.mxu0 0.0
  %3057 = vmatprep.subr.mxu0 0.0
  %3058 = vmatpush1.msra.mxu0 0.0
  %3059 = vmatprep.subr.mxu0 0.0
  %3060 = vmatpush1.msra.mxu0 0.0
  %3061 = vmatprep.subr.mxu0 0.0
  %3062 = vmatpush1.msra.mxu0 0.0
  %3063 = vmatprep.subr.mxu0 0.0
  %3064 = vmatpush1.msra.mxu0 0.0
  %3065 = vmatprep.subr.mxu0 0.0
  %3066 = vmatpush1.msra.mxu0 0.0
  %3067 = vmatprep.subr.mxu0 0.0
  %3068 = vmatpush1.msra.mxu0 0.0
  %3069 = vmatprep.subr.mxu0 0.0
  %3070 = vmatpush1.msra.mxu0 0.0
  %3071 = vmatprep.subr.mxu0 0.0
  %3072 = vmatpush1.msra.mxu0 0.0
  %3073 = vmatprep.subr.mxu0 0.0
  %3074 = vmatpush1.msra.mxu0 0.0
  %3075 = vmatprep.subr.mxu0 0.0
  %3076 = vmatpush1.msra.mxu0 0.0
  %3077 = vmatprep.subr.mxu0 0.0
  %3078 = vmatpush1.msra.mxu0 0.0
  %3079 = vmatprep.subr.mxu0 0.0
  %3080 = vmatpush1.msra.mxu0 0.0
  %3081 = vmatprep.subr.mxu0 0.0
  %3082 = vmatpush1.msra.mxu0 0.0
  %3083 = vmatprep.subr.mxu0 0.0
  %3084 = vmatpush1.msra.mxu0 0.0
  %3085 = vmatprep.subr.mxu0 0.0
  %3086 = vmatpush1.msra.mxu0 0.0
  %3087 = vmatprep.subr.mxu0 0.0
  %3088 = vmatpush1.msra.mxu0 0.0
  %3089 = vmatprep.subr.mxu0 0.0
  %3090 = vmatpush1.msra.mxu0 0.0
  %3091 = vmatprep.subr.mxu0 0.0
  %3092 = vmatpush1.msra.mxu0 0.0
  %3093 = vmatprep.subr.mxu0 0.0
  %3094 = vmatpush1.msra.mxu0 0.0
  %3095 = vmatprep.subr.mxu0 0.0
  %3096 = vmatpush1.msra.mxu0 0.0
  %3097 = vmatprep.subr.mxu0 0.0
  %3098 = vmatpush1.msra.mxu0 0.0
  %3099 = vmatprep.subr.mxu0 0.0
  %3100 = vmatpush1.msra.mxu0 0.0
  %3101 = vmatprep.subr.mxu0 0.0
  %3102 = vmatpush1.msra.mxu0 0.0
  %3103 = vmatprep.subr.mxu0 0.0
  %3104 = vmatpush1.msra.mxu0 0.0
  %3105 = vmatprep.subr.mxu0 0.0
  %3106 = vmatpush1.msra.mxu0 0.0
  %3107 = vmatprep.subr.mxu0 0.0
  %3108 = vmatpush1.msra.mxu0 0.0
  %3109 = vmatprep.mubr.f32.mxu0 0.0
  %3110 = vmatmul.mubr.f32.gmra.mrb[0].mxu0 %v2617
  %v3111 = vpop.f32.mrb[0].mxu0
  %v3112 = vadd.f32 %v2587, %v3111
  %v3113 = vpop.f32.mrb[0].mxu0
  %v3114 = vadd.f32 %v2591, %v3113
  %3115 = vdwg.mxu0
  %3116 = vmatprep.subr.mxu0 %v2483
  %3117 = vmatpush1.msra.mxu0 %v2482
  %3118 = vmatprep.subr.mxu0 %v2499
  %3119 = vmatpush1.msra.mxu0 %v2498
  %3120 = vmatprep.subr.mxu0 %v2515
  %3121 = vmatpush1.msra.mxu0 %v2514
  %3122 = vmatprep.subr.mxu0 %v2531
  %3123 = vmatpush1.msra.mxu0 %v2530
  %3124 = vmatprep.subr.mxu0 0.0
  %3125 = vmatpush1.msra.mxu0 0.0
  %3126 = vmatprep.subr.mxu0 0.0
  %3127 = vmatpush1.msra.mxu0 0.0
  %3128 = vmatprep.subr.mxu0 0.0
  %3129 = vmatpush1.msra.mxu0 0.0
  %3130 = vmatprep.subr.mxu0 0.0
  %3131 = vmatpush1.msra.mxu0 0.0
  %3132 = vmatprep.subr.mxu0 0.0
  %3133 = vmatpush1.msra.mxu0 0.0
  %3134 = vmatprep.subr.mxu0 0.0
  %3135 = vmatpush1.msra.mxu0 0.0
  %3136 = vmatprep.subr.mxu0 0.0
  %3137 = vmatpush1.msra.mxu0 0.0
  %3138 = vmatprep.subr.mxu0 0.0
  %3139 = vmatpush1.msra.mxu0 0.0
  %3140 = vmatprep.subr.mxu0 0.0
  %3141 = vmatpush1.msra.mxu0 0.0
  %3142 = vmatprep.subr.mxu0 0.0
  %3143 = vmatpush1.msra.mxu0 0.0
  %3144 = vmatprep.subr.mxu0 0.0
  %3145 = vmatpush1.msra.mxu0 0.0
  %3146 = vmatprep.subr.mxu0 0.0
  %3147 = vmatpush1.msra.mxu0 0.0
  %3148 = vmatprep.subr.mxu0 0.0
  %3149 = vmatpush1.msra.mxu0 0.0
  %3150 = vmatprep.subr.mxu0 0.0
  %3151 = vmatpush1.msra.mxu0 0.0
  %3152 = vmatprep.subr.mxu0 0.0
  %3153 = vmatpush1.msra.mxu0 0.0
  %3154 = vmatprep.subr.mxu0 0.0
  %3155 = vmatpush1.msra.mxu0 0.0
  %3156 = vmatprep.subr.mxu0 0.0
  %3157 = vmatpush1.msra.mxu0 0.0
  %3158 = vmatprep.subr.mxu0 0.0
  %3159 = vmatpush1.msra.mxu0 0.0
  %3160 = vmatprep.subr.mxu0 0.0
  %3161 = vmatpush1.msra.mxu0 0.0
  %3162 = vmatprep.subr.mxu0 0.0
  %3163 = vmatpush1.msra.mxu0 0.0
  %3164 = vmatprep.subr.mxu0 0.0
  %3165 = vmatpush1.msra.mxu0 0.0
  %3166 = vmatprep.subr.mxu0 0.0
  %3167 = vmatpush1.msra.mxu0 0.0
  %3168 = vmatprep.subr.mxu0 0.0
  %3169 = vmatpush1.msra.mxu0 0.0
  %3170 = vmatprep.subr.mxu0 0.0
  %3171 = vmatpush1.msra.mxu0 0.0
  %3172 = vmatprep.subr.mxu0 0.0
  %3173 = vmatpush1.msra.mxu0 0.0
  %3174 = vmatprep.subr.mxu0 0.0
  %3175 = vmatpush1.msra.mxu0 0.0
  %3176 = vmatprep.subr.mxu0 0.0
  %3177 = vmatpush1.msra.mxu0 0.0
  %3178 = vmatprep.subr.mxu0 0.0
  %3179 = vmatpush1.msra.mxu0 0.0
  %3180 = vmatprep.mubr.f32.mxu0 0.0
  %3181 = vmatmul.mubr.f32.gmra.mrb[0].mxu0 %v2617
  %v3182 = vpop.f32.mrb[0].mxu0
  %v3183 = vadd.f32 %v2595, %v3182
  %v3184 = vpop.f32.mrb[0].mxu0
  %v3185 = vadd.f32 %v2599, %v3184
  %3186 = vdwg.mxu0
  %v3187 = vmax.f32 %v2686, 0.0
  %v3188 = vmax.f32 %v2688, 0.0
  %v3189 = vmax.f32 %v2757, 0.0
  %v3190 = vmax.f32 %v2759, 0.0
  %v3191 = vmax.f32 %v2828, 0.0
  %v3192 = vmax.f32 %v2830, 0.0
  %v3193 = vmax.f32 %v2899, 0.0
  %v3194 = vmax.f32 %v2901, 0.0
  %v3195 = vmax.f32 %v2970, 0.0
  %v3196 = vmax.f32 %v2972, 0.0
  %v3197 = vmax.f32 %v3041, 0.0
  %v3198 = vmax.f32 %v3043, 0.0
  %v3199 = vmax.f32 %v3112, 0.0
  %v3200 = vmax.f32 %v3114, 0.0
  %v3201 = vmax.f32 %v3183, 0.0
  %v3202 = vmax.f32 %v3185, 0.0
  %v3203 = vld [vmem:[%s13] sm:$0xff]
  %v3204 = vld [vmem:[%s13 + $0x8] sm:$0xff]
  %v3205 = vld [vmem:[%s13 + $0x10] sm:$0xff]
  %v3206 = vld [vmem:[%s13 + $0x18] sm:$0xff]
  %v3207 = vld [vmem:[%s13 + $0x20] sm:$0xff]
  %v3208 = vld [vmem:[%s13 + $0x28] sm:$0xff]
  %v3209 = vld [vmem:[%s13 + $0x30] sm:$0xff]
  %v3210 = vld [vmem:[%s13 + $0x38] sm:$0xff]
  %v3211 = vld [vmem:[%s13 + $0x40] sm:$0xff]
  %v3212 = vld [vmem:[%s13 + $0x48] sm:$0xff]
  %v3213 = vld [vmem:[%s13 + $0x50] sm:$0xff]
  %v3214 = vld [vmem:[%s13 + $0x58] sm:$0xff]
  %v3215 = vld [vmem:[%s13 + $0x60] sm:$0xff]
  %v3216 = vld [vmem:[%s13 + $0x68] sm:$0xff]
  %v3217 = vld [vmem:[%s13 + $0x70] sm:$0xff]
  %v3218 = vld [vmem:[%s13 + $0x78] sm:$0xff]
  %v3219 = vld [vmem:[%s13 + $0x80] sm:$0xff]
  %v3220 = vld [vmem:[%s13 + $0x88] sm:$0xff]
  %v3221 = vld [vmem:[%s13 + $0x90] sm:$0xff]
  %v3222 = vld [vmem:[%s13 + $0x98] sm:$0xff]
  %v3223 = vld [vmem:[%s13 + $0xa0] sm:$0xff]
  %v3224 = vld [vmem:[%s13 + $0xa8] sm:$0xff]
  %v3225 = vld [vmem:[%s13 + $0xb0] sm:$0xff]
  %v3226 = vld [vmem:[%s13 + $0xb8] sm:$0xff]
  %v3227 = vld [vmem:[%s13 + $0xc0] sm:$0xff]
  %v3228 = vld [vmem:[%s13 + $0xc8] sm:$0xff]
  %v3229 = vld [vmem:[%s13 + $0xd0] sm:$0xff]
  %v3230 = vld [vmem:[%s13 + $0xd8] sm:$0xff]
  %v3231 = vld [vmem:[%s13 + $0xe0] sm:$0xff]
  %v3232 = vld [vmem:[%s13 + $0xe8] sm:$0xff]
  %v3233 = vld [vmem:[%s13 + $0xf0] sm:$0xff]
  %v3234 = vld [vmem:[%s13 + $0xf8] sm:$0xff]
  %v3235 = vld [vmem:[%s13 + $0x100] sm:$0xff]
  %v3236 = vld [vmem:[%s13 + $0x108] sm:$0xff]
  %v3237 = vld [vmem:[%s13 + $0x110] sm:$0xff]
  %v3238 = vld [vmem:[%s13 + $0x118] sm:$0xff]
  %v3239 = vld [vmem:[%s13 + $0x120] sm:$0xff]
  %v3240 = vld [vmem:[%s13 + $0x128] sm:$0xff]
  %v3241 = vld [vmem:[%s13 + $0x130] sm:$0xff]
  %v3242 = vld [vmem:[%s13 + $0x138] sm:$0xff]
  %v3243 = vld [vmem:[%s13 + $0x140] sm:$0xff]
  %v3244 = vld [vmem:[%s13 + $0x148] sm:$0xff]
  %v3245 = vld [vmem:[%s13 + $0x150] sm:$0xff]
  %v3246 = vld [vmem:[%s13 + $0x158] sm:$0xff]
  %v3247 = vld [vmem:[%s13 + $0x160] sm:$0xff]
  %v3248 = vld [vmem:[%s13 + $0x168] sm:$0xff]
  %v3249 = vld [vmem:[%s13 + $0x170] sm:$0xff]
  %v3250 = vld [vmem:[%s13 + $0x178] sm:$0xff]
  %v3251 = vld [vmem:[%s13 + $0x180] sm:$0xff]
  %v3252 = vld [vmem:[%s13 + $0x188] sm:$0xff]
  %v3253 = vld [vmem:[%s13 + $0x190] sm:$0xff]
  %v3254 = vld [vmem:[%s13 + $0x198] sm:$0xff]
  %v3255 = vld [vmem:[%s13 + $0x1a0] sm:$0xff]
  %v3256 = vld [vmem:[%s13 + $0x1a8] sm:$0xff]
  %v3257 = vld [vmem:[%s13 + $0x1b0] sm:$0xff]
  %v3258 = vld [vmem:[%s13 + $0x1b8] sm:$0xff]
  %v3259 = vld [vmem:[%s13 + $0x1c0] sm:$0xff]
  %v3260 = vld [vmem:[%s13 + $0x1c8] sm:$0xff]
  %v3261 = vld [vmem:[%s13 + $0x1d0] sm:$0xff]
  %v3262 = vld [vmem:[%s13 + $0x1d8] sm:$0xff]
  %v3263 = vld [vmem:[%s13 + $0x1e0] sm:$0xff]
  %v3264 = vld [vmem:[%s13 + $0x1e8] sm:$0xff]
  %v3265 = vld [vmem:[%s13 + $0x1f0] sm:$0xff]
  %v3266 = vld [vmem:[%s13 + $0x1f8] sm:$0xff]
  %v3267 = vld [vmem:[%s13 + $0x200] sm:$0xff]
  %v3268 = vld [vmem:[%s13 + $0x208] sm:$0xff]
  %v3269 = vld [vmem:[%s13 + $0x210] sm:$0xff]
  %v3270 = vld [vmem:[%s13 + $0x218] sm:$0xff]
  %v3271 = vld [vmem:[%s13 + $0x220] sm:$0xff]
  %v3272 = vld [vmem:[%s13 + $0x228] sm:$0xff]
  %v3273 = vld [vmem:[%s13 + $0x230] sm:$0xff]
  %v3274 = vld [vmem:[%s13 + $0x238] sm:$0xff]
  %v3275 = vld [vmem:[%s13 + $0x240] sm:$0xff]
  %v3276 = vld [vmem:[%s13 + $0x248] sm:$0xff]
  %v3277 = vld [vmem:[%s13 + $0x250] sm:$0xff]
  %v3278 = vld [vmem:[%s13 + $0x258] sm:$0xff]
  %v3279 = vld [vmem:[%s13 + $0x260] sm:$0xff]
  %v3280 = vld [vmem:[%s13 + $0x268] sm:$0xff]
  %v3281 = vld [vmem:[%s13 + $0x270] sm:$0xff]
  %v3282 = vld [vmem:[%s13 + $0x278] sm:$0xff]
  %v3283 = vld [vmem:[%s13 + $0x280] sm:$0xff]
  %v3284 = vld [vmem:[%s13 + $0x288] sm:$0xff]
  %v3285 = vld [vmem:[%s13 + $0x290] sm:$0xff]
  %v3286 = vld [vmem:[%s13 + $0x298] sm:$0xff]
  %v3287 = vld [vmem:[%s13 + $0x2a0] sm:$0xff]
  %v3288 = vld [vmem:[%s13 + $0x2a8] sm:$0xff]
  %v3289 = vld [vmem:[%s13 + $0x2b0] sm:$0xff]
  %v3290 = vld [vmem:[%s13 + $0x2b8] sm:$0xff]
  %v3291 = vld [vmem:[%s13 + $0x2c0] sm:$0xff]
  %v3292 = vld [vmem:[%s13 + $0x2c8] sm:$0xff]
  %v3293 = vld [vmem:[%s13 + $0x2d0] sm:$0xff]
  %v3294 = vld [vmem:[%s13 + $0x2d8] sm:$0xff]
  %v3295 = vld [vmem:[%s13 + $0x2e0] sm:$0xff]
  %v3296 = vld [vmem:[%s13 + $0x2e8] sm:$0xff]
  %v3297 = vld [vmem:[%s13 + $0x2f0] sm:$0xff]
  %v3298 = vld [vmem:[%s13 + $0x2f8] sm:$0xff]
  %v3299 = vld [vmem:[%s13 + $0x300] sm:$0xff]
  %v3300 = vld [vmem:[%s13 + $0x308] sm:$0xff]
  %v3301 = vld [vmem:[%s13 + $0x310] sm:$0xff]
  %v3302 = vld [vmem:[%s13 + $0x318] sm:$0xff]
  %v3303 = vld [vmem:[%s13 + $0x320] sm:$0xff]
  %v3304 = vld [vmem:[%s13 + $0x328] sm:$0xff]
  %v3305 = vld [vmem:[%s13 + $0x330] sm:$0xff]
  %v3306 = vld [vmem:[%s13 + $0x338] sm:$0xff]
  %v3307 = vld [vmem:[%s13 + $0x340] sm:$0xff]
  %v3308 = vld [vmem:[%s13 + $0x348] sm:$0xff]
  %v3309 = vld [vmem:[%s13 + $0x350] sm:$0xff]
  %v3310 = vld [vmem:[%s13 + $0x358] sm:$0xff]
  %v3311 = vld [vmem:[%s13 + $0x360] sm:$0xff]
  %v3312 = vld [vmem:[%s13 + $0x368] sm:$0xff]
  %v3313 = vld [vmem:[%s13 + $0x370] sm:$0xff]
  %v3314 = vld [vmem:[%s13 + $0x378] sm:$0xff]
  %v3315 = vld [vmem:[%s13 + $0x380] sm:$0xff]
  %v3316 = vld [vmem:[%s13 + $0x388] sm:$0xff]
  %v3317 = vld [vmem:[%s13 + $0x390] sm:$0xff]
  %v3318 = vld [vmem:[%s13 + $0x398] sm:$0xff]
  %v3319 = vld [vmem:[%s13 + $0x3a0] sm:$0xff]
  %v3320 = vld [vmem:[%s13 + $0x3a8] sm:$0xff]
  %v3321 = vld [vmem:[%s13 + $0x3b0] sm:$0xff]
  %v3322 = vld [vmem:[%s13 + $0x3b8] sm:$0xff]
  %v3323 = vld [vmem:[%s13 + $0x3c0] sm:$0xff]
  %v3324 = vld [vmem:[%s13 + $0x3c8] sm:$0xff]
  %v3325 = vld [vmem:[%s13 + $0x3d0] sm:$0xff]
  %v3326 = vld [vmem:[%s13 + $0x3d8] sm:$0xff]
  %v3327 = vld [vmem:[%s13 + $0x3e0] sm:$0xff]
  %v3328 = vld [vmem:[%s13 + $0x3e8] sm:$0xff]
  %v3329 = vld [vmem:[%s13 + $0x3f0] sm:$0xff]
  %v3330 = vld [vmem:[%s13 + $0x3f8] sm:$0xff]
  %v3331 = vld [vmem:[%s13 + $0x400] sm:$0xff]
  %v3332 = vld [vmem:[%s13 + $0x408] sm:$0xff]
  %v3333 = vld [vmem:[%s13 + $0x410] sm:$0xff]
  %v3334 = vld [vmem:[%s13 + $0x418] sm:$0xff]
  %v3335 = vld [vmem:[%s13 + $0x420] sm:$0xff]
  %v3336 = vld [vmem:[%s13 + $0x428] sm:$0xff]
  %v3337 = vld [vmem:[%s13 + $0x430] sm:$0xff]
  %v3338 = vld [vmem:[%s13 + $0x438] sm:$0xff]
  %v3339 = vld [vmem:[%s13 + $0x440] sm:$0xff]
  %v3340 = vld [vmem:[%s13 + $0x448] sm:$0xff]
  %v3341 = vld [vmem:[%s13 + $0x450] sm:$0xff]
  %v3342 = vld [vmem:[%s13 + $0x458] sm:$0xff]
  %v3343 = vld [vmem:[%s13 + $0x460] sm:$0xff]
  %v3344 = vld [vmem:[%s13 + $0x468] sm:$0xff]
  %v3345 = vld [vmem:[%s13 + $0x470] sm:$0xff]
  %v3346 = vld [vmem:[%s13 + $0x478] sm:$0xff]
  %v3347 = vld [vmem:[%s13 + $0x480] sm:$0xff]
  %v3348 = vld [vmem:[%s13 + $0x488] sm:$0xff]
  %v3349 = vld [vmem:[%s13 + $0x490] sm:$0xff]
  %v3350 = vld [vmem:[%s13 + $0x498] sm:$0xff]
  %v3351 = vld [vmem:[%s13 + $0x4a0] sm:$0xff]
  %v3352 = vld [vmem:[%s13 + $0x4a8] sm:$0xff]
  %v3353 = vld [vmem:[%s13 + $0x4b0] sm:$0xff]
  %v3354 = vld [vmem:[%s13 + $0x4b8] sm:$0xff]
  %v3355 = vld [vmem:[%s13 + $0x4c0] sm:$0xff]
  %v3356 = vld [vmem:[%s13 + $0x4c8] sm:$0xff]
  %v3357 = vld [vmem:[%s13 + $0x4d0] sm:$0xff]
  %v3358 = vld [vmem:[%s13 + $0x4d8] sm:$0xff]
  %v3359 = vld [vmem:[%s13 + $0x4e0] sm:$0xff]
  %v3360 = vld [vmem:[%s13 + $0x4e8] sm:$0xff]
  %v3361 = vld [vmem:[%s13 + $0x4f0] sm:$0xff]
  %v3362 = vld [vmem:[%s13 + $0x4f8] sm:$0xff]
  %v3363 = vld [vmem:[%s13 + $0x500] sm:$0xff]
  %v3364 = vld [vmem:[%s13 + $0x508] sm:$0xff]
  %v3365 = vld [vmem:[%s13 + $0x510] sm:$0xff]
  %v3366 = vld [vmem:[%s13 + $0x518] sm:$0xff]
  %v3367 = vld [vmem:[%s13 + $0x520] sm:$0xff]
  %v3368 = vld [vmem:[%s13 + $0x528] sm:$0xff]
  %v3369 = vld [vmem:[%s13 + $0x530] sm:$0xff]
  %v3370 = vld [vmem:[%s13 + $0x538] sm:$0xff]
  %v3371 = vld [vmem:[%s13 + $0x540] sm:$0xff]
  %v3372 = vld [vmem:[%s13 + $0x548] sm:$0xff]
  %v3373 = vld [vmem:[%s13 + $0x550] sm:$0xff]
  %v3374 = vld [vmem:[%s13 + $0x558] sm:$0xff]
  %v3375 = vld [vmem:[%s13 + $0x560] sm:$0xff]
  %v3376 = vld [vmem:[%s13 + $0x568] sm:$0xff]
  %v3377 = vld [vmem:[%s13 + $0x570] sm:$0xff]
  %v3378 = vld [vmem:[%s13 + $0x578] sm:$0xff]
  %v3379 = vld [vmem:[%s13 + $0x580] sm:$0xff]
  %v3380 = vld [vmem:[%s13 + $0x588] sm:$0xff]
  %v3381 = vld [vmem:[%s13 + $0x590] sm:$0xff]
  %v3382 = vld [vmem:[%s13 + $0x598] sm:$0xff]
  %v3383 = vld [vmem:[%s13 + $0x5a0] sm:$0xff]
  %v3384 = vld [vmem:[%s13 + $0x5a8] sm:$0xff]
  %v3385 = vld [vmem:[%s13 + $0x5b0] sm:$0xff]
  %v3386 = vld [vmem:[%s13 + $0x5b8] sm:$0xff]
  %v3387 = vld [vmem:[%s13 + $0x5c0] sm:$0xff]
  %v3388 = vld [vmem:[%s13 + $0x5c8] sm:$0xff]
  %v3389 = vld [vmem:[%s13 + $0x5d0] sm:$0xff]
  %v3390 = vld [vmem:[%s13 + $0x5d8] sm:$0xff]
  %v3391 = vld [vmem:[%s13 + $0x5e0] sm:$0xff]
  %v3392 = vld [vmem:[%s13 + $0x5e8] sm:$0xff]
  %v3393 = vld [vmem:[%s13 + $0x5f0] sm:$0xff]
  %v3394 = vld [vmem:[%s13 + $0x5f8] sm:$0xff]
  %v3395 = vld [vmem:[%s13 + $0x600] sm:$0xff]
  %v3396 = vld [vmem:[%s13 + $0x608] sm:$0xff]
  %v3397 = vld [vmem:[%s13 + $0x610] sm:$0xff]
  %v3398 = vld [vmem:[%s13 + $0x618] sm:$0xff]
  %v3399 = vld [vmem:[%s13 + $0x620] sm:$0xff]
  %v3400 = vld [vmem:[%s13 + $0x628] sm:$0xff]
  %v3401 = vld [vmem:[%s13 + $0x630] sm:$0xff]
  %v3402 = vld [vmem:[%s13 + $0x638] sm:$0xff]
  %v3403 = vld [vmem:[%s13 + $0x640] sm:$0xff]
  %v3404 = vld [vmem:[%s13 + $0x648] sm:$0xff]
  %v3405 = vld [vmem:[%s13 + $0x650] sm:$0xff]
  %v3406 = vld [vmem:[%s13 + $0x658] sm:$0xff]
  %v3407 = vld [vmem:[%s13 + $0x660] sm:$0xff]
  %v3408 = vld [vmem:[%s13 + $0x668] sm:$0xff]
  %v3409 = vld [vmem:[%s13 + $0x670] sm:$0xff]
  %v3410 = vld [vmem:[%s13 + $0x678] sm:$0xff]
  %v3411 = vld [vmem:[%s13 + $0x680] sm:$0xff]
  %v3412 = vld [vmem:[%s13 + $0x688] sm:$0xff]
  %v3413 = vld [vmem:[%s13 + $0x690] sm:$0xff]
  %v3414 = vld [vmem:[%s13 + $0x698] sm:$0xff]
  %v3415 = vld [vmem:[%s13 + $0x6a0] sm:$0xff]
  %v3416 = vld [vmem:[%s13 + $0x6a8] sm:$0xff]
  %v3417 = vld [vmem:[%s13 + $0x6b0] sm:$0xff]
  %v3418 = vld [vmem:[%s13 + $0x6b8] sm:$0xff]
  %v3419 = vld [vmem:[%s13 + $0x6c0] sm:$0xff]
  %v3420 = vld [vmem:[%s13 + $0x6c8] sm:$0xff]
  %v3421 = vld [vmem:[%s13 + $0x6d0] sm:$0xff]
  %v3422 = vld [vmem:[%s13 + $0x6d8] sm:$0xff]
  %v3423 = vld [vmem:[%s13 + $0x6e0] sm:$0xff]
  %v3424 = vld [vmem:[%s13 + $0x6e8] sm:$0xff]
  %v3425 = vld [vmem:[%s13 + $0x6f0] sm:$0xff]
  %v3426 = vld [vmem:[%s13 + $0x6f8] sm:$0xff]
  %v3427 = vld [vmem:[%s13 + $0x700] sm:$0xff]
  %v3428 = vld [vmem:[%s13 + $0x708] sm:$0xff]
  %v3429 = vld [vmem:[%s13 + $0x710] sm:$0xff]
  %v3430 = vld [vmem:[%s13 + $0x718] sm:$0xff]
  %v3431 = vld [vmem:[%s13 + $0x720] sm:$0xff]
  %v3432 = vld [vmem:[%s13 + $0x728] sm:$0xff]
  %v3433 = vld [vmem:[%s13 + $0x730] sm:$0xff]
  %v3434 = vld [vmem:[%s13 + $0x738] sm:$0xff]
  %v3435 = vld [vmem:[%s13 + $0x740] sm:$0xff]
  %v3436 = vld [vmem:[%s13 + $0x748] sm:$0xff]
  %v3437 = vld [vmem:[%s13 + $0x750] sm:$0xff]
  %v3438 = vld [vmem:[%s13 + $0x758] sm:$0xff]
  %v3439 = vld [vmem:[%s13 + $0x760] sm:$0xff]
  %v3440 = vld [vmem:[%s13 + $0x768] sm:$0xff]
  %v3441 = vld [vmem:[%s13 + $0x770] sm:$0xff]
  %v3442 = vld [vmem:[%s13 + $0x778] sm:$0xff]
  %v3443 = vld [vmem:[%s13 + $0x780] sm:$0xff]
  %v3444 = vld [vmem:[%s13 + $0x788] sm:$0xff]
  %v3445 = vld [vmem:[%s13 + $0x790] sm:$0xff]
  %v3446 = vld [vmem:[%s13 + $0x798] sm:$0xff]
  %v3447 = vld [vmem:[%s13 + $0x7a0] sm:$0xff]
  %v3448 = vld [vmem:[%s13 + $0x7a8] sm:$0xff]
  %v3449 = vld [vmem:[%s13 + $0x7b0] sm:$0xff]
  %v3450 = vld [vmem:[%s13 + $0x7b8] sm:$0xff]
  %v3451 = vld [vmem:[%s13 + $0x7c0] sm:$0xff]
  %v3452 = vld [vmem:[%s13 + $0x7c8] sm:$0xff]
  %v3453 = vld [vmem:[%s13 + $0x7d0] sm:$0xff]
  %v3454 = vld [vmem:[%s13 + $0x7d8] sm:$0xff]
  %v3455 = vld [vmem:[%s13 + $0x7e0] sm:$0xff]
  %v3456 = vld [vmem:[%s13 + $0x7e8] sm:$0xff]
  %v3457 = vld [vmem:[%s13 + $0x7f0] sm:$0xff]
  %v3458 = vld [vmem:[%s13 + $0x7f8] sm:$0xff]
  %v3459 = vld [vmem:[%s14] sm:$0x1]
  %v3461 = vlaneseq
  %v3462 = vshrl.u32 %v3461, 7
  %v3463 = vsub.s32 0, %v3462
  %v3464 = vrot.slane %v3459, %v3463
  %3466 = vmatprep.subr.mxu0 0.0
  %3467 = vmatpush1.msra.mxu0 %v3203
  %3468 = vmatprep.subr.mxu0 0.0
  %3469 = vmatpush1.msra.mxu0 %v3204
  %3470 = vmatprep.subr.mxu0 0.0
  %3471 = vmatpush1.msra.mxu0 %v3205
  %3472 = vmatprep.subr.mxu0 0.0
  %3473 = vmatpush1.msra.mxu0 %v3206
  %3474 = vmatprep.subr.mxu0 0.0
  %3475 = vmatpush1.msra.mxu0 %v3207
  %3476 = vmatprep.subr.mxu0 0.0
  %3477 = vmatpush1.msra.mxu0 %v3208
  %3478 = vmatprep.subr.mxu0 0.0
  %3479 = vmatpush1.msra.mxu0 %v3209
  %3480 = vmatprep.subr.mxu0 0.0
  %3481 = vmatpush1.msra.mxu0 %v3210
  %3482 = vmatprep.subr.mxu0 0.0
  %3483 = vmatpush1.msra.mxu0 %v3211
  %3484 = vmatprep.subr.mxu0 0.0
  %3485 = vmatpush1.msra.mxu0 %v3212
  %3486 = vmatprep.subr.mxu0 0.0
  %3487 = vmatpush1.msra.mxu0 %v3213
  %3488 = vmatprep.subr.mxu0 0.0
  %3489 = vmatpush1.msra.mxu0 %v3214
  %3490 = vmatprep.subr.mxu0 0.0
  %3491 = vmatpush1.msra.mxu0 %v3215
  %3492 = vmatprep.subr.mxu0 0.0
  %3493 = vmatpush1.msra.mxu0 %v3216
  %3494 = vmatprep.subr.mxu0 0.0
  %3495 = vmatpush1.msra.mxu0 %v3217
  %3496 = vmatprep.subr.mxu0 0.0
  %3497 = vmatpush1.msra.mxu0 %v3218
  %3498 = vmatprep.subr.mxu0 0.0
  %3499 = vmatpush1.msra.mxu0 %v3219
  %3500 = vmatprep.subr.mxu0 0.0
  %3501 = vmatpush1.msra.mxu0 %v3220
  %3502 = vmatprep.subr.mxu0 0.0
  %3503 = vmatpush1.msra.mxu0 %v3221
  %3504 = vmatprep.subr.mxu0 0.0
  %3505 = vmatpush1.msra.mxu0 %v3222
  %3506 = vmatprep.subr.mxu0 0.0
  %3507 = vmatpush1.msra.mxu0 %v3223
  %3508 = vmatprep.subr.mxu0 0.0
  %3509 = vmatpush1.msra.mxu0 %v3224
  %3510 = vmatprep.subr.mxu0 0.0
  %3511 = vmatpush1.msra.mxu0 %v3225
  %3512 = vmatprep.subr.mxu0 0.0
  %3513 = vmatpush1.msra.mxu0 %v3226
  %3514 = vmatprep.subr.mxu0 0.0
  %3515 = vmatpush1.msra.mxu0 %v3227
  %3516 = vmatprep.subr.mxu0 0.0
  %3517 = vmatpush1.msra.mxu0 %v3228
  %3518 = vmatprep.subr.mxu0 0.0
  %3519 = vmatpush1.msra.mxu0 %v3229
  %3520 = vmatprep.subr.mxu0 0.0
  %3521 = vmatpush1.msra.mxu0 %v3230
  %3522 = vmatprep.subr.mxu0 0.0
  %3523 = vmatpush1.msra.mxu0 %v3231
  %3524 = vmatprep.subr.mxu0 0.0
  %3525 = vmatpush1.msra.mxu0 %v3232
  %3526 = vmatprep.subr.mxu0 0.0
  %3527 = vmatpush1.msra.mxu0 %v3233
  %3528 = vmatprep.subr.mxu0 0.0
  %3529 = vmatpush1.msra.mxu0 %v3234
  %3530 = vmatprep.mubr.f32.mxu0 %v3188
  %3531 = vmatmul.mubr.f32.gmra.mrb[0].mxu0 %v3187
  %v3532 = vpop.f32.mrb[0].mxu0
  %v3533 = vadd.f32 %v3464, %v3532
  %v3534 = vpop.f32.mrb[0].mxu0
  %3535 = vdwg.mxu0
  %3536 = vmatprep.subr.mxu0 0.0
  %3537 = vmatpush1.msra.mxu0 %v3235
  %3538 = vmatprep.subr.mxu0 0.0
  %3539 = vmatpush1.msra.mxu0 %v3236
  %3540 = vmatprep.subr.mxu0 0.0
  %3541 = vmatpush1.msra.mxu0 %v3237
  %3542 = vmatprep.subr.mxu0 0.0
  %3543 = vmatpush1.msra.mxu0 %v3238
  %3544 = vmatprep.subr.mxu0 0.0
  %3545 = vmatpush1.msra.mxu0 %v3239
  %3546 = vmatprep.subr.mxu0 0.0
  %3547 = vmatpush1.msra.mxu0 %v3240
  %3548 = vmatprep.subr.mxu0 0.0
  %3549 = vmatpush1.msra.mxu0 %v3241
  %3550 = vmatprep.subr.mxu0 0.0
  %3551 = vmatpush1.msra.mxu0 %v3242
  %3552 = vmatprep.subr.mxu0 0.0
  %3553 = vmatpush1.msra.mxu0 %v3243
  %3554 = vmatprep.subr.mxu0 0.0
  %3555 = vmatpush1.msra.mxu0 %v3244
  %3556 = vmatprep.subr.mxu0 0.0
  %3557 = vmatpush1.msra.mxu0 %v3245
  %3558 = vmatprep.subr.mxu0 0.0
  %3559 = vmatpush1.msra.mxu0 %v3246
  %3560 = vmatprep.subr.mxu0 0.0
  %3561 = vmatpush1.msra.mxu0 %v3247
  %3562 = vmatprep.subr.mxu0 0.0
  %3563 = vmatpush1.msra.mxu0 %v3248
  %3564 = vmatprep.subr.mxu0 0.0
  %3565 = vmatpush1.msra.mxu0 %v3249
  %3566 = vmatprep.subr.mxu0 0.0
  %3567 = vmatpush1.msra.mxu0 %v3250
  %3568 = vmatprep.subr.mxu0 0.0
  %3569 = vmatpush1.msra.mxu0 %v3251
  %3570 = vmatprep.subr.mxu0 0.0
  %3571 = vmatpush1.msra.mxu0 %v3252
  %3572 = vmatprep.subr.mxu0 0.0
  %3573 = vmatpush1.msra.mxu0 %v3253
  %3574 = vmatprep.subr.mxu0 0.0
  %3575 = vmatpush1.msra.mxu0 %v3254
  %3576 = vmatprep.subr.mxu0 0.0
  %3577 = vmatpush1.msra.mxu0 %v3255
  %3578 = vmatprep.subr.mxu0 0.0
  %3579 = vmatpush1.msra.mxu0 %v3256
  %3580 = vmatprep.subr.mxu0 0.0
  %3581 = vmatpush1.msra.mxu0 %v3257
  %3582 = vmatprep.subr.mxu0 0.0
  %3583 = vmatpush1.msra.mxu0 %v3258
  %3584 = vmatprep.subr.mxu0 0.0
  %3585 = vmatpush1.msra.mxu0 %v3259
  %3586 = vmatprep.subr.mxu0 0.0
  %3587 = vmatpush1.msra.mxu0 %v3260
  %3588 = vmatprep.subr.mxu0 0.0
  %3589 = vmatpush1.msra.mxu0 %v3261
  %3590 = vmatprep.subr.mxu0 0.0
  %3591 = vmatpush1.msra.mxu0 %v3262
  %3592 = vmatprep.subr.mxu0 0.0
  %3593 = vmatpush1.msra.mxu0 %v3263
  %3594 = vmatprep.subr.mxu0 0.0
  %3595 = vmatpush1.msra.mxu0 %v3264
  %3596 = vmatprep.subr.mxu0 0.0
  %3597 = vmatpush1.msra.mxu0 %v3265
  %3598 = vmatprep.subr.mxu0 0.0
  %3599 = vmatpush1.msra.mxu0 %v3266
  %3600 = vmatprep.mubr.f32.mxu0 %v3190
  %3601 = vmatmul.mubr.f32.gmra.mrb[0].mxu0 %v3189
  %v3602 = vpop.f32.mrb[0].mxu0
  %v3603 = vadd.f32 %v3533, %v3602
  %v3604 = vpop.f32.mrb[0].mxu0
  %3605 = vdwg.mxu0
  %3606 = vmatprep.subr.mxu0 0.0
  %3607 = vmatpush1.msra.mxu0 %v3267
  %3608 = vmatprep.subr.mxu0 0.0
  %3609 = vmatpush1.msra.mxu0 %v3268
  %3610 = vmatprep.subr.mxu0 0.0
  %3611 = vmatpush1.msra.mxu0 %v3269
  %3612 = vmatprep.subr.mxu0 0.0
  %3613 = vmatpush1.msra.mxu0 %v3270
  %3614 = vmatprep.subr.mxu0 0.0
  %3615 = vmatpush1.msra.mxu0 %v3271
  %3616 = vmatprep.subr.mxu0 0.0
  %3617 = vmatpush1.msra.mxu0 %v3272
  %3618 = vmatprep.subr.mxu0 0.0
  %3619 = vmatpush1.msra.mxu0 %v3273
  %3620 = vmatprep.subr.mxu0 0.0
  %3621 = vmatpush1.msra.mxu0 %v3274
  %3622 = vmatprep.subr.mxu0 0.0
  %3623 = vmatpush1.msra.mxu0 %v3275
  %3624 = vmatprep.subr.mxu0 0.0
  %3625 = vmatpush1.msra.mxu0 %v3276
  %3626 = vmatprep.subr.mxu0 0.0
  %3627 = vmatpush1.msra.mxu0 %v3277
  %3628 = vmatprep.subr.mxu0 0.0
  %3629 = vmatpush1.msra.mxu0 %v3278
  %3630 = vmatprep.subr.mxu0 0.0
  %3631 = vmatpush1.msra.mxu0 %v3279
  %3632 = vmatprep.subr.mxu0 0.0
  %3633 = vmatpush1.msra.mxu0 %v3280
  %3634 = vmatprep.subr.mxu0 0.0
  %3635 = vmatpush1.msra.mxu0 %v3281
  %3636 = vmatprep.subr.mxu0 0.0
  %3637 = vmatpush1.msra.mxu0 %v3282
  %3638 = vmatprep.subr.mxu0 0.0
  %3639 = vmatpush1.msra.mxu0 %v3283
  %3640 = vmatprep.subr.mxu0 0.0
  %3641 = vmatpush1.msra.mxu0 %v3284
  %3642 = vmatprep.subr.mxu0 0.0
  %3643 = vmatpush1.msra.mxu0 %v3285
  %3644 = vmatprep.subr.mxu0 0.0
  %3645 = vmatpush1.msra.mxu0 %v3286
  %3646 = vmatprep.subr.mxu0 0.0
  %3647 = vmatpush1.msra.mxu0 %v3287
  %3648 = vmatprep.subr.mxu0 0.0
  %3649 = vmatpush1.msra.mxu0 %v3288
  %3650 = vmatprep.subr.mxu0 0.0
  %3651 = vmatpush1.msra.mxu0 %v3289
  %3652 = vmatprep.subr.mxu0 0.0
  %3653 = vmatpush1.msra.mxu0 %v3290
  %3654 = vmatprep.subr.mxu0 0.0
  %3655 = vmatpush1.msra.mxu0 %v3291
  %3656 = vmatprep.subr.mxu0 0.0
  %3657 = vmatpush1.msra.mxu0 %v3292
  %3658 = vmatprep.subr.mxu0 0.0
  %3659 = vmatpush1.msra.mxu0 %v3293
  %3660 = vmatprep.subr.mxu0 0.0
  %3661 = vmatpush1.msra.mxu0 %v3294
  %3662 = vmatprep.subr.mxu0 0.0
  %3663 = vmatpush1.msra.mxu0 %v3295
  %3664 = vmatprep.subr.mxu0 0.0
  %3665 = vmatpush1.msra.mxu0 %v3296
  %3666 = vmatprep.subr.mxu0 0.0
  %3667 = vmatpush1.msra.mxu0 %v3297
  %3668 = vmatprep.subr.mxu0 0.0
  %3669 = vmatpush1.msra.mxu0 %v3298
  %3670 = vmatprep.mubr.f32.mxu0 %v3192
  %3671 = vmatmul.mubr.f32.gmra.mrb[0].mxu0 %v3191
  %v3672 = vpop.f32.mrb[0].mxu0
  %v3673 = vadd.f32 %v3603, %v3672
  %v3674 = vpop.f32.mrb[0].mxu0
  %3675 = vdwg.mxu0
  %3676 = vmatprep.subr.mxu0 0.0
  %3677 = vmatpush1.msra.mxu0 %v3299
  %3678 = vmatprep.subr.mxu0 0.0
  %3679 = vmatpush1.msra.mxu0 %v3300
  %3680 = vmatprep.subr.mxu0 0.0
  %3681 = vmatpush1.msra.mxu0 %v3301
  %3682 = vmatprep.subr.mxu0 0.0
  %3683 = vmatpush1.msra.mxu0 %v3302
  %3684 = vmatprep.subr.mxu0 0.0
  %3685 = vmatpush1.msra.mxu0 %v3303
  %3686 = vmatprep.subr.mxu0 0.0
  %3687 = vmatpush1.msra.mxu0 %v3304
  %3688 = vmatprep.subr.mxu0 0.0
  %3689 = vmatpush1.msra.mxu0 %v3305
  %3690 = vmatprep.subr.mxu0 0.0
  %3691 = vmatpush1.msra.mxu0 %v3306
  %3692 = vmatprep.subr.mxu0 0.0
  %3693 = vmatpush1.msra.mxu0 %v3307
  %3694 = vmatprep.subr.mxu0 0.0
  %3695 = vmatpush1.msra.mxu0 %v3308
  %3696 = vmatprep.subr.mxu0 0.0
  %3697 = vmatpush1.msra.mxu0 %v3309
  %3698 = vmatprep.subr.mxu0 0.0
  %3699 = vmatpush1.msra.mxu0 %v3310
  %3700 = vmatprep.subr.mxu0 0.0
  %3701 = vmatpush1.msra.mxu0 %v3311
  %3702 = vmatprep.subr.mxu0 0.0
  %3703 = vmatpush1.msra.mxu0 %v3312
  %3704 = vmatprep.subr.mxu0 0.0
  %3705 = vmatpush1.msra.mxu0 %v3313
  %3706 = vmatprep.subr.mxu0 0.0
  %3707 = vmatpush1.msra.mxu0 %v3314
  %3708 = vmatprep.subr.mxu0 0.0
  %3709 = vmatpush1.msra.mxu0 %v3315
  %3710 = vmatprep.subr.mxu0 0.0
  %3711 = vmatpush1.msra.mxu0 %v3316
  %3712 = vmatprep.subr.mxu0 0.0
  %3713 = vmatpush1.msra.mxu0 %v3317
  %3714 = vmatprep.subr.mxu0 0.0
  %3715 = vmatpush1.msra.mxu0 %v3318
  %3716 = vmatprep.subr.mxu0 0.0
  %3717 = vmatpush1.msra.mxu0 %v3319
  %3718 = vmatprep.subr.mxu0 0.0
  %3719 = vmatpush1.msra.mxu0 %v3320
  %3720 = vmatprep.subr.mxu0 0.0
  %3721 = vmatpush1.msra.mxu0 %v3321
  %3722 = vmatprep.subr.mxu0 0.0
  %3723 = vmatpush1.msra.mxu0 %v3322
  %3724 = vmatprep.subr.mxu0 0.0
  %3725 = vmatpush1.msra.mxu0 %v3323
  %3726 = vmatprep.subr.mxu0 0.0
  %3727 = vmatpush1.msra.mxu0 %v3324
  %3728 = vmatprep.subr.mxu0 0.0
  %3729 = vmatpush1.msra.mxu0 %v3325
  %3730 = vmatprep.subr.mxu0 0.0
  %3731 = vmatpush1.msra.mxu0 %v3326
  %3732 = vmatprep.subr.mxu0 0.0
  %3733 = vmatpush1.msra.mxu0 %v3327
  %3734 = vmatprep.subr.mxu0 0.0
  %3735 = vmatpush1.msra.mxu0 %v3328
  %3736 = vmatprep.subr.mxu0 0.0
  %3737 = vmatpush1.msra.mxu0 %v3329
  %3738 = vmatprep.subr.mxu0 0.0
  %3739 = vmatpush1.msra.mxu0 %v3330
  %3740 = vmatprep.mubr.f32.mxu0 %v3194
  %3741 = vmatmul.mubr.f32.gmra.mrb[0].mxu0 %v3193
  %v3742 = vpop.f32.mrb[0].mxu0
  %v3743 = vadd.f32 %v3673, %v3742
  %v3744 = vpop.f32.mrb[0].mxu0
  %3745 = vdwg.mxu0
  %3746 = vmatprep.subr.mxu0 0.0
  %3747 = vmatpush1.msra.mxu0 %v3331
  %3748 = vmatprep.subr.mxu0 0.0
  %3749 = vmatpush1.msra.mxu0 %v3332
  %3750 = vmatprep.subr.mxu0 0.0
  %3751 = vmatpush1.msra.mxu0 %v3333
  %3752 = vmatprep.subr.mxu0 0.0
  %3753 = vmatpush1.msra.mxu0 %v3334
  %3754 = vmatprep.subr.mxu0 0.0
  %3755 = vmatpush1.msra.mxu0 %v3335
  %3756 = vmatprep.subr.mxu0 0.0
  %3757 = vmatpush1.msra.mxu0 %v3336
  %3758 = vmatprep.subr.mxu0 0.0
  %3759 = vmatpush1.msra.mxu0 %v3337
  %3760 = vmatprep.subr.mxu0 0.0
  %3761 = vmatpush1.msra.mxu0 %v3338
  %3762 = vmatprep.subr.mxu0 0.0
  %3763 = vmatpush1.msra.mxu0 %v3339
  %3764 = vmatprep.subr.mxu0 0.0
  %3765 = vmatpush1.msra.mxu0 %v3340
  %3766 = vmatprep.subr.mxu0 0.0
  %3767 = vmatpush1.msra.mxu0 %v3341
  %3768 = vmatprep.subr.mxu0 0.0
  %3769 = vmatpush1.msra.mxu0 %v3342
  %3770 = vmatprep.subr.mxu0 0.0
  %3771 = vmatpush1.msra.mxu0 %v3343
  %3772 = vmatprep.subr.mxu0 0.0
  %3773 = vmatpush1.msra.mxu0 %v3344
  %3774 = vmatprep.subr.mxu0 0.0
  %3775 = vmatpush1.msra.mxu0 %v3345
  %3776 = vmatprep.subr.mxu0 0.0
  %3777 = vmatpush1.msra.mxu0 %v3346
  %3778 = vmatprep.subr.mxu0 0.0
  %3779 = vmatpush1.msra.mxu0 %v3347
  %3780 = vmatprep.subr.mxu0 0.0
  %3781 = vmatpush1.msra.mxu0 %v3348
  %3782 = vmatprep.subr.mxu0 0.0
  %3783 = vmatpush1.msra.mxu0 %v3349
  %3784 = vmatprep.subr.mxu0 0.0
  %3785 = vmatpush1.msra.mxu0 %v3350
  %3786 = vmatprep.subr.mxu0 0.0
  %3787 = vmatpush1.msra.mxu0 %v3351
  %3788 = vmatprep.subr.mxu0 0.0
  %3789 = vmatpush1.msra.mxu0 %v3352
  %3790 = vmatprep.subr.mxu0 0.0
  %3791 = vmatpush1.msra.mxu0 %v3353
  %3792 = vmatprep.subr.mxu0 0.0
  %3793 = vmatpush1.msra.mxu0 %v3354
  %3794 = vmatprep.subr.mxu0 0.0
  %3795 = vmatpush1.msra.mxu0 %v3355
  %3796 = vmatprep.subr.mxu0 0.0
  %3797 = vmatpush1.msra.mxu0 %v3356
  %3798 = vmatprep.subr.mxu0 0.0
  %3799 = vmatpush1.msra.mxu0 %v3357
  %3800 = vmatprep.subr.mxu0 0.0
  %3801 = vmatpush1.msra.mxu0 %v3358
  %3802 = vmatprep.subr.mxu0 0.0
  %3803 = vmatpush1.msra.mxu0 %v3359
  %3804 = vmatprep.subr.mxu0 0.0
  %3805 = vmatpush1.msra.mxu0 %v3360
  %3806 = vmatprep.subr.mxu0 0.0
  %3807 = vmatpush1.msra.mxu0 %v3361
  %3808 = vmatprep.subr.mxu0 0.0
  %3809 = vmatpush1.msra.mxu0 %v3362
  %3810 = vmatprep.mubr.f32.mxu0 %v3196
  %3811 = vmatmul.mubr.f32.gmra.mrb[0].mxu0 %v3195
  %v3812 = vpop.f32.mrb[0].mxu0
  %v3813 = vadd.f32 %v3743, %v3812
  %v3814 = vpop.f32.mrb[0].mxu0
  %3815 = vdwg.mxu0
  %3816 = vmatprep.subr.mxu0 0.0
  %3817 = vmatpush1.msra.mxu0 %v3363
  %3818 = vmatprep.subr.mxu0 0.0
  %3819 = vmatpush1.msra.mxu0 %v3364
  %3820 = vmatprep.subr.mxu0 0.0
  %3821 = vmatpush1.msra.mxu0 %v3365
  %3822 = vmatprep.subr.mxu0 0.0
  %3823 = vmatpush1.msra.mxu0 %v3366
  %3824 = vmatprep.subr.mxu0 0.0
  %3825 = vmatpush1.msra.mxu0 %v3367
  %3826 = vmatprep.subr.mxu0 0.0
  %3827 = vmatpush1.msra.mxu0 %v3368
  %3828 = vmatprep.subr.mxu0 0.0
  %3829 = vmatpush1.msra.mxu0 %v3369
  %3830 = vmatprep.subr.mxu0 0.0
  %3831 = vmatpush1.msra.mxu0 %v3370
  %3832 = vmatprep.subr.mxu0 0.0
  %3833 = vmatpush1.msra.mxu0 %v3371
  %3834 = vmatprep.subr.mxu0 0.0
  %3835 = vmatpush1.msra.mxu0 %v3372
  %3836 = vmatprep.subr.mxu0 0.0
  %3837 = vmatpush1.msra.mxu0 %v3373
  %3838 = vmatprep.subr.mxu0 0.0
  %3839 = vmatpush1.msra.mxu0 %v3374
  %3840 = vmatprep.subr.mxu0 0.0
  %3841 = vmatpush1.msra.mxu0 %v3375
  %3842 = vmatprep.subr.mxu0 0.0
  %3843 = vmatpush1.msra.mxu0 %v3376
  %3844 = vmatprep.subr.mxu0 0.0
  %3845 = vmatpush1.msra.mxu0 %v3377
  %3846 = vmatprep.subr.mxu0 0.0
  %3847 = vmatpush1.msra.mxu0 %v3378
  %3848 = vmatprep.subr.mxu0 0.0
  %3849 = vmatpush1.msra.mxu0 %v3379
  %3850 = vmatprep.subr.mxu0 0.0
  %3851 = vmatpush1.msra.mxu0 %v3380
  %3852 = vmatprep.subr.mxu0 0.0
  %3853 = vmatpush1.msra.mxu0 %v3381
  %3854 = vmatprep.subr.mxu0 0.0
  %3855 = vmatpush1.msra.mxu0 %v3382
  %3856 = vmatprep.subr.mxu0 0.0
  %3857 = vmatpush1.msra.mxu0 %v3383
  %3858 = vmatprep.subr.mxu0 0.0
  %3859 = vmatpush1.msra.mxu0 %v3384
  %3860 = vmatprep.subr.mxu0 0.0
  %3861 = vmatpush1.msra.mxu0 %v3385
  %3862 = vmatprep.subr.mxu0 0.0
  %3863 = vmatpush1.msra.mxu0 %v3386
  %3864 = vmatprep.subr.mxu0 0.0
  %3865 = vmatpush1.msra.mxu0 %v3387
  %3866 = vmatprep.subr.mxu0 0.0
  %3867 = vmatpush1.msra.mxu0 %v3388
  %3868 = vmatprep.subr.mxu0 0.0
  %3869 = vmatpush1.msra.mxu0 %v3389
  %3870 = vmatprep.subr.mxu0 0.0
  %3871 = vmatpush1.msra.mxu0 %v3390
  %3872 = vmatprep.subr.mxu0 0.0
  %3873 = vmatpush1.msra.mxu0 %v3391
  %3874 = vmatprep.subr.mxu0 0.0
  %3875 = vmatpush1.msra.mxu0 %v3392
  %3876 = vmatprep.subr.mxu0 0.0
  %3877 = vmatpush1.msra.mxu0 %v3393
  %3878 = vmatprep.subr.mxu0 0.0
  %3879 = vmatpush1.msra.mxu0 %v3394
  %3880 = vmatprep.mubr.f32.mxu0 %v3198
  %3881 = vmatmul.mubr.f32.gmra.mrb[0].mxu0 %v3197
  %v3882 = vpop.f32.mrb[0].mxu0
  %v3883 = vadd.f32 %v3813, %v3882
  %v3884 = vpop.f32.mrb[0].mxu0
  %3885 = vdwg.mxu0
  %3886 = vmatprep.subr.mxu0 0.0
  %3887 = vmatpush1.msra.mxu0 %v3395
  %3888 = vmatprep.subr.mxu0 0.0
  %3889 = vmatpush1.msra.mxu0 %v3396
  %3890 = vmatprep.subr.mxu0 0.0
  %3891 = vmatpush1.msra.mxu0 %v3397
  %3892 = vmatprep.subr.mxu0 0.0
  %3893 = vmatpush1.msra.mxu0 %v3398
  %3894 = vmatprep.subr.mxu0 0.0
  %3895 = vmatpush1.msra.mxu0 %v3399
  %3896 = vmatprep.subr.mxu0 0.0
  %3897 = vmatpush1.msra.mxu0 %v3400
  %3898 = vmatprep.subr.mxu0 0.0
  %3899 = vmatpush1.msra.mxu0 %v3401
  %3900 = vmatprep.subr.mxu0 0.0
  %3901 = vmatpush1.msra.mxu0 %v3402
  %3902 = vmatprep.subr.mxu0 0.0
  %3903 = vmatpush1.msra.mxu0 %v3403
  %3904 = vmatprep.subr.mxu0 0.0
  %3905 = vmatpush1.msra.mxu0 %v3404
  %3906 = vmatprep.subr.mxu0 0.0
  %3907 = vmatpush1.msra.mxu0 %v3405
  %3908 = vmatprep.subr.mxu0 0.0
  %3909 = vmatpush1.msra.mxu0 %v3406
  %3910 = vmatprep.subr.mxu0 0.0
  %3911 = vmatpush1.msra.mxu0 %v3407
  %3912 = vmatprep.subr.mxu0 0.0
  %3913 = vmatpush1.msra.mxu0 %v3408
  %3914 = vmatprep.subr.mxu0 0.0
  %3915 = vmatpush1.msra.mxu0 %v3409
  %3916 = vmatprep.subr.mxu0 0.0
  %3917 = vmatpush1.msra.mxu0 %v3410
  %3918 = vmatprep.subr.mxu0 0.0
  %3919 = vmatpush1.msra.mxu0 %v3411
  %3920 = vmatprep.subr.mxu0 0.0
  %3921 = vmatpush1.msra.mxu0 %v3412
  %3922 = vmatprep.subr.mxu0 0.0
  %3923 = vmatpush1.msra.mxu0 %v3413
  %3924 = vmatprep.subr.mxu0 0.0
  %3925 = vmatpush1.msra.mxu0 %v3414
  %3926 = vmatprep.subr.mxu0 0.0
  %3927 = vmatpush1.msra.mxu0 %v3415
  %3928 = vmatprep.subr.mxu0 0.0
  %3929 = vmatpush1.msra.mxu0 %v3416
  %3930 = vmatprep.subr.mxu0 0.0
  %3931 = vmatpush1.msra.mxu0 %v3417
  %3932 = vmatprep.subr.mxu0 0.0
  %3933 = vmatpush1.msra.mxu0 %v3418
  %3934 = vmatprep.subr.mxu0 0.0
  %3935 = vmatpush1.msra.mxu0 %v3419
  %3936 = vmatprep.subr.mxu0 0.0
  %3937 = vmatpush1.msra.mxu0 %v3420
  %3938 = vmatprep.subr.mxu0 0.0
  %3939 = vmatpush1.msra.mxu0 %v3421
  %3940 = vmatprep.subr.mxu0 0.0
  %3941 = vmatpush1.msra.mxu0 %v3422
  %3942 = vmatprep.subr.mxu0 0.0
  %3943 = vmatpush1.msra.mxu0 %v3423
  %3944 = vmatprep.subr.mxu0 0.0
  %3945 = vmatpush1.msra.mxu0 %v3424
  %3946 = vmatprep.subr.mxu0 0.0
  %3947 = vmatpush1.msra.mxu0 %v3425
  %3948 = vmatprep.subr.mxu0 0.0
  %3949 = vmatpush1.msra.mxu0 %v3426
  %3950 = vmatprep.mubr.f32.mxu0 %v3200
  %3951 = vmatmul.mubr.f32.gmra.mrb[0].mxu0 %v3199
  %v3952 = vpop.f32.mrb[0].mxu0
  %v3953 = vadd.f32 %v3883, %v3952
  %v3954 = vpop.f32.mrb[0].mxu0
  %3955 = vdwg.mxu0
  %3956 = vmatprep.subr.mxu0 0.0
  %3957 = vmatpush1.msra.mxu0 %v3427
  %3958 = vmatprep.subr.mxu0 0.0
  %3959 = vmatpush1.msra.mxu0 %v3428
  %3960 = vmatprep.subr.mxu0 0.0
  %3961 = vmatpush1.msra.mxu0 %v3429
  %3962 = vmatprep.subr.mxu0 0.0
  %3963 = vmatpush1.msra.mxu0 %v3430
  %3964 = vmatprep.subr.mxu0 0.0
  %3965 = vmatpush1.msra.mxu0 %v3431
  %3966 = vmatprep.subr.mxu0 0.0
  %3967 = vmatpush1.msra.mxu0 %v3432
  %3968 = vmatprep.subr.mxu0 0.0
  %3969 = vmatpush1.msra.mxu0 %v3433
  %3970 = vmatprep.subr.mxu0 0.0
  %3971 = vmatpush1.msra.mxu0 %v3434
  %3972 = vmatprep.subr.mxu0 0.0
  %3973 = vmatpush1.msra.mxu0 %v3435
  %3974 = vmatprep.subr.mxu0 0.0
  %3975 = vmatpush1.msra.mxu0 %v3436
  %3976 = vmatprep.subr.mxu0 0.0
  %3977 = vmatpush1.msra.mxu0 %v3437
  %3978 = vmatprep.subr.mxu0 0.0
  %3979 = vmatpush1.msra.mxu0 %v3438
  %3980 = vmatprep.subr.mxu0 0.0
  %3981 = vmatpush1.msra.mxu0 %v3439
  %3982 = vmatprep.subr.mxu0 0.0
  %3983 = vmatpush1.msra.mxu0 %v3440
  %3984 = vmatprep.subr.mxu0 0.0
  %3985 = vmatpush1.msra.mxu0 %v3441
  %3986 = vmatprep.subr.mxu0 0.0
  %3987 = vmatpush1.msra.mxu0 %v3442
  %3988 = vmatprep.subr.mxu0 0.0
  %3989 = vmatpush1.msra.mxu0 %v3443
  %3990 = vmatprep.subr.mxu0 0.0
  %3991 = vmatpush1.msra.mxu0 %v3444
  %3992 = vmatprep.subr.mxu0 0.0
  %3993 = vmatpush1.msra.mxu0 %v3445
  %3994 = vmatprep.subr.mxu0 0.0
  %3995 = vmatpush1.msra.mxu0 %v3446
  %3996 = vmatprep.subr.mxu0 0.0
  %3997 = vmatpush1.msra.mxu0 %v3447
  %3998 = vmatprep.subr.mxu0 0.0
  %3999 = vmatpush1.msra.mxu0 %v3448
  %4000 = vmatprep.subr.mxu0 0.0
  %4001 = vmatpush1.msra.mxu0 %v3449
  %4002 = vmatprep.subr.mxu0 0.0
  %4003 = vmatpush1.msra.mxu0 %v3450
  %4004 = vmatprep.subr.mxu0 0.0
  %4005 = vmatpush1.msra.mxu0 %v3451
  %4006 = vmatprep.subr.mxu0 0.0
  %4007 = vmatpush1.msra.mxu0 %v3452
  %4008 = vmatprep.subr.mxu0 0.0
  %4009 = vmatpush1.msra.mxu0 %v3453
  %4010 = vmatprep.subr.mxu0 0.0
  %4011 = vmatpush1.msra.mxu0 %v3454
  %4012 = vmatprep.subr.mxu0 0.0
  %4013 = vmatpush1.msra.mxu0 %v3455
  %4014 = vmatprep.subr.mxu0 0.0
  %4015 = vmatpush1.msra.mxu0 %v3456
  %4016 = vmatprep.subr.mxu0 0.0
  %4017 = vmatpush1.msra.mxu0 %v3457
  %4018 = vmatprep.subr.mxu0 0.0
  %4019 = vmatpush1.msra.mxu0 %v3458
  %4020 = vmatprep.mubr.f32.mxu0 %v3202
  %4021 = vmatmul.mubr.f32.gmra.mrb[0].mxu0 %v3201
  %v4022 = vpop.f32.mrb[0].mxu0
  %v4023 = vadd.f32 %v3953, %v4022
  %v4024 = vpop.f32.mrb[0].mxu0
  %4025 = vdwg.mxu0
  %v4026 = vadd.f32 %v2467, %v4023
  %v4027 = vld [vmem:[%s15] sm:$0x1]
  %v4028 = vld [vmem:[%s16] sm:$0x1]
  %v4029 = vsel %vm1386, %v4026, 0.0
  %4030 = vadd.xlane.f32.xlu0 %v4029
  %v4031 = vpop.xlane.xlu0 %4030
  %v4032 = vmul.f32 %v4031, %v2443
  %v4033 = vsub.f32 %v4026, %v4032
  %v4034 = vmul.f32 %v4033, %v4033
  %v4035 = vsel %vm1386, %v4034, 0.0
  %4036 = vadd.xlane.f32.xlu0 %v4035
  %v4037 = vpop.xlane.xlu0 %4036
  %v4038 = vmul.f32 %v4037, %v2443
  %v4039 = vadd.f32 %v4038, 1e-05
  %v4040 = vrsqrt.pop %v4039
  %v4041 = vmul.f32 %v4033, %v4040
  %v4043 = vlaneseq
  %v4044 = vshrl.u32 %v4043, 7
  %v4045 = vsub.s32 0, %v4044
  %v4046 = vrot.slane %v4027, %v4045
  %v4048 = vmul.f32 %v4041, %v4046
  %v4050 = vlaneseq
  %v4051 = vshrl.u32 %v4050, 7
  %v4052 = vsub.s32 0, %v4051
  %v4053 = vrot.slane %v4028, %v4052
  %v4055 = vadd.f32 %v4048, %v4053
  %vm4056 = vcmask 257024
  %v4057 = vsel %vm4056, %v4055, 0.0
  %v4058 = vrot.slane %v4057, 4
  %v4059 = vadd.f32 %v4057, %v4058
  %v4060 = vrot.slane %v4059, 2
  %v4061 = vadd.f32 %v4059, %v4060
  %v4062 = vrot.slane %v4061, 1
  %v4063 = vadd.f32 %v4061, %v4062
  %v4064 = vrcp.pop 4.0
  %v4065 = vmul.f32 %v4063, %v4064
  %v4067 = vrot.slane %v4055, 4
  %v4069 = vsel %vm4056, %v4067, 0.0
  %v4070 = vrot.slane %v4069, 4
  %v4071 = vadd.f32 %v4069, %v4070
  %v4072 = vrot.slane %v4071, 2
  %v4073 = vadd.f32 %v4071, %v4072
  %v4074 = vrot.slane %v4073, 1
  %v4075 = vadd.f32 %v4073, %v4074
  %v4076 = vmul.f32 %v4075, %v4064
  %v4077 = vsel %vm88, %v4065, %v4076
  %v4078 = vld [vmem:[%s17] sm:$0xff]
  %v4079 = vld [vmem:[%s17 + $0x8] sm:$0xff]
  %v4080 = vld [vmem:[%s17 + $0x10] sm:$0xff]
  %v4081 = vld [vmem:[%s17 + $0x18] sm:$0xff]
  %v4082 = vld [vmem:[#allocation2] sm:$0x1]
  %v4084 = vlaneseq
  %v4085 = vshrl.u32 %v4084, 7
  %v4086 = vsub.s32 0, %v4085
  %v4087 = vrot.slane %v4082, %v4086
  %v4090 = vsel %vm1386, %v4077, 0
  %4092 = vmatprep.subr.mxu0 0.0
  %4093 = vmatpush1.msra.mxu0 %v4078
  %4094 = vmatprep.subr.mxu0 0.0
  %4095 = vmatpush1.msra.mxu0 %v4079
  %4096 = vmatprep.subr.mxu0 0.0
  %4097 = vmatpush1.msra.mxu0 %v4080
  %4098 = vmatprep.subr.mxu0 0.0
  %4099 = vmatpush1.msra.mxu0 %v4081
  %4100 = vmatprep.subr.mxu0 0.0
  %4101 = vmatpush1.msra.mxu0 0.0
  %4102 = vmatprep.subr.mxu0 0.0
  %4103 = vmatpush1.msra.mxu0 0.0
  %4104 = vmatprep.subr.mxu0 0.0
  %4105 = vmatpush1.msra.mxu0 0.0
  %4106 = vmatprep.subr.mxu0 0.0
  %4107 = vmatpush1.msra.mxu0 0.0
  %4108 = vmatprep.subr.mxu0 0.0
  %4109 = vmatpush1.msra.mxu0 0.0
  %4110 = vmatprep.subr.mxu0 0.0
  %4111 = vmatpush1.msra.mxu0 0.0
  %4112 = vmatprep.subr.mxu0 0.0
  %4113 = vmatpush1.msra.mxu0 0.0
  %4114 = vmatprep.subr.mxu0 0.0
  %4115 = vmatpush1.msra.mxu0 0.0
  %4116 = vmatprep.subr.mxu0 0.0
  %4117 = vmatpush1.msra.mxu0 0.0
  %4118 = vmatprep.subr.mxu0 0.0
  %4119 = vmatpush1.msra.mxu0 0.0
  %4120 = vmatprep.subr.mxu0 0.0
  %4121 = vmatpush1.msra.mxu0 0.0
  %4122 = vmatprep.subr.mxu0 0.0
  %4123 = vmatpush1.msra.mxu0 0.0
  %4124 = vmatprep.subr.mxu0 0.0
  %4125 = vmatpush1.msra.mxu0 0.0
  %4126 = vmatprep.subr.mxu0 0.0
  %4127 = vmatpush1.msra.mxu0 0.0
  %4128 = vmatprep.subr.mxu0 0.0
  %4129 = vmatpush1.msra.mxu0 0.0
  %4130 = vmatprep.subr.mxu0 0.0
  %4131 = vmatpush1.msra.mxu0 0.0
  %4132 = vmatprep.subr.mxu0 0.0
  %4133 = vmatpush1.msra.mxu0 0.0
  %4134 = vmatprep.subr.mxu0 0.0
  %4135 = vmatpush1.msra.mxu0 0.0
  %4136 = vmatprep.subr.mxu0 0.0
  %4137 = vmatpush1.msra.mxu0 0.0
  %4138 = vmatprep.subr.mxu0 0.0
  %4139 = vmatpush1.msra.mxu0 0.0
  %4140 = vmatprep.subr.mxu0 0.0
  %4141 = vmatpush1.msra.mxu0 0.0
  %4142 = vmatprep.subr.mxu0 0.0
  %4143 = vmatpush1.msra.mxu0 0.0
  %4144 = vmatprep.subr.mxu0 0.0
  %4145 = vmatpush1.msra.mxu0 0.0
  %4146 = vmatprep.subr.mxu0 0.0
  %4147 = vmatpush1.msra.mxu0 0.0
  %4148 = vmatprep.subr.mxu0 0.0
  %4149 = vmatpush1.msra.mxu0 0.0
  %4150 = vmatprep.subr.mxu0 0.0
  %4151 = vmatpush1.msra.mxu0 0.0
  %4152 = vmatprep.subr.mxu0 0.0
  %4153 = vmatpush1.msra.mxu0 0.0
  %4154 = vmatprep.subr.mxu0 0.0
  %4155 = vmatpush1.msra.mxu0 0.0
  %4156 = vmatprep.mubr.f32.mxu0 0.0
  %4157 = vmatmul.mubr.f32.gmra.mrb[0].mxu0 %v4090
  %v4158 = vpop.f32.mrb[0].mxu0
  %v4159 = vadd.f32 %v4087, %v4158
  %v4160 = vpop.f32.mrb[0].mxu0
  %4161 = vdwg.mxu0
  %vm4162 = vcmask 1024
  %4163 = vst.msk [vmem:[%s19] sm:$0x3] %vm4162, %v4159
  // Predicated region
  $region78: #{cnn_transformer_forward.1} parent=0 // pred_check
    _
  $region79: #{cnn_transformer_forward.1} parent=0 // pred_check_branch
    %4165 = sbr.rel (0) target = $region81
  $region80: #{cnn_transformer_forward.1} parent=0 // pred_region
    _
  $region81: #{cnn_transformer_forward.1} parent=0 // pred_fallthru
    _
  // Predicated region
  $region82: #{cnn_transformer_forward.1} parent=0 // pred_check
    _
  $region83: #{cnn_transformer_forward.1} parent=0 // pred_check_branch
    %4167 = sbr.rel (0) target = $region85
  $region84: #{cnn_transformer_forward.1} parent=0 // pred_region
    _
  $region85: #{cnn_transformer_forward.1} parent=0 // pred_fallthru
    _

</llo_original>
